<compile_context>
chip_gen: v5e
topology: v5e:2x2
jax: 0.10.0
libtpu: 0.0.40
codegen_flags: <defaults>
</compile_context>

<pallas_src>
import functools

import jax
import jax.numpy as jnp
from jax.experimental import pallas as pl
from jax.experimental.pallas import tpu as pltpu  # noqa: F401  (TPU backend)

RRELU_SLOPE = (1.0 / 8.0 + 1.0 / 3.0) / 2.0   # torch.rrelu eval-mode slope
Z = 2                                         # z_size
BF16 = jnp.bfloat16


def _rrelu(y):
    return jnp.where(y >= 0.0, y, y * RRELU_SLOPE)


def _sigmoid(y):
    # numerically stable logistic (no exp overflow for very negative y)
    e = jnp.exp(-jnp.abs(y))
    return jnp.where(y >= 0.0, 1.0 / (1.0 + e), e / (1.0 + e))


# ---------------------------------------------------------------------------
# Pallas kernels (grid-less: every ref is one whole-array VMEM block)
# ---------------------------------------------------------------------------
def _enc_front_kernel(x_ref, w1_ref, b1_ref, w2_ref, b2_ref, o_ref):
    """e_hidden1 + e_hidden2 as two chained pointwise matmuls.

    x_ref : (N*49, 16) bf16   rows (n, oh7, ow7), cols (ri, rj, ki, kj)
    o_ref : (N*49, 64) bf16   rows (n, oh7, ow7), cols = e2 channels
    """
    h1 = jnp.dot(x_ref[...], w1_ref[...],
                 preferred_element_type=jnp.float32) + b1_ref[...]
    h1 = _rrelu(h1)                                        # (N*49, 128) f32
    h2 = jnp.dot(h1.astype(BF16), w2_ref[...],
                 preferred_element_type=jnp.float32) + b2_ref[...]
    o_ref[...] = _rrelu(h2).astype(o_ref.dtype)            # (N*49, 64)


def _bottleneck_kernel(x3_ref, w3_ref, b3_ref, wfc_ref, bfc_ref, eps_ref,
                       wdl_ref, bdl_ref, mu_ref, lv_ref, h4_ref, *, n_batch):
    """e_hidden3 + flatten + fc1/fc2 + reparameterize + d_lin (all fused).

    x3_ref : (9*N, 576) bf16  rows (p=i*3+j, n), cols (a, b, ci)  (e3 im2col)
    wfc_ref: (9, 128, 2Z) bf16   fc1|fc2 weights permuted to (p, c, z)
    h4_ref : (N, 1152) bf16   cols ordered (i, j, c) = decoder NHWC input
    """
    h3 = jnp.dot(x3_ref[...], w3_ref[...],
                 preferred_element_type=jnp.float32) + b3_ref[...]
    h3 = _rrelu(_rrelu(h3))            # rrelu(e_hidden3) then rrelu(flatten)

    # fc1|fc2 over the flattened (c,i,j) features: rows of h3 are spatial-major,
    # so each spatial position is a contiguous row block of size n_batch.
    acc = jnp.zeros((n_batch, 2 * Z), jnp.float32)
    for p in range(9):
        blk = h3[p * n_batch:(p + 1) * n_batch, :].astype(BF16)   # (N, 128)
        acc = acc + jnp.dot(blk, wfc_ref[p],
                            preferred_element_type=jnp.float32)
    mlv = acc + bfc_ref[...]                               # (N, 2Z)
    mu = mlv[:, :Z]
    log_var = mlv[:, Z:]
    mu_ref[...] = mu
    lv_ref[...] = log_var

    # z = rrelu(mu + exp(log_var / 2) * eps)   (reparameterization, fused)
    z = _rrelu(mu + jnp.exp(log_var * 0.5) * eps_ref[...])

    h4 = jnp.dot(z.astype(BF16), wdl_ref[...],
                 preferred_element_type=jnp.float32) + bdl_ref[...]
    # rrelu(d_lin) then rrelu(unflatten)
    h4_ref[...] = _rrelu(_rrelu(h4)).astype(h4_ref.dtype)


def _decoder_kernel(x_ref, w1_ref, b1_ref, w2_ref, b2_ref, w3_ref, b3_ref,
                    o_ref):
    """d_hidden1 (dilated-conv form, im2col'd outside) + d_hidden2 + d_hidden3.

    d2/d3 are stride==kernel ConvTranspose => sub-pixel pointwise matmuls with
    the output phases packed in the lane dim (lane-dense, no zero-dilation).
    x_ref : (N*49, 1152) bf16   rows (n, oh7, ow7)
    o_ref : (N*49, 16)   f32    cols (ph, pw, qh, qw) -> 4x4 output pixel block
    """
    h5 = jnp.dot(x_ref[...], w1_ref[...],
                 preferred_element_type=jnp.float32) + b1_ref[...]
    h5 = _rrelu(h5)                                        # (N*49, 64)  = 7x7x64
    h6 = jnp.dot(h5.astype(BF16), w2_ref[...],
                 preferred_element_type=jnp.float32) + b2_ref[...]
    h6 = _rrelu(h6)                                        # (N*49, 128) = 14x14x32
    y = jnp.dot(h6.astype(BF16), w3_ref[...],
                preferred_element_type=jnp.float32) + b3_ref[...]
    o_ref[...] = _sigmoid(y)                               # (N*49, 16)  = 28x28x1


# ---------------------------------------------------------------------------
# Parameters (deterministic, PyTorch-default-style uniform init, torch layouts)
# ---------------------------------------------------------------------------
def init_params(key):
    def u(k, shape, fan_in):
        bound = 1.0 / float(fan_in) ** 0.5
        return jax.random.uniform(k, shape, jnp.float32, -bound, bound)

    ks = jax.random.split(key, 18)
    p = {}
    p["e1_w"] = u(ks[0], (32, 1, 2, 2), 1 * 2 * 2)
    p["e1_b"] = u(ks[1], (32,), 1 * 2 * 2)
    p["e2_w"] = u(ks[2], (64, 32, 2, 2), 32 * 2 * 2)
    p["e2_b"] = u(ks[3], (64,), 32 * 2 * 2)
    p["e3_w"] = u(ks[4], (128, 64, 3, 3), 64 * 3 * 3)
    p["e3_b"] = u(ks[5], (128,), 64 * 3 * 3)
    p["fc1_w"] = u(ks[6], (Z, 1152), 1152)
    p["fc1_b"] = u(ks[7], (Z,), 1152)
    p["fc2_w"] = u(ks[8], (Z, 1152), 1152)
    p["fc2_b"] = u(ks[9], (Z,), 1152)
    p["dlin_w"] = u(ks[10], (1152, Z), Z)
    p["dlin_b"] = u(ks[11], (1152,), Z)
    p["d1_w"] = u(ks[12], (128, 64, 3, 3), 64 * 3 * 3)
    p["d1_b"] = u(ks[13], (64,), 64 * 3 * 3)
    p["d2_w"] = u(ks[14], (64, 32, 2, 2), 32 * 2 * 2)
    p["d2_b"] = u(ks[15], (32,), 32 * 2 * 2)
    p["d3_w"] = u(ks[16], (32, 1, 2, 2), 1 * 2 * 2)
    p["d3_b"] = u(ks[17], (1,), 1 * 2 * 2)
    return p


def prepare_params(p):
    """One-time re-layout of torch-style weights into kernel-ready matrices."""
    q = {}

    # ---- e1 fused with e2: phase-block-diagonal e1 weight -------------------
    w1 = p["e1_w"]                                    # (32, 1, 2, 2)
    w1b = jnp.zeros((16, 128), jnp.float32)
    for ri in range(2):
        for rj in range(2):
            g = ri * 2 + rj
            for ki in range(2):
                for kj in range(2):
                    row = ri * 8 + rj * 4 + ki * 2 + kj
                    w1b = w1b.at[row, g * 32:(g + 1) * 32].set(w1[:, 0, ki, kj])
    q["w1b"] = w1b.astype(BF16)
    q["b1b"] = jnp.tile(p["e1_b"], 4).reshape(1, 128)
    # e2 weight: rows (ri, rj, ci) match e1's output column order
    q["w2m"] = jnp.transpose(p["e2_w"], (2, 3, 1, 0)).reshape(128, 64).astype(BF16)
    q["b2m"] = p["e2_b"].reshape(1, 64)

    # ---- e3 ------------------------------------------------------------------
    q["w3m"] = jnp.transpose(p["e3_w"], (2, 3, 1, 0)).reshape(576, 128).astype(BF16)
    q["b3m"] = p["e3_b"].reshape(1, 128)

    # ---- fc1|fc2 permuted to (p, c, z); torch flatten index k = c*9 + p ------
    def fc_perm(w):                                   # (Z, 1152) -> (9, 128, Z)
        return jnp.transpose(w.reshape(Z, 128, 9), (2, 1, 0))
    q["wfc"] = jnp.concatenate([fc_perm(p["fc1_w"]), fc_perm(p["fc2_w"])],
                               axis=2).astype(BF16)   # (9, 128, 2Z)
    q["bfc"] = jnp.concatenate([p["fc1_b"], p["fc2_b"]]).reshape(1, 2 * Z)

    # ---- d_lin, output columns re-ordered to (i, j, c) (decoder NHWC) --------
    wdl = p["dlin_w"]                                 # (1152, Z), row = c*9 + p
    q["wdl"] = (jnp.transpose(wdl.reshape(128, 9, Z), (1, 0, 2))
                .reshape(1152, Z).T).astype(BF16)     # (Z, 1152), col = p*128 + c
    q["bdl"] = jnp.transpose(p["dlin_b"].reshape(128, 9), (1, 0)).reshape(1, 1152)

    # ---- d1 as equivalent forward conv (flipped kernel, dilated input) -------
    wd1 = p["d1_w"]                                   # (128, 64, 3, 3) (in,out,kh,kw)
    wflip = wd1[:, :, ::-1, ::-1]
    q["wd1"] = jnp.transpose(wflip, (2, 3, 0, 1)).reshape(9 * 128, 64).astype(BF16)
    q["bd1"] = p["d1_b"].reshape(1, 64)

    # ---- d2 sub-pixel: 4 output phases packed in the lane dim ----------------
    wd2 = p["d2_w"]                                   # (64, 32, 2, 2) (in,out,kh,kw)
    q["wd2"] = jnp.transpose(wd2, (0, 2, 3, 1)).reshape(64, 128).astype(BF16)
    q["bd2"] = jnp.tile(p["d2_b"], 4).reshape(1, 128)

    # ---- d3 sub-pixel, block-diagonal over d2's input phases -----------------
    wd3 = p["d3_w"]                                   # (32, 1, 2, 2)
    blk = wd3[:, 0, :, :].reshape(32, 4)
    wd3_blk = jnp.zeros((128, 16), jnp.float32)
    for g in range(4):
        wd3_blk = wd3_blk.at[g * 32:(g + 1) * 32, g * 4:(g + 1) * 4].set(blk)
    q["wd3"] = wd3_blk.astype(BF16)
    q["bd3"] = jnp.tile(p["d3_b"], 16).reshape(1, 16)
    return q


# ---------------------------------------------------------------------------
# Forward pass:  (x_recon, mu, log_var) = VAE(x)
# ---------------------------------------------------------------------------
def vae_forward(q, x_nchw, eps_key):
    N = x_nchw.shape[0]

    # input space-to-depth (28x28x1 -> 7x7 cells of 4x4): rows (n,oh7,ow7),
    # cols (ri, rj, ki, kj)
    x1b = (x_nchw.reshape(N, 7, 2, 2, 7, 2, 2)
           .transpose(0, 1, 4, 2, 5, 3, 6)
           .reshape(N * 49, 16).astype(BF16))

    h2 = pl.pallas_call(
        _enc_front_kernel,
        out_shape=jax.ShapeDtypeStruct((N * 49, 64), BF16),
    )(x1b, q["w1b"], q["b1b"], q["w2m"], q["b2m"])

    # e_hidden3 im2col (7x7 -> 3x3, k=3, s=2); rows spatial-major (p, n)
    h2r = h2.reshape(N, 7, 7, 64)
    pats = [h2r[:, a:a + 5:2, b:b + 5:2, :]
            for a in range(3) for b in range(3)]            # each (N, 3, 3, 64)
    x3 = (jnp.stack(pats, axis=3)                           # (N, 3, 3, 9, 64)
          .transpose(1, 2, 0, 3, 4)
          .reshape(9 * N, 576))

    # TODO(synk): torch.randn_like RNG stream is not bit-reproducible in JAX;
    # eps is drawn from jax.random instead.
    eps = jax.random.normal(eps_key, (N, Z), jnp.float32)

    mu, log_var, h4 = pl.pallas_call(
        functools.partial(_bottleneck_kernel, n_batch=N),
        out_shape=(jax.ShapeDtypeStruct((N, Z), jnp.float32),
                   jax.ShapeDtypeStruct((N, Z), jnp.float32),
                   jax.ShapeDtypeStruct((N, 1152), BF16)),
    )(x3, q["w3m"], q["b3m"], q["wfc"], q["bfc"], eps, q["wdl"], q["bdl"])

    # d_hidden1: zero-dilate the tiny 3x3 map and im2col (k=3, s=1)
    h4r = h4.reshape(N, 3, 3, 128)
    xd = jnp.zeros((N, 9, 9, 128), BF16).at[:, 2:8:2, 2:8:2, :].set(h4r)
    pats = [xd[:, a:a + 7, b:b + 7, :]
            for a in range(3) for b in range(3)]            # each (N, 7, 7, 128)
    xd1 = jnp.stack(pats, axis=3).reshape(N * 49, 1152)

    y = pl.pallas_call(
        _decoder_kernel,
        out_shape=jax.ShapeDtypeStruct((N * 49, 16), jnp.float32),
    )(xd1, q["wd1"], q["bd1"], q["wd2"], q["bd2"], q["wd3"], q["bd3"])

    # depth-to-space: (N*49, (ph,pw,qh,qw)) -> (N, 1, 28, 28)
    recon = (y.reshape(N, 7, 7, 2, 2, 2, 2)
             .transpose(0, 1, 3, 5, 2, 4, 6)
             .reshape(N, 1, 28, 28))
    return recon, mu, log_var


if __name__ == "__main__":
    key = jax.random.PRNGKey(0)
    pkey, xkey, ekey = jax.random.split(key, 3)

    params = init_params(pkey)
    q = prepare_params(params)
    x = jax.random.normal(xkey, (2, 1, 28, 28), jnp.float32)   # NCHW like PyTorch

    fwd = jax.jit(functools.partial(vae_forward, q))
    recon, mu, log_var = fwd(x, ekey)
    jax.block_until_ready((recon, mu, log_var))

    assert recon.shape == (2, 1, 28, 28), recon.shape
    assert mu.shape == (2, Z) and log_var.shape == (2, Z)
    assert bool(jnp.all(jnp.isfinite(recon)))
    assert bool(jnp.all((recon >= 0.0) & (recon <= 1.0)))      # sigmoid output
    print("KERNEL_OK")
</pallas_src>

<mosaic_0001>
module attributes {stable_mosaic.version = 11 : i64} {
  func.func @_enc_front_kernel(%arg0: memref<98x16xbf16, #tpu.memory_space<vmem>>, %arg1: memref<16x128xbf16, #tpu.memory_space<vmem>>, %arg2: memref<1x128xf32, #tpu.memory_space<vmem>>, %arg3: memref<128x64xbf16, #tpu.memory_space<vmem>>, %arg4: memref<1x64xf32, #tpu.memory_space<vmem>>, %arg5: memref<98x64xbf16, #tpu.memory_space<vmem>>) attributes {dimension_semantics = [], scalar_prefetch = 0 : i64, scratch_operands = 0 : i64, tpu.core_type = #tpu.core_type<tc>} {
    %c0 = arith.constant 0 : index
    %c0_0 = arith.constant 0 : index
    %0 = vector.load %arg0[%c0, %c0_0] : memref<98x16xbf16, #tpu.memory_space<vmem>>, vector<98x16xbf16>
    %c0_1 = arith.constant 0 : index
    %c0_2 = arith.constant 0 : index
    %1 = vector.load %arg1[%c0_1, %c0_2] : memref<16x128xbf16, #tpu.memory_space<vmem>>, vector<16x128xbf16>
    %cst = arith.constant dense<0.000000e+00> : vector<98x128xf32>
    %2 = tpu.matmul %0, %1, %cst {dimension_numbers = #tpu.dot_dimension_numbers<[1], [0], [0], [1], [0, 0, 1, 1], [], []>} : vector<98x16xbf16>, vector<16x128xbf16>, vector<98x128xf32> -> vector<98x128xf32>
    %c0_3 = arith.constant 0 : index
    %c0_4 = arith.constant 0 : index
    %3 = vector.load %arg2[%c0_3, %c0_4] : memref<1x128xf32, #tpu.memory_space<vmem>>, vector<1x128xf32>
    %4 = vector.broadcast %3 : vector<1x128xf32> to vector<98x128xf32>
    %5 = arith.addf %2, %4 : vector<98x128xf32>
    %cst_5 = arith.constant 0.000000e+00 : f32
    %6 = vector.broadcast %cst_5 : f32 to vector<98x128xf32>
    %7 = arith.cmpf oge, %5, %6 : vector<98x128xf32>
    %cst_6 = arith.constant 0.229166672 : f32
    %8 = vector.broadcast %cst_6 : f32 to vector<98x128xf32>
    %9 = arith.mulf %5, %8 : vector<98x128xf32>
    %10 = arith.select %7, %5, %9 : vector<98x128xi1>, vector<98x128xf32>
    %11 = arith.truncf %10 : vector<98x128xf32> to vector<98x128xbf16>
    %c0_7 = arith.constant 0 : index
    %c0_8 = arith.constant 0 : index
    %12 = vector.load %arg3[%c0_7, %c0_8] : memref<128x64xbf16, #tpu.memory_space<vmem>>, vector<128x64xbf16>
    %cst_9 = arith.constant dense<0.000000e+00> : vector<98x64xf32>
    %13 = tpu.matmul %11, %12, %cst_9 {dimension_numbers = #tpu.dot_dimension_numbers<[1], [0], [0], [1], [0, 0, 1, 1], [], []>} : vector<98x128xbf16>, vector<128x64xbf16>, vector<98x64xf32> -> vector<98x64xf32>
    %c0_10 = arith.constant 0 : index
    %c0_11 = arith.constant 0 : index
    %14 = vector.load %arg4[%c0_10, %c0_11] : memref<1x64xf32, #tpu.memory_space<vmem>>, vector<1x64xf32>
    %15 = vector.broadcast %14 : vector<1x64xf32> to vector<98x64xf32>
    %16 = arith.addf %13, %15 : vector<98x64xf32>
    %cst_12 = arith.constant 0.000000e+00 : f32
    %17 = vector.broadcast %cst_12 : f32 to vector<98x64xf32>
    %18 = arith.cmpf oge, %16, %17 : vector<98x64xf32>
    %cst_13 = arith.constant 0.229166672 : f32
    %19 = vector.broadcast %cst_13 : f32 to vector<98x64xf32>
    %20 = arith.mulf %16, %19 : vector<98x64xf32>
    %21 = arith.select %18, %16, %20 : vector<98x64xi1>, vector<98x64xf32>
    %22 = arith.truncf %21 : vector<98x64xf32> to vector<98x64xbf16>
    %c0_14 = arith.constant 0 : index
    %c0_15 = arith.constant 0 : index
    %23 = vector.load %arg5[%c0_14, %c0_15] : memref<98x64xbf16, #tpu.memory_space<vmem>>, vector<98x64xbf16>
    tpu.vector_store %arg5[%c0_14, %c0_15], %22 {strides = array<i32>} : memref<98x64xbf16, #tpu.memory_space<vmem>>, vector<98x64xbf16>,
    return
  }
}

module attributes {stable_mosaic.version = 11 : i64} {
  func.func @_bottleneck_kernel(%arg0: memref<18x576xbf16, #tpu.memory_space<vmem>>, %arg1: memref<576x128xbf16, #tpu.memory_space<vmem>>, %arg2: memref<1x128xf32, #tpu.memory_space<vmem>>, %arg3: memref<9x128x4xbf16, #tpu.memory_space<vmem>>, %arg4: memref<1x4xf32, #tpu.memory_space<vmem>>, %arg5: memref<2x2xf32, #tpu.memory_space<vmem>>, %arg6: memref<2x1152xbf16, #tpu.memory_space<vmem>>, %arg7: memref<1x1152xf32, #tpu.memory_space<vmem>>, %arg8: memref<2x2xf32, #tpu.memory_space<vmem>>, %arg9: memref<2x2xf32, #tpu.memory_space<vmem>>, %arg10: memref<2x1152xbf16, #tpu.memory_space<vmem>>) attributes {dimension_semantics = [], scalar_prefetch = 0 : i64, scratch_operands = 0 : i64, tpu.core_type = #tpu.core_type<tc>} {
    %c0 = arith.constant 0 : index
    %c0_0 = arith.constant 0 : index
    %0 = vector.load %arg0[%c0, %c0_0] : memref<18x576xbf16, #tpu.memory_space<vmem>>, vector<18x576xbf16>
    %c0_1 = arith.constant 0 : index
    %c0_2 = arith.constant 0 : index
    %1 = vector.load %arg1[%c0_1, %c0_2] : memref<576x128xbf16, #tpu.memory_space<vmem>>, vector<576x128xbf16>
    %cst = arith.constant dense<0.000000e+00> : vector<18x128xf32>
    %2 = tpu.matmul %0, %1, %cst {dimension_numbers = #tpu.dot_dimension_numbers<[1], [0], [0], [1], [0, 0, 1, 1], [], []>} : vector<18x576xbf16>, vector<576x128xbf16>, vector<18x128xf32> -> vector<18x128xf32>
    %c0_3 = arith.constant 0 : index
    %c0_4 = arith.constant 0 : index
    %3 = vector.load %arg2[%c0_3, %c0_4] : memref<1x128xf32, #tpu.memory_space<vmem>>, vector<1x128xf32>
    %4 = vector.broadcast %3 : vector<1x128xf32> to vector<18x128xf32>
    %5 = arith.addf %2, %4 : vector<18x128xf32>
    %cst_5 = arith.constant 0.000000e+00 : f32
    %6 = vector.broadcast %cst_5 : f32 to vector<18x128xf32>
    %7 = arith.cmpf oge, %5, %6 : vector<18x128xf32>
    %cst_6 = arith.constant 0.229166672 : f32
    %8 = vector.broadcast %cst_6 : f32 to vector<18x128xf32>
    %9 = arith.mulf %5, %8 : vector<18x128xf32>
    %10 = arith.select %7, %5, %9 : vector<18x128xi1>, vector<18x128xf32>
    %cst_7 = arith.constant 0.000000e+00 : f32
    %11 = vector.broadcast %cst_7 : f32 to vector<18x128xf32>
    %12 = arith.cmpf oge, %10, %11 : vector<18x128xf32>
    %cst_8 = arith.constant 0.229166672 : f32
    %13 = vector.broadcast %cst_8 : f32 to vector<18x128xf32>
    %14 = arith.mulf %10, %13 : vector<18x128xf32>
    %15 = arith.select %12, %10, %14 : vector<18x128xi1>, vector<18x128xf32>
    %cst_9 = arith.constant 0.000000e+00 : f32
    %16 = vector.broadcast %cst_9 : f32 to vector<2x4xf32>
    %17 = vector.extract_strided_slice %15 {offsets = [0, 0], sizes = [2, 128], strides = [1, 1]} : vector<18x128xf32> to vector<2x128xf32>
    %18 = arith.truncf %17 : vector<2x128xf32> to vector<2x128xbf16>
    %c0_10 = arith.constant 0 : index
    %c0_11 = arith.constant 0 : index
    %c0_12 = arith.constant 0 : index
    %19 = vector.load %arg3[%c0_10, %c0_11, %c0_12] : memref<9x128x4xbf16, #tpu.memory_space<vmem>>, vector<1x128x4xbf16>
    %20 = vector.shape_cast %19 : vector<1x128x4xbf16> to vector<128x4xbf16>
    %cst_13 = arith.constant dense<0.000000e+00> : vector<2x4xf32>
    %21 = tpu.matmul %18, %20, %cst_13 {dimension_numbers = #tpu.dot_dimension_numbers<[1], [0], [0], [1], [0, 0, 1, 1], [], []>} : vector<2x128xbf16>, vector<128x4xbf16>, vector<2x4xf32> -> vector<2x4xf32>
    %22 = arith.addf %16, %21 : vector<2x4xf32>
    %23 = vector.extract_strided_slice %15 {offsets = [2, 0], sizes = [2, 128], strides = [1, 1]} : vector<18x128xf32> to vector<2x128xf32>
    %24 = arith.truncf %23 : vector<2x128xf32> to vector<2x128xbf16>
    %c1 = arith.constant 1 : index
    %c0_14 = arith.constant 0 : index
    %c0_15 = arith.constant 0 : index
    %25 = vector.load %arg3[%c1, %c0_14, %c0_15] : memref<9x128x4xbf16, #tpu.memory_space<vmem>>, vector<1x128x4xbf16>
    %26 = vector.shape_cast %25 : vector<1x128x4xbf16> to vector<128x4xbf16>
    %cst_16 = arith.constant dense<0.000000e+00> : vector<2x4xf32>
    %27 = tpu.matmul %24, %26, %cst_16 {dimension_numbers = #tpu.dot_dimension_numbers<[1], [0], [0], [1], [0, 0, 1, 1], [], []>} : vector<2x128xbf16>, vector<128x4xbf16>, vector<2x4xf32> -> vector<2x4xf32>
    %28 = arith.addf %22, %27 : vector<2x4xf32>
    %29 = vector.extract_strided_slice %15 {offsets = [4, 0], sizes = [2, 128], strides = [1, 1]} : vector<18x128xf32> to vector<2x128xf32>
    %30 = arith.truncf %29 : vector<2x128xf32> to vector<2x128xbf16>
    %c2 = arith.constant 2 : index
    %c0_17 = arith.constant 0 : index
    %c0_18 = arith.constant 0 : index
    %31 = vector.load %arg3[%c2, %c0_17, %c0_18] : memref<9x128x4xbf16, #tpu.memory_space<vmem>>, vector<1x128x4xbf16>
    %32 = vector.shape_cast %31 : vector<1x128x4xbf16> to vector<128x4xbf16>
    %cst_19 = arith.constant dense<0.000000e+00> : vector<2x4xf32>
    %33 = tpu.matmul %30, %32, %cst_19 {dimension_numbers = #tpu.dot_dimension_numbers<[1], [0], [0], [1], [0, 0, 1, 1], [], []>} : vector<2x128xbf16>, vector<128x4xbf16>, vector<2x4xf32> -> vector<2x4xf32>
    %34 = arith.addf %28, %33 : vector<2x4xf32>
    %35 = vector.extract_strided_slice %15 {offsets = [6, 0], sizes = [2, 128], strides = [1, 1]} : vector<18x128xf32> to vector<2x128xf32>
    %36 = arith.truncf %35 : vector<2x128xf32> to vector<2x128xbf16>
    %c3 = arith.constant 3 : index
    %c0_20 = arith.constant 0 : index
    %c0_21 = arith.constant 0 : index
    %37 = vector.load %arg3[%c3, %c0_20, %c0_21] : memref<9x128x4xbf16, #tpu.memory_space<vmem>>, vector<1x128x4xbf16>
    %38 = vector.shape_cast %37 : vector<1x128x4xbf16> to vector<128x4xbf16>
    %cst_22 = arith.constant dense<0.000000e+00> : vector<2x4xf32>
    %39 = tpu.matmul %36, %38, %cst_22 {dimension_numbers = #tpu.dot_dimension_numbers<[1], [0], [0], [1], [0, 0, 1, 1], [], []>} : vector<2x128xbf16>, vector<128x4xbf16>, vector<2x4xf32> -> vector<2x4xf32>
    %40 = arith.addf %34, %39 : vector<2x4xf32>
    %41 = vector.extract_strided_slice %15 {offsets = [8, 0], sizes = [2, 128], strides = [1, 1]} : vector<18x128xf32> to vector<2x128xf32>
    %42 = arith.truncf %41 : vector<2x128xf32> to vector<2x128xbf16>
    %c4 = arith.constant 4 : index
    %c0_23 = arith.constant 0 : index
    %c0_24 = arith.constant 0 : index
    %43 = vector.load %arg3[%c4, %c0_23, %c0_24] : memref<9x128x4xbf16, #tpu.memory_space<vmem>>, vector<1x128x4xbf16>
    %44 = vector.shape_cast %43 : vector<1x128x4xbf16> to vector<128x4xbf16>
    %cst_25 = arith.constant dense<0.000000e+00> : vector<2x4xf32>
    %45 = tpu.matmul %42, %44, %cst_25 {dimension_numbers = #tpu.dot_dimension_numbers<[1], [0], [0], [1], [0, 0, 1, 1], [], []>} : vector<2x128xbf16>, vector<128x4xbf16>, vector<2x4xf32> -> vector<2x4xf32>
    %46 = arith.addf %40, %45 : vector<2x4xf32>
    %47 = vector.extract_strided_slice %15 {offsets = [10, 0], sizes = [2, 128], strides = [1, 1]} : vector<18x128xf32> to vector<2x128xf32>
    %48 = arith.truncf %47 : vector<2x128xf32> to vector<2x128xbf16>
    %c5 = arith.constant 5 : index
    %c0_26 = arith.constant 0 : index
    %c0_27 = arith.constant 0 : index
    %49 = vector.load %arg3[%c5, %c0_26, %c0_27] : memref<9x128x4xbf16, #tpu.memory_space<vmem>>, vector<1x128x4xbf16>
    %50 = vector.shape_cast %49 : vector<1x128x4xbf16> to vector<128x4xbf16>
    %cst_28 = arith.constant dense<0.000000e+00> : vector<2x4xf32>
    %51 = tpu.matmul %48, %50, %cst_28 {dimension_numbers = #tpu.dot_dimension_numbers<[1], [0], [0], [1], [0, 0, 1, 1], [], []>} : vector<2x128xbf16>, vector<128x4xbf16>, vector<2x4xf32> -> vector<2x4xf32>
    %52 = arith.addf %46, %51 : vector<2x4xf32>
    %53 = vector.extract_strided_slice %15 {offsets = [12, 0], sizes = [2, 128], strides = [1, 1]} : vector<18x128xf32> to vector<2x128xf32>
    %54 = arith.truncf %53 : vector<2x128xf32> to vector<2x128xbf16>
    %c6 = arith.constant 6 : index
    %c0_29 = arith.constant 0 : index
    %c0_30 = arith.constant 0 : index
    %55 = vector.load %arg3[%c6, %c0_29, %c0_30] : memref<9x128x4xbf16, #tpu.memory_space<vmem>>, vector<1x128x4xbf16>
    %56 = vector.shape_cast %55 : vector<1x128x4xbf16> to vector<128x4xbf16>
    %cst_31 = arith.constant dense<0.000000e+00> : vector<2x4xf32>
    %57 = tpu.matmul %54, %56, %cst_31 {dimension_numbers = #tpu.dot_dimension_numbers<[1], [0], [0], [1], [0, 0, 1, 1], [], []>} : vector<2x128xbf16>, vector<128x4xbf16>, vector<2x4xf32> -> vector<2x4xf32>
    %58 = arith.addf %52, %57 : vector<2x4xf32>
    %59 = vector.extract_strided_slice %15 {offsets = [14, 0], sizes = [2, 128], strides = [1, 1]} : vector<18x128xf32> to vector<2x128xf32>
    %60 = arith.truncf %59 : vector<2x128xf32> to vector<2x128xbf16>
    %c7 = arith.constant 7 : index
    %c0_32 = arith.constant 0 : index
    %c0_33 = arith.constant 0 : index
    %61 = vector.load %arg3[%c7, %c0_32, %c0_33] : memref<9x128x4xbf16, #tpu.memory_space<vmem>>, vector<1x128x4xbf16>
    %62 = vector.shape_cast %61 : vector<1x128x4xbf16> to vector<128x4xbf16>
    %cst_34 = arith.constant dense<0.000000e+00> : vector<2x4xf32>
    %63 = tpu.matmul %60, %62, %cst_34 {dimension_numbers = #tpu.dot_dimension_numbers<[1], [0], [0], [1], [0, 0, 1, 1], [], []>} : vector<2x128xbf16>, vector<128x4xbf16>, vector<2x4xf32> -> vector<2x4xf32>
    %64 = arith.addf %58, %63 : vector<2x4xf32>
    %65 = vector.extract_strided_slice %15 {offsets = [16, 0], sizes = [2, 128], strides = [1, 1]} : vector<18x128xf32> to vector<2x128xf32>
    %66 = arith.truncf %65 : vector<2x128xf32> to vector<2x128xbf16>
    %c8 = arith.constant 8 : index
    %c0_35 = arith.constant 0 : index
    %c0_36 = arith.constant 0 : index
    %67 = vector.load %arg3[%c8, %c0_35, %c0_36] : memref<9x128x4xbf16, #tpu.memory_space<vmem>>, vector<1x128x4xbf16>
    %68 = vector.shape_cast %67 : vector<1x128x4xbf16> to vector<128x4xbf16>
    %cst_37 = arith.constant dense<0.000000e+00> : vector<2x4xf32>
    %69 = tpu.matmul %66, %68, %cst_37 {dimension_numbers = #tpu.dot_dimension_numbers<[1], [0], [0], [1], [0, 0, 1, 1], [], []>} : vector<2x128xbf16>, vector<128x4xbf16>, vector<2x4xf32> -> vector<2x4xf32>
    %70 = arith.addf %64, %69 : vector<2x4xf32>
    %c0_38 = arith.constant 0 : index
    %c0_39 = arith.constant 0 : index
    %71 = vector.load %arg4[%c0_38, %c0_39] : memref<1x4xf32, #tpu.memory_space<vmem>>, vector<1x4xf32>
    %72 = vector.broadcast %71 : vector<1x4xf32> to vector<2x4xf32>
    %73 = arith.addf %70, %72 : vector<2x4xf32>
    %74 = vector.extract_strided_slice %73 {offsets = [0, 0], sizes = [2, 2], strides = [1, 1]} : vector<2x4xf32> to vector<2x2xf32>
    %75 = vector.extract_strided_slice %73 {offsets = [0, 2], sizes = [2, 2], strides = [1, 1]} : vector<2x4xf32> to vector<2x2xf32>
    %c0_40 = arith.constant 0 : index
    %c0_41 = arith.constant 0 : index
    %76 = vector.load %arg8[%c0_40, %c0_41] : memref<2x2xf32, #tpu.memory_space<vmem>>, vector<2x2xf32>
    tpu.vector_store %arg8[%c0_40, %c0_41], %74 {strides = array<i32>} : memref<2x2xf32, #tpu.memory_space<vmem>>, vector<2x2xf32>,
    %c0_42 = arith.constant 0 : index
    %c0_43 = arith.constant 0 : index
    %77 = vector.load %arg9[%c0_42, %c0_43] : memref<2x2xf32, #tpu.memory_space<vmem>>, vector<2x2xf32>
    tpu.vector_store %arg9[%c0_42, %c0_43], %75 {strides = array<i32>} : memref<2x2xf32, #tpu.memory_space<vmem>>, vector<2x2xf32>,
    %cst_44 = arith.constant 5.000000e-01 : f32
    %78 = vector.broadcast %cst_44 : f32 to vector<2x2xf32>
    %79 = arith.mulf %75, %78 : vector<2x2xf32>
    %80 = math.exp %79 : vector<2x2xf32>
    %c0_45 = arith.constant 0 : index
    %c0_46 = arith.constant 0 : index
    %81 = vector.load %arg5[%c0_45, %c0_46] : memref<2x2xf32, #tpu.memory_space<vmem>>, vector<2x2xf32>
    %82 = arith.mulf %80, %81 : vector<2x2xf32>
    %83 = arith.addf %74, %82 : vector<2x2xf32>
    %cst_47 = arith.constant 0.000000e+00 : f32
    %84 = vector.broadcast %cst_47 : f32 to vector<2x2xf32>
    %85 = arith.cmpf oge, %83, %84 : vector<2x2xf32>
    %cst_48 = arith.constant 0.229166672 : f32
    %86 = vector.broadcast %cst_48 : f32 to vector<2x2xf32>
    %87 = arith.mulf %83, %86 : vector<2x2xf32>
    %88 = arith.select %85, %83, %87 : vector<2x2xi1>, vector<2x2xf32>
    %89 = arith.truncf %88 : vector<2x2xf32> to vector<2x2xbf16>
    %c0_49 = arith.constant 0 : index
    %c0_50 = arith.constant 0 : index
    %90 = vector.load %arg6[%c0_49, %c0_50] : memref<2x1152xbf16, #tpu.memory_space<vmem>>, vector<2x1152xbf16>
    %cst_51 = arith.constant dense<0.000000e+00> : vector<2x1152xf32>
    %91 = tpu.matmul %89, %90, %cst_51 {dimension_numbers = #tpu.dot_dimension_numbers<[1], [0], [0], [1], [0, 0, 1, 1], [], []>} : vector<2x2xbf16>, vector<2x1152xbf16>, vector<2x1152xf32> -> vector<2x1152xf32>
    %c0_52 = arith.constant 0 : index
    %c0_53 = arith.constant 0 : index
    %92 = vector.load %arg7[%c0_52, %c0_53] : memref<1x1152xf32, #tpu.memory_space<vmem>>, vector<1x1152xf32>
    %93 = vector.broadcast %92 : vector<1x1152xf32> to vector<2x1152xf32>
    %94 = arith.addf %91, %93 : vector<2x1152xf32>
    %cst_54 = arith.constant 0.000000e+00 : f32
    %95 = vector.broadcast %cst_54 : f32 to vector<2x1152xf32>
    %96 = arith.cmpf oge, %94, %95 : vector<2x1152xf32>
    %cst_55 = arith.constant 0.229166672 : f32
    %97 = vector.broadcast %cst_55 : f32 to vector<2x1152xf32>
    %98 = arith.mulf %94, %97 : vector<2x1152xf32>
    %99 = arith.select %96, %94, %98 : vector<2x1152xi1>, vector<2x1152xf32>
    %cst_56 = arith.constant 0.000000e+00 : f32
    %100 = vector.broadcast %cst_56 : f32 to vector<2x1152xf32>
    %101 = arith.cmpf oge, %99, %100 : vector<2x1152xf32>
    %cst_57 = arith.constant 0.229166672 : f32
    %102 = vector.broadcast %cst_57 : f32 to vector<2x1152xf32>
    %103 = arith.mulf %99, %102 : vector<2x1152xf32>
    %104 = arith.select %101, %99, %103 : vector<2x1152xi1>, vector<2x1152xf32>
    %105 = arith.truncf %104 : vector<2x1152xf32> to vector<2x1152xbf16>
    %c0_58 = arith.constant 0 : index
    %c0_59 = arith.constant 0 : index
    %106 = vector.load %arg10[%c0_58, %c0_59] : memref<2x1152xbf16, #tpu.memory_space<vmem>>, vector<2x1152xbf16>
    tpu.vector_store %arg10[%c0_58, %c0_59], %105 {strides = array<i32>} : memref<2x1152xbf16, #tpu.memory_space<vmem>>, vector<2x1152xbf16>,
    return
  }
}

module attributes {stable_mosaic.version = 11 : i64} {
  func.func @_decoder_kernel(%arg0: memref<98x1152xbf16, #tpu.memory_space<vmem>>, %arg1: memref<1152x64xbf16, #tpu.memory_space<vmem>>, %arg2: memref<1x64xf32, #tpu.memory_space<vmem>>, %arg3: memref<64x128xbf16, #tpu.memory_space<vmem>>, %arg4: memref<1x128xf32, #tpu.memory_space<vmem>>, %arg5: memref<128x16xbf16, #tpu.memory_space<vmem>>, %arg6: memref<1x16xf32, #tpu.memory_space<vmem>>, %arg7: memref<98x16xf32, #tpu.memory_space<vmem>>) attributes {dimension_semantics = [], scalar_prefetch = 0 : i64, scratch_operands = 0 : i64, tpu.core_type = #tpu.core_type<tc>} {
    %c0 = arith.constant 0 : index
    %c0_0 = arith.constant 0 : index
    %0 = vector.load %arg0[%c0, %c0_0] : memref<98x1152xbf16, #tpu.memory_space<vmem>>, vector<98x1152xbf16>
    %c0_1 = arith.constant 0 : index
    %c0_2 = arith.constant 0 : index
    %1 = vector.load %arg1[%c0_1, %c0_2] : memref<1152x64xbf16, #tpu.memory_space<vmem>>, vector<1152x64xbf16>
    %cst = arith.constant dense<0.000000e+00> : vector<98x64xf32>
    %2 = tpu.matmul %0, %1, %cst {dimension_numbers = #tpu.dot_dimension_numbers<[1], [0], [0], [1], [0, 0, 1, 1], [], []>} : vector<98x1152xbf16>, vector<1152x64xbf16>, vector<98x64xf32> -> vector<98x64xf32>
    %c0_3 = arith.constant 0 : index
    %c0_4 = arith.constant 0 : index
    %3 = vector.load %arg2[%c0_3, %c0_4] : memref<1x64xf32, #tpu.memory_space<vmem>>, vector<1x64xf32>
    %4 = vector.broadcast %3 : vector<1x64xf32> to vector<98x64xf32>
    %5 = arith.addf %2, %4 : vector<98x64xf32>
    %cst_5 = arith.constant 0.000000e+00 : f32
    %6 = vector.broadcast %cst_5 : f32 to vector<98x64xf32>
    %7 = arith.cmpf oge, %5, %6 : vector<98x64xf32>
    %cst_6 = arith.constant 0.229166672 : f32
    %8 = vector.broadcast %cst_6 : f32 to vector<98x64xf32>
    %9 = arith.mulf %5, %8 : vector<98x64xf32>
    %10 = arith.select %7, %5, %9 : vector<98x64xi1>, vector<98x64xf32>
    %11 = arith.truncf %10 : vector<98x64xf32> to vector<98x64xbf16>
    %c0_7 = arith.constant 0 : index
    %c0_8 = arith.constant 0 : index
    %12 = vector.load %arg3[%c0_7, %c0_8] : memref<64x128xbf16, #tpu.memory_space<vmem>>, vector<64x128xbf16>
    %cst_9 = arith.constant dense<0.000000e+00> : vector<98x128xf32>
    %13 = tpu.matmul %11, %12, %cst_9 {dimension_numbers = #tpu.dot_dimension_numbers<[1], [0], [0], [1], [0, 0, 1, 1], [], []>} : vector<98x64xbf16>, vector<64x128xbf16>, vector<98x128xf32> -> vector<98x128xf32>
    %c0_10 = arith.constant 0 : index
    %c0_11 = arith.constant 0 : index
    %14 = vector.load %arg4[%c0_10, %c0_11] : memref<1x128xf32, #tpu.memory_space<vmem>>, vector<1x128xf32>
    %15 = vector.broadcast %14 : vector<1x128xf32> to vector<98x128xf32>
    %16 = arith.addf %13, %15 : vector<98x128xf32>
    %cst_12 = arith.constant 0.000000e+00 : f32
    %17 = vector.broadcast %cst_12 : f32 to vector<98x128xf32>
    %18 = arith.cmpf oge, %16, %17 : vector<98x128xf32>
    %cst_13 = arith.constant 0.229166672 : f32
    %19 = vector.broadcast %cst_13 : f32 to vector<98x128xf32>
    %20 = arith.mulf %16, %19 : vector<98x128xf32>
    %21 = arith.select %18, %16, %20 : vector<98x128xi1>, vector<98x128xf32>
    %22 = arith.truncf %21 : vector<98x128xf32> to vector<98x128xbf16>
    %c0_14 = arith.constant 0 : index
    %c0_15 = arith.constant 0 : index
    %23 = vector.load %arg5[%c0_14, %c0_15] : memref<128x16xbf16, #tpu.memory_space<vmem>>, vector<128x16xbf16>
    %cst_16 = arith.constant dense<0.000000e+00> : vector<98x16xf32>
    %24 = tpu.matmul %22, %23, %cst_16 {dimension_numbers = #tpu.dot_dimension_numbers<[1], [0], [0], [1], [0, 0, 1, 1], [], []>} : vector<98x128xbf16>, vector<128x16xbf16>, vector<98x16xf32> -> vector<98x16xf32>
    %c0_17 = arith.constant 0 : index
    %c0_18 = arith.constant 0 : index
    %25 = vector.load %arg6[%c0_17, %c0_18] : memref<1x16xf32, #tpu.memory_space<vmem>>, vector<1x16xf32>
    %26 = vector.broadcast %25 : vector<1x16xf32> to vector<98x16xf32>
    %27 = arith.addf %24, %26 : vector<98x16xf32>
    %28 = math.absf %27 : vector<98x16xf32>
    %cst_19 = arith.constant 0.000000e+00 : f32
    %29 = vector.broadcast %cst_19 : f32 to vector<98x16xf32>
    %30 = arith.subf %29, %28 : vector<98x16xf32>
    %31 = math.exp %30 : vector<98x16xf32>
    %cst_20 = arith.constant 0.000000e+00 : f32
    %32 = vector.broadcast %cst_20 : f32 to vector<98x16xf32>
    %33 = arith.cmpf oge, %27, %32 : vector<98x16xf32>
    %cst_21 = arith.constant 1.000000e+00 : f32
    %34 = vector.broadcast %cst_21 : f32 to vector<98x16xf32>
    %35 = arith.addf %34, %31 : vector<98x16xf32>
    %cst_22 = arith.constant 1.000000e+00 : f32
    %36 = vector.broadcast %cst_22 : f32 to vector<98x16xf32>
    %37 = arith.divf %36, %35 : vector<98x16xf32>
    %cst_23 = arith.constant 1.000000e+00 : f32
    %38 = vector.broadcast %cst_23 : f32 to vector<98x16xf32>
    %39 = arith.addf %38, %31 : vector<98x16xf32>
    %40 = arith.divf %31, %39 : vector<98x16xf32>
    %41 = arith.select %33, %37, %40 : vector<98x16xi1>, vector<98x16xf32>
    %c0_24 = arith.constant 0 : index
    %c0_25 = arith.constant 0 : index
    %42 = vector.load %arg7[%c0_24, %c0_25] : memref<98x16xf32, #tpu.memory_space<vmem>>, vector<98x16xf32>
    tpu.vector_store %arg7[%c0_24, %c0_25], %41 {strides = array<i32>} : memref<98x16xf32, #tpu.memory_space<vmem>>, vector<98x16xf32>,
    return
  }
}

</mosaic_0001>

<llo_original>
// kernel: vae_forward.3
$region0: #{vae_forward.3}
  #allocation0 [shape = 'u32[]', space=smem, size = 0x4, offset = 0x4, fixed_abs, tag = 'smem constant byte address 0x4 - core index']
  #allocation1 [shape = 'u32[72,128]{1,0:T(1,128)}', space=vmem, size = 0x9000, scoped, tag = 'internal scratch']
  %s0 = inlined_call_operand.vmem [shape: bf16[98,16], index: 0, kind: input, shape index: {}]
  %s1 = inlined_call_operand.vmem [shape: bf16[16,128], index: 1, kind: input, shape index: {}]
  %s2 = inlined_call_operand.vmem [shape: f32[1,128], index: 2, kind: input, shape index: {}]
  %s3 = inlined_call_operand.vmem [shape: bf16[128,64], index: 3, kind: input, shape index: {}]
  %s4 = inlined_call_operand.vmem [shape: f32[1,64], index: 4, kind: input, shape index: {}]
  %s5 = inlined_call_operand.vmem [shape: bf16[98,64], index: 5, kind: output, shape index: {}]
  %s6 = sld [smem:[#allocation0]]
  $region30: #{vae_forward.3} parent=0
    _
  %s8 = ssub.s32 1, %s6
  %s9 = scalar_select 0, %s8, %s6
  // Predicated region
  $region2: #{vae_forward.3} parent=0 // pred_check
    _
  $region3: #{vae_forward.3} parent=0 // pred_check_branch
    %11 = sbr.rel (0) target = $region5
  $region4: #{vae_forward.3} parent=0 // pred_region
    _
  $region5: #{vae_forward.3} parent=0 // pred_fallthru
    _
  // Predicated region
  $region6: #{vae_forward.3} parent=0 // pred_check
    _
  $region7: #{vae_forward.3} parent=0 // pred_check_branch
    %13 = sbr.rel (0) target = $region9
  $region8: #{vae_forward.3} parent=0 // pred_region
    _
  $region9: #{vae_forward.3} parent=0 // pred_fallthru
    _
  // Predicated region
  $region10: #{vae_forward.3} parent=0 // pred_check
    _
  $region11: #{vae_forward.3} parent=0 // pred_check_branch
    %15 = sbr.rel (0) target = $region13
  $region12: #{vae_forward.3} parent=0 // pred_region
    _
  $region13: #{vae_forward.3} parent=0 // pred_fallthru
    _
  // Predicated region
  $region14: #{vae_forward.3} parent=0 // pred_check
    _
  $region15: #{vae_forward.3} parent=0 // pred_check_branch
    %17 = sbr.rel (0) target = $region17
  $region16: #{vae_forward.3} parent=0 // pred_region
    _
  $region17: #{vae_forward.3} parent=0 // pred_fallthru
    _
  // Predicated region
  $region18: #{vae_forward.3} parent=0 // pred_check
    _
  $region19: #{vae_forward.3} parent=0 // pred_check_branch
    %19 = sbr.rel (0) target = $region21
  $region20: #{vae_forward.3} parent=0 // pred_region
    _
  $region21: #{vae_forward.3} parent=0 // pred_fallthru
    _
  %v21 = vld [vmem:[%s0] sm:$0xf]
  %v22 = vld [vmem:[%s0 + $0x4] sm:$0xf]
  %v23 = vld [vmem:[%s0 + $0x8] sm:$0xf]
  %v24 = vld [vmem:[%s0 + $0xc] sm:$0xf]
  %v25 = vld [vmem:[%s0 + $0x10] sm:$0xf]
  %v26 = vld [vmem:[%s0 + $0x14] sm:$0xf]
  %v27 = vld [vmem:[%s0 + $0x18] sm:$0xf]
  %v28 = vld [vmem:[%s0 + $0x1c] sm:$0xf]
  %v29 = vld [vmem:[%s0 + $0x20] sm:$0xf]
  %v30 = vld [vmem:[%s0 + $0x24] sm:$0xf]
  %v31 = vld [vmem:[%s0 + $0x28] sm:$0xf]
  %v32 = vld [vmem:[%s0 + $0x2c] sm:$0xf]
  %v33 = vld [vmem:[%s0 + $0x30] sm:$0x1]
  %v34 = vld [vmem:[%s1] sm:$0xf]
  %v35 = vld [vmem:[%s1 + $0x4] sm:$0xf]
  %v36 = vld [vmem:[%s2] sm:$0x1]
  %v38 = vperm.slane %v36, 0
  %v53 = vunpack.c.l.b16 %v21
  %v54 = vunpack.c.l.b16 %v22
  %v55 = vunpack.c.l.b16 %v23
  %v56 = vunpack.c.l.b16 %v24
  %v57 = vunpack.c.l.b16 %v25
  %v58 = vunpack.c.l.b16 %v26
  %v59 = vunpack.c.l.b16 %v27
  %v60 = vunpack.c.l.b16 %v28
  %v61 = vunpack.c.l.b16 %v29
  %v62 = vunpack.c.l.b16 %v30
  %v63 = vunpack.c.l.b16 %v31
  %v64 = vunpack.c.l.b16 %v32
  %v65 = vunpack.c.l.b16 %v33
  %v66 = vpack.c.b16 %v54, %v53
  %v67 = vpack.c.b16 %v56, %v55
  %v68 = vpack.c.b16 %v58, %v57
  %v69 = vpack.c.b16 %v60, %v59
  %v70 = vpack.c.b16 %v62, %v61
  %v71 = vpack.c.b16 %v64, %v63
  %v72 = vpack.c.b16 %v65, %v65
  %v75 = vunpack.c.l.b16 %v34
  %v76 = vunpack.c.l.b16 %v35
  %v77 = vpack.c.b16 %v76, %v75
  %vm79 = vcmask 130048
  %v81 = vsel %vm79, %v66, 0
  %v84 = vsel %vm79, %v67, 0
  %v87 = vsel %vm79, %v68, 0
  %v90 = vsel %vm79, %v69, 0
  %v93 = vsel %vm79, %v70, 0
  %v96 = vsel %vm79, %v71, 0
  %v99 = vsel %vm79, %v72, 0
  %101 = vmatpush.bf16.msra.mxu0 0
  %102 = vmatpush.bf16.msra.mxu0 0
  %103 = vmatpush.bf16.msra.mxu0 0
  %104 = vmatpush.bf16.msra.mxu0 0
  %105 = vmatpush.bf16.msra.mxu0 0
  %106 = vmatpush.bf16.msra.mxu0 0
  %107 = vmatpush.bf16.msra.mxu0 0
  %108 = vmatpush.bf16.msra.mxu0 %v77
  %109 = vmatmul.bf16.gmra.mxu0 %v81
  %v110 = vpop.f32.mrf.mxu0
  %v111 = vadd.f32 %v38, %v110
  %v112 = vpop.f32.mrf.mxu0
  %v113 = vadd.f32 %v38, %v112
  %114 = vmatmul.bf16.gmra.mxu0 %v84
  %v115 = vpop.f32.mrf.mxu0
  %v116 = vadd.f32 %v38, %v115
  %v117 = vpop.f32.mrf.mxu0
  %v118 = vadd.f32 %v38, %v117
  %119 = vmatmul.bf16.gmra.mxu0 %v87
  %v120 = vpop.f32.mrf.mxu0
  %v121 = vadd.f32 %v38, %v120
  %v122 = vpop.f32.mrf.mxu0
  %v123 = vadd.f32 %v38, %v122
  %124 = vmatmul.bf16.gmra.mxu0 %v90
  %v125 = vpop.f32.mrf.mxu0
  %v126 = vadd.f32 %v38, %v125
  %v127 = vpop.f32.mrf.mxu0
  %v128 = vadd.f32 %v38, %v127
  %129 = vmatmul.bf16.gmra.mxu0 %v93
  %v130 = vpop.f32.mrf.mxu0
  %v131 = vadd.f32 %v38, %v130
  %v132 = vpop.f32.mrf.mxu0
  %v133 = vadd.f32 %v38, %v132
  %134 = vmatmul.bf16.gmra.mxu0 %v96
  %v135 = vpop.f32.mrf.mxu0
  %v136 = vadd.f32 %v38, %v135
  %v137 = vpop.f32.mrf.mxu0
  %v138 = vadd.f32 %v38, %v137
  %139 = vmatmul.bf16.gmra.mxu0 %v99
  %v140 = vpop.f32.mrf.mxu0
  %v141 = vadd.f32 %v38, %v140
  %v142 = vpop.f32.mrf.mxu0
  %143 = vdwg.mxu0
  %vm144 = vcmp.ge.f32.partialorder %v111, 0.0
  %vm145 = vcmp.ge.f32.partialorder %v113, 0.0
  %vm146 = vcmp.ge.f32.partialorder %v116, 0.0
  %vm147 = vcmp.ge.f32.partialorder %v118, 0.0
  %vm148 = vcmp.ge.f32.partialorder %v121, 0.0
  %vm149 = vcmp.ge.f32.partialorder %v123, 0.0
  %vm150 = vcmp.ge.f32.partialorder %v126, 0.0
  %vm151 = vcmp.ge.f32.partialorder %v128, 0.0
  %vm152 = vcmp.ge.f32.partialorder %v131, 0.0
  %vm153 = vcmp.ge.f32.partialorder %v133, 0.0
  %vm154 = vcmp.ge.f32.partialorder %v136, 0.0
  %vm155 = vcmp.ge.f32.partialorder %v138, 0.0
  %vm156 = vcmp.ge.f32.partialorder %v141, 0.0
  %v157 = vmul.f32 %v111, 0.22916667
  %v158 = vmul.f32 %v113, 0.22916667
  %v159 = vmul.f32 %v116, 0.22916667
  %v160 = vmul.f32 %v118, 0.22916667
  %v161 = vmul.f32 %v121, 0.22916667
  %v162 = vmul.f32 %v123, 0.22916667
  %v163 = vmul.f32 %v126, 0.22916667
  %v164 = vmul.f32 %v128, 0.22916667
  %v165 = vmul.f32 %v131, 0.22916667
  %v166 = vmul.f32 %v133, 0.22916667
  %v167 = vmul.f32 %v136, 0.22916667
  %v168 = vmul.f32 %v138, 0.22916667
  %v169 = vmul.f32 %v141, 0.22916667
  %v170 = vsel %vm144, %v111, %v157
  %v171 = vsel %vm145, %v113, %v158
  %v172 = vsel %vm146, %v116, %v159
  %v173 = vsel %vm147, %v118, %v160
  %v174 = vsel %vm148, %v121, %v161
  %v175 = vsel %vm149, %v123, %v162
  %v176 = vsel %vm150, %v126, %v163
  %v177 = vsel %vm151, %v128, %v164
  %v178 = vsel %vm152, %v131, %v165
  %v179 = vsel %vm153, %v133, %v166
  %v180 = vsel %vm154, %v136, %v167
  %v181 = vsel %vm155, %v138, %v168
  %v182 = vsel %vm156, %v141, %v169
  %v183 = vpack.c.bf16 %v171, %v170
  %v184 = vpack.c.bf16 %v173, %v172
  %v185 = vpack.c.bf16 %v175, %v174
  %v186 = vpack.c.bf16 %v177, %v176
  %v187 = vpack.c.bf16 %v179, %v178
  %v188 = vpack.c.bf16 %v181, %v180
  %v189 = vpack.c.bf16 %v182, %v182
  %v190 = vld [vmem:[%s3] sm:$0xf]
  %v191 = vld [vmem:[%s3 + $0x4] sm:$0xf]
  %v192 = vld [vmem:[%s3 + $0x8] sm:$0xf]
  %v193 = vld [vmem:[%s3 + $0xc] sm:$0xf]
  %v194 = vld [vmem:[%s3 + $0x10] sm:$0xf]
  %v195 = vld [vmem:[%s3 + $0x14] sm:$0xf]
  %v196 = vld [vmem:[%s3 + $0x18] sm:$0xf]
  %v197 = vld [vmem:[%s3 + $0x1c] sm:$0xf]
  %v198 = vld [vmem:[%s3 + $0x20] sm:$0xf]
  %v199 = vld [vmem:[%s3 + $0x24] sm:$0xf]
  %v200 = vld [vmem:[%s3 + $0x28] sm:$0xf]
  %v201 = vld [vmem:[%s3 + $0x2c] sm:$0xf]
  %v202 = vld [vmem:[%s3 + $0x30] sm:$0xf]
  %v203 = vld [vmem:[%s3 + $0x34] sm:$0xf]
  %v204 = vld [vmem:[%s3 + $0x38] sm:$0xf]
  %v205 = vld [vmem:[%s3 + $0x3c] sm:$0xf]
  %v206 = vld [vmem:[%s4] sm:$0x1]
  %v208 = vperm.slane %v206, 0
  %v226 = vunpack.c.l.b16 %v190
  %v227 = vunpack.c.l.b16 %v191
  %v228 = vunpack.c.l.b16 %v192
  %v229 = vunpack.c.l.b16 %v193
  %v230 = vunpack.c.l.b16 %v194
  %v231 = vunpack.c.l.b16 %v195
  %v232 = vunpack.c.l.b16 %v196
  %v233 = vunpack.c.l.b16 %v197
  %v234 = vunpack.c.l.b16 %v198
  %v235 = vunpack.c.l.b16 %v199
  %v236 = vunpack.c.l.b16 %v200
  %v237 = vunpack.c.l.b16 %v201
  %v238 = vunpack.c.l.b16 %v202
  %v239 = vunpack.c.l.b16 %v203
  %v240 = vunpack.c.l.b16 %v204
  %v241 = vunpack.c.l.b16 %v205
  %v242 = vpack.c.b16 %v227, %v226
  %v243 = vpack.c.b16 %v229, %v228
  %v244 = vpack.c.b16 %v231, %v230
  %v245 = vpack.c.b16 %v233, %v232
  %v246 = vpack.c.b16 %v235, %v234
  %v247 = vpack.c.b16 %v237, %v236
  %v248 = vpack.c.b16 %v239, %v238
  %v249 = vpack.c.b16 %v241, %v240
  %258 = vmatpush.bf16.msra.mxu0 %v249
  %259 = vmatpush.bf16.msra.mxu0 %v248
  %260 = vmatpush.bf16.msra.mxu0 %v247
  %261 = vmatpush.bf16.msra.mxu0 %v246
  %262 = vmatpush.bf16.msra.mxu0 %v245
  %263 = vmatpush.bf16.msra.mxu0 %v244
  %264 = vmatpush.bf16.msra.mxu0 %v243
  %265 = vmatpush.bf16.msra.mxu0 %v242
  %266 = vmatmul.bf16.gmra.mxu0 %v183
  %v267 = vpop.f32.mrf.mxu0
  %v268 = vadd.f32 %v208, %v267
  %v269 = vpop.f32.mrf.mxu0
  %v270 = vadd.f32 %v208, %v269
  %271 = vmatmul.bf16.gmra.mxu0 %v184
  %v272 = vpop.f32.mrf.mxu0
  %v273 = vadd.f32 %v208, %v272
  %v274 = vpop.f32.mrf.mxu0
  %v275 = vadd.f32 %v208, %v274
  %276 = vmatmul.bf16.gmra.mxu0 %v185
  %v277 = vpop.f32.mrf.mxu0
  %v278 = vadd.f32 %v208, %v277
  %v279 = vpop.f32.mrf.mxu0
  %v280 = vadd.f32 %v208, %v279
  %281 = vmatmul.bf16.gmra.mxu0 %v186
  %v282 = vpop.f32.mrf.mxu0
  %v283 = vadd.f32 %v208, %v282
  %v284 = vpop.f32.mrf.mxu0
  %v285 = vadd.f32 %v208, %v284
  %286 = vmatmul.bf16.gmra.mxu0 %v187
  %v287 = vpop.f32.mrf.mxu0
  %v288 = vadd.f32 %v208, %v287
  %v289 = vpop.f32.mrf.mxu0
  %v290 = vadd.f32 %v208, %v289
  %291 = vmatmul.bf16.gmra.mxu0 %v188
  %v292 = vpop.f32.mrf.mxu0
  %v293 = vadd.f32 %v208, %v292
  %v294 = vpop.f32.mrf.mxu0
  %v295 = vadd.f32 %v208, %v294
  %296 = vmatmul.bf16.gmra.mxu0 %v189
  %v297 = vpop.f32.mrf.mxu0
  %v298 = vadd.f32 %v208, %v297
  %v299 = vpop.f32.mrf.mxu0
  %300 = vdwg.mxu0
  %vm301 = vcmp.ge.f32.partialorder %v268, 0.0
  %vm302 = vcmp.ge.f32.partialorder %v270, 0.0
  %vm303 = vcmp.ge.f32.partialorder %v273, 0.0
  %vm304 = vcmp.ge.f32.partialorder %v275, 0.0
  %vm305 = vcmp.ge.f32.partialorder %v278, 0.0
  %vm306 = vcmp.ge.f32.partialorder %v280, 0.0
  %vm307 = vcmp.ge.f32.partialorder %v283, 0.0
  %vm308 = vcmp.ge.f32.partialorder %v285, 0.0
  %vm309 = vcmp.ge.f32.partialorder %v288, 0.0
  %vm310 = vcmp.ge.f32.partialorder %v290, 0.0
  %vm311 = vcmp.ge.f32.partialorder %v293, 0.0
  %vm312 = vcmp.ge.f32.partialorder %v295, 0.0
  %vm313 = vcmp.ge.f32.partialorder %v298, 0.0
  %v314 = vmul.f32 %v268, 0.22916667
  %v315 = vmul.f32 %v270, 0.22916667
  %v316 = vmul.f32 %v273, 0.22916667
  %v317 = vmul.f32 %v275, 0.22916667
  %v318 = vmul.f32 %v278, 0.22916667
  %v319 = vmul.f32 %v280, 0.22916667
  %v320 = vmul.f32 %v283, 0.22916667
  %v321 = vmul.f32 %v285, 0.22916667
  %v322 = vmul.f32 %v288, 0.22916667
  %v323 = vmul.f32 %v290, 0.22916667
  %v324 = vmul.f32 %v293, 0.22916667
  %v325 = vmul.f32 %v295, 0.22916667
  %v326 = vmul.f32 %v298, 0.22916667
  %v327 = vsel %vm301, %v268, %v314
  %v328 = vsel %vm302, %v270, %v315
  %v329 = vsel %vm303, %v273, %v316
  %v330 = vsel %vm304, %v275, %v317
  %v331 = vsel %vm305, %v278, %v318
  %v332 = vsel %vm306, %v280, %v319
  %v333 = vsel %vm307, %v283, %v320
  %v334 = vsel %vm308, %v285, %v321
  %v335 = vsel %vm309, %v288, %v322
  %v336 = vsel %vm310, %v290, %v323
  %v337 = vsel %vm311, %v293, %v324
  %v338 = vsel %vm312, %v295, %v325
  %v339 = vsel %vm313, %v298, %v326
  %v340 = vpack.c.bf16 %v327, %v327
  %v341 = vpack.c.bf16 %v328, %v328
  %v342 = vpack.c.bf16 %v329, %v329
  %v343 = vpack.c.bf16 %v330, %v330
  %v344 = vpack.c.bf16 %v331, %v331
  %v345 = vpack.c.bf16 %v332, %v332
  %v346 = vpack.c.bf16 %v333, %v333
  %v347 = vpack.c.bf16 %v334, %v334
  %v348 = vpack.c.bf16 %v335, %v335
  %v349 = vpack.c.bf16 %v336, %v336
  %v350 = vpack.c.bf16 %v337, %v337
  %v351 = vpack.c.bf16 %v338, %v338
  %v352 = vpack.c.bf16 %v339, %v339
  %vm353 = vcmask 519168
  %354 = vst.msk [vmem:[%s5] sm:$0xf] %vm353, %v340
  %355 = vst.msk [vmem:[%s5 + $0x4] sm:$0xf] %vm353, %v341
  %356 = vst.msk [vmem:[%s5 + $0x8] sm:$0xf] %vm353, %v342
  %357 = vst.msk [vmem:[%s5 + $0xc] sm:$0xf] %vm353, %v343
  %358 = vst.msk [vmem:[%s5 + $0x10] sm:$0xf] %vm353, %v344
  %359 = vst.msk [vmem:[%s5 + $0x14] sm:$0xf] %vm353, %v345
  %360 = vst.msk [vmem:[%s5 + $0x18] sm:$0xf] %vm353, %v346
  %361 = vst.msk [vmem:[%s5 + $0x1c] sm:$0xf] %vm353, %v347
  %362 = vst.msk [vmem:[%s5 + $0x20] sm:$0xf] %vm353, %v348
  %363 = vst.msk [vmem:[%s5 + $0x24] sm:$0xf] %vm353, %v349
  %364 = vst.msk [vmem:[%s5 + $0x28] sm:$0xf] %vm353, %v350
  %365 = vst.msk [vmem:[%s5 + $0x2c] sm:$0xf] %vm353, %v351
  %vm366 = vcmask 516096
  %367 = vst.msk [vmem:[%s5 + $0x30] sm:$0x1] %vm366, %v352
  // Predicated region
  $region22: #{vae_forward.3} parent=0 // pred_check
    _
  $region23: #{vae_forward.3} parent=0 // pred_check_branch
    %369 = sbr.rel (0) target = $region25
  $region24: #{vae_forward.3} parent=0 // pred_region
    _
  $region25: #{vae_forward.3} parent=0 // pred_fallthru
    _
  // Predicated region
  $region26: #{vae_forward.3} parent=0 // pred_check
    _
  $region27: #{vae_forward.3} parent=0 // pred_check_branch
    %371 = sbr.rel (0) target = $region29
  $region28: #{vae_forward.3} parent=0 // pred_region
    _
  $region29: #{vae_forward.3} parent=0 // pred_fallthru
    _

// kernel: vae_forward.4
$region0: #{vae_forward.4}
  #allocation0 [shape = 'u32[]', space=smem, size = 0x4, offset = 0x4, fixed_abs, tag = 'smem constant byte address 0x4 - core index']
  #allocation1 [shape = 'u32[72,128]{1,0:T(1,128)}', space=vmem, size = 0x9000, scoped, tag = 'internal scratch']
  %s0 = inlined_call_operand.vmem [shape: bf16[18,576], index: 0, kind: input, shape index: {}]
  %s1 = inlined_call_operand.vmem [shape: bf16[576,128], index: 1, kind: input, shape index: {}]
  %s2 = inlined_call_operand.vmem [shape: f32[1,128], index: 2, kind: input, shape index: {}]
  %s3 = inlined_call_operand.vmem [shape: bf16[9,128,4], index: 3, kind: input, shape index: {}]
  %s4 = inlined_call_operand.vmem [shape: f32[1,4], index: 4, kind: input, shape index: {}]
  %s5 = inlined_call_operand.vmem [shape: f32[2,2], index: 5, kind: input, shape index: {}]
  %s6 = inlined_call_operand.vmem [shape: bf16[2,1152], index: 6, kind: input, shape index: {}]
  %s7 = inlined_call_operand.vmem [shape: f32[1,1152], index: 7, kind: input, shape index: {}]
  %s8 = inlined_call_operand.hbm [shape: f32[2,2], index: 8, kind: output, shape index: {0}]
  %s9 = inlined_call_operand.hbm [shape: f32[2,2], index: 9, kind: output, shape index: {1}]
  %s10 = inlined_call_operand.vmem [shape: bf16[2,1152], index: 10, kind: output, shape index: {2}]
  %11 = xla_tuple %s8, %s9, %s10
  %s12 = sld [smem:[#allocation0]]
  $region58: #{vae_forward.4} parent=0
    _
  %s14 = ssub.s32 1, %s12
  %s15 = scalar_select 0, %s14, %s12
  $region1: #{vae_forward.4} parent=0
    #allocation2 [shape = 'u8[1024]{0}', space=vmem, size = 0x400, scoped, tag = 'output window, operand 0, single buffered']
    #allocation3 [shape = 's32[1]{0}', space=sflag, size = 0x4, scoped, tag = 'scoped memory for vae_forward.4']
    #allocation4 [shape = 'u8[1024]{0}', space=vmem, size = 0x400, scoped, tag = 'output window, operand 1, single buffered']
    #allocation5 [shape = 's32[1]{0}', space=sflag, size = 0x4, scoped, tag = 'scoped memory for vae_forward.4']
    %16 = vsyncpa [#allocation3], 0
    %17 = vsyncpa [#allocation5], 0
    // Predicated region
    $region2: #{vae_forward.4} parent=1 // pred_check
      _
    $region3: #{vae_forward.4} parent=1 // pred_check_branch
      %19 = sbr.rel (0) target = $region5
    $region4: #{vae_forward.4} parent=1 // pred_region
      _
    $region5: #{vae_forward.4} parent=1 // pred_fallthru
      _
    // Predicated region
    $region6: #{vae_forward.4} parent=1 // pred_check
      _
    $region7: #{vae_forward.4} parent=1 // pred_check_branch
      %21 = sbr.rel (0) target = $region9
    $region8: #{vae_forward.4} parent=1 // pred_region
      _
    $region9: #{vae_forward.4} parent=1 // pred_fallthru
      _
    // Predicated region
    $region10: #{vae_forward.4} parent=1 // pred_check
      _
    $region11: #{vae_forward.4} parent=1 // pred_check_branch
      %23 = sbr.rel (0) target = $region13
    $region12: #{vae_forward.4} parent=1 // pred_region
      _
    $region13: #{vae_forward.4} parent=1 // pred_fallthru
      _
    // Predicated region
    $region14: #{vae_forward.4} parent=1 // pred_check
      _
    $region15: #{vae_forward.4} parent=1 // pred_check_branch
      %25 = sbr.rel (0) target = $region17
    $region16: #{vae_forward.4} parent=1 // pred_region
      _
    $region17: #{vae_forward.4} parent=1 // pred_fallthru
      _
    // Predicated region
    $region18: #{vae_forward.4} parent=1 // pred_check
      _
    $region19: #{vae_forward.4} parent=1 // pred_check_branch
      %27 = sbr.rel (0) target = $region21
    $region20: #{vae_forward.4} parent=1 // pred_region
      _
    $region21: #{vae_forward.4} parent=1 // pred_fallthru
      _
    // Predicated region
    $region22: #{vae_forward.4} parent=1 // pred_check
      _
    $region23: #{vae_forward.4} parent=1 // pred_check_branch
      %29 = sbr.rel (0) target = $region25
    $region24: #{vae_forward.4} parent=1 // pred_region
      _
    $region25: #{vae_forward.4} parent=1 // pred_fallthru
      _
    // Predicated region
    $region26: #{vae_forward.4} parent=1 // pred_check
      _
    $region27: #{vae_forward.4} parent=1 // pred_check_branch
      %31 = sbr.rel (0) target = $region29
    $region28: #{vae_forward.4} parent=1 // pred_region
      _
    $region29: #{vae_forward.4} parent=1 // pred_fallthru
      _
    // Predicated region
    $region30: #{vae_forward.4} parent=1 // pred_check
      _
    $region31: #{vae_forward.4} parent=1 // pred_check_branch
      %33 = sbr.rel (0) target = $region33
    $region32: #{vae_forward.4} parent=1 // pred_region
      _
    $region33: #{vae_forward.4} parent=1 // pred_fallthru
      _
    %v35 = vld [vmem:[%s0] sm:$0xff]
    %v36 = vld [vmem:[%s0 + $0x8] sm:$0xff]
    %v37 = vld [vmem:[%s0 + $0x10] sm:$0xf]
    %v38 = vld [vmem:[%s0 + $0x14] sm:$0xff]
    %v39 = vld [vmem:[%s0 + $0x1c] sm:$0xff]
    %v40 = vld [vmem:[%s0 + $0x24] sm:$0xf]
    %v41 = vld [vmem:[%s0 + $0x28] sm:$0x11]
    %v42 = vld [vmem:[%s0 + $0x30] sm:$0x11]
    %v43 = vld [vmem:[%s0 + $0x38] sm:$0x1]
    %v44 = vld [vmem:[%s1] sm:$0xf]
    %v45 = vld [vmem:[%s1 + $0x4] sm:$0xf]
    %v46 = vld [vmem:[%s1 + $0x8] sm:$0xf]
    %v47 = vld [vmem:[%s1 + $0xc] sm:$0xf]
    %v48 = vld [vmem:[%s1 + $0x10] sm:$0xf]
    %v49 = vld [vmem:[%s1 + $0x14] sm:$0xf]
    %v50 = vld [vmem:[%s1 + $0x18] sm:$0xf]
    %v51 = vld [vmem:[%s1 + $0x1c] sm:$0xf]
    %v52 = vld [vmem:[%s1 + $0x20] sm:$0xf]
    %v53 = vld [vmem:[%s1 + $0x24] sm:$0xf]
    %v54 = vld [vmem:[%s1 + $0x28] sm:$0xf]
    %v55 = vld [vmem:[%s1 + $0x2c] sm:$0xf]
    %v56 = vld [vmem:[%s1 + $0x30] sm:$0xf]
    %v57 = vld [vmem:[%s1 + $0x34] sm:$0xf]
    %v58 = vld [vmem:[%s1 + $0x38] sm:$0xf]
    %v59 = vld [vmem:[%s1 + $0x3c] sm:$0xf]
    %v60 = vld [vmem:[%s1 + $0x40] sm:$0xf]
    %v61 = vld [vmem:[%s1 + $0x44] sm:$0xf]
    %v62 = vld [vmem:[%s1 + $0x48] sm:$0xf]
    %v63 = vld [vmem:[%s1 + $0x4c] sm:$0xf]
    %v64 = vld [vmem:[%s1 + $0x50] sm:$0xf]
    %v65 = vld [vmem:[%s1 + $0x54] sm:$0xf]
    %v66 = vld [vmem:[%s1 + $0x58] sm:$0xf]
    %v67 = vld [vmem:[%s1 + $0x5c] sm:$0xf]
    %v68 = vld [vmem:[%s1 + $0x60] sm:$0xf]
    %v69 = vld [vmem:[%s1 + $0x64] sm:$0xf]
    %v70 = vld [vmem:[%s1 + $0x68] sm:$0xf]
    %v71 = vld [vmem:[%s1 + $0x6c] sm:$0xf]
    %v72 = vld [vmem:[%s1 + $0x70] sm:$0xf]
    %v73 = vld [vmem:[%s1 + $0x74] sm:$0xf]
    %v74 = vld [vmem:[%s1 + $0x78] sm:$0xf]
    %v75 = vld [vmem:[%s1 + $0x7c] sm:$0xf]
    %v76 = vld [vmem:[%s1 + $0x80] sm:$0xf]
    %v77 = vld [vmem:[%s1 + $0x84] sm:$0xf]
    %v78 = vld [vmem:[%s1 + $0x88] sm:$0xf]
    %v79 = vld [vmem:[%s1 + $0x8c] sm:$0xf]
    %v80 = vld [vmem:[%s1 + $0x90] sm:$0xf]
    %v81 = vld [vmem:[%s1 + $0x94] sm:$0xf]
    %v82 = vld [vmem:[%s1 + $0x98] sm:$0xf]
    %v83 = vld [vmem:[%s1 + $0x9c] sm:$0xf]
    %v84 = vld [vmem:[%s1 + $0xa0] sm:$0xf]
    %v85 = vld [vmem:[%s1 + $0xa4] sm:$0xf]
    %v86 = vld [vmem:[%s1 + $0xa8] sm:$0xf]
    %v87 = vld [vmem:[%s1 + $0xac] sm:$0xf]
    %v88 = vld [vmem:[%s1 + $0xb0] sm:$0xf]
    %v89 = vld [vmem:[%s1 + $0xb4] sm:$0xf]
    %v90 = vld [vmem:[%s1 + $0xb8] sm:$0xf]
    %v91 = vld [vmem:[%s1 + $0xbc] sm:$0xf]
    %v92 = vld [vmem:[%s1 + $0xc0] sm:$0xf]
    %v93 = vld [vmem:[%s1 + $0xc4] sm:$0xf]
    %v94 = vld [vmem:[%s1 + $0xc8] sm:$0xf]
    %v95 = vld [vmem:[%s1 + $0xcc] sm:$0xf]
    %v96 = vld [vmem:[%s1 + $0xd0] sm:$0xf]
    %v97 = vld [vmem:[%s1 + $0xd4] sm:$0xf]
    %v98 = vld [vmem:[%s1 + $0xd8] sm:$0xf]
    %v99 = vld [vmem:[%s1 + $0xdc] sm:$0xf]
    %v100 = vld [vmem:[%s1 + $0xe0] sm:$0xf]
    %v101 = vld [vmem:[%s1 + $0xe4] sm:$0xf]
    %v102 = vld [vmem:[%s1 + $0xe8] sm:$0xf]
    %v103 = vld [vmem:[%s1 + $0xec] sm:$0xf]
    %v104 = vld [vmem:[%s1 + $0xf0] sm:$0xf]
    %v105 = vld [vmem:[%s1 + $0xf4] sm:$0xf]
    %v106 = vld [vmem:[%s1 + $0xf8] sm:$0xf]
    %v107 = vld [vmem:[%s1 + $0xfc] sm:$0xf]
    %v108 = vld [vmem:[%s1 + $0x100] sm:$0xf]
    %v109 = vld [vmem:[%s1 + $0x104] sm:$0xf]
    %v110 = vld [vmem:[%s1 + $0x108] sm:$0xf]
    %v111 = vld [vmem:[%s1 + $0x10c] sm:$0xf]
    %v112 = vld [vmem:[%s1 + $0x110] sm:$0xf]
    %v113 = vld [vmem:[%s1 + $0x114] sm:$0xf]
    %v114 = vld [vmem:[%s1 + $0x118] sm:$0xf]
    %v115 = vld [vmem:[%s1 + $0x11c] sm:$0xf]
    %v116 = vld [vmem:[%s2] sm:$0x1]
    %v118 = vperm.slane %v116, 0
    %v129 = vunpack.c.l.b16 %v35
    %v130 = vunpack.c.h.b16 %v35
    %v131 = vunpack.c.l.b16 %v36
    %v132 = vunpack.c.h.b16 %v36
    %v133 = vunpack.c.l.b16 %v37
    %v134 = vunpack.c.l.b16 %v38
    %v135 = vunpack.c.h.b16 %v38
    %v136 = vunpack.c.l.b16 %v39
    %v137 = vunpack.c.h.b16 %v39
    %v138 = vunpack.c.l.b16 %v40
    %v139 = vunpack.c.l.b16 %v41
    %v140 = vunpack.c.h.b16 %v41
    %v141 = vunpack.c.l.b16 %v42
    %v142 = vunpack.c.h.b16 %v42
    %v143 = vunpack.c.l.b16 %v43
    %v144 = vpack.c.b16 %v134, %v129
    %v145 = vpack.c.b16 %v135, %v130
    %v146 = vpack.c.b16 %v136, %v131
    %v147 = vpack.c.b16 %v137, %v132
    %v148 = vpack.c.b16 %v138, %v133
    %v149 = vpack.c.b16 %v139, %v139
    %v150 = vpack.c.b16 %v140, %v140
    %v151 = vpack.c.b16 %v141, %v141
    %v152 = vpack.c.b16 %v142, %v142
    %v153 = vpack.c.b16 %v143, %v143
    %v234 = vunpack.c.l.b16 %v44
    %v235 = vunpack.c.l.b16 %v45
    %v236 = vunpack.c.l.b16 %v46
    %v237 = vunpack.c.l.b16 %v47
    %v238 = vunpack.c.l.b16 %v48
    %v239 = vunpack.c.l.b16 %v49
    %v240 = vunpack.c.l.b16 %v50
    %v241 = vunpack.c.l.b16 %v51
    %v242 = vunpack.c.l.b16 %v52
    %v243 = vunpack.c.l.b16 %v53
    %v244 = vunpack.c.l.b16 %v54
    %v245 = vunpack.c.l.b16 %v55
    %v246 = vunpack.c.l.b16 %v56
    %v247 = vunpack.c.l.b16 %v57
    %v248 = vunpack.c.l.b16 %v58
    %v249 = vunpack.c.l.b16 %v59
    %v250 = vunpack.c.l.b16 %v60
    %v251 = vunpack.c.l.b16 %v61
    %v252 = vunpack.c.l.b16 %v62
    %v253 = vunpack.c.l.b16 %v63
    %v254 = vunpack.c.l.b16 %v64
    %v255 = vunpack.c.l.b16 %v65
    %v256 = vunpack.c.l.b16 %v66
    %v257 = vunpack.c.l.b16 %v67
    %v258 = vunpack.c.l.b16 %v68
    %v259 = vunpack.c.l.b16 %v69
    %v260 = vunpack.c.l.b16 %v70
    %v261 = vunpack.c.l.b16 %v71
    %v262 = vunpack.c.l.b16 %v72
    %v263 = vunpack.c.l.b16 %v73
    %v264 = vunpack.c.l.b16 %v74
    %v265 = vunpack.c.l.b16 %v75
    %v266 = vunpack.c.l.b16 %v76
    %v267 = vunpack.c.l.b16 %v77
    %v268 = vunpack.c.l.b16 %v78
    %v269 = vunpack.c.l.b16 %v79
    %v270 = vunpack.c.l.b16 %v80
    %v271 = vunpack.c.l.b16 %v81
    %v272 = vunpack.c.l.b16 %v82
    %v273 = vunpack.c.l.b16 %v83
    %v274 = vunpack.c.l.b16 %v84
    %v275 = vunpack.c.l.b16 %v85
    %v276 = vunpack.c.l.b16 %v86
    %v277 = vunpack.c.l.b16 %v87
    %v278 = vunpack.c.l.b16 %v88
    %v279 = vunpack.c.l.b16 %v89
    %v280 = vunpack.c.l.b16 %v90
    %v281 = vunpack.c.l.b16 %v91
    %v282 = vunpack.c.l.b16 %v92
    %v283 = vunpack.c.l.b16 %v93
    %v284 = vunpack.c.l.b16 %v94
    %v285 = vunpack.c.l.b16 %v95
    %v286 = vunpack.c.l.b16 %v96
    %v287 = vunpack.c.l.b16 %v97
    %v288 = vunpack.c.l.b16 %v98
    %v289 = vunpack.c.l.b16 %v99
    %v290 = vunpack.c.l.b16 %v100
    %v291 = vunpack.c.l.b16 %v101
    %v292 = vunpack.c.l.b16 %v102
    %v293 = vunpack.c.l.b16 %v103
    %v294 = vunpack.c.l.b16 %v104
    %v295 = vunpack.c.l.b16 %v105
    %v296 = vunpack.c.l.b16 %v106
    %v297 = vunpack.c.l.b16 %v107
    %v298 = vunpack.c.l.b16 %v108
    %v299 = vunpack.c.l.b16 %v109
    %v300 = vunpack.c.l.b16 %v110
    %v301 = vunpack.c.l.b16 %v111
    %v302 = vunpack.c.l.b16 %v112
    %v303 = vunpack.c.l.b16 %v113
    %v304 = vunpack.c.l.b16 %v114
    %v305 = vunpack.c.l.b16 %v115
    %v306 = vpack.c.b16 %v235, %v234
    %v307 = vpack.c.b16 %v237, %v236
    %v308 = vpack.c.b16 %v239, %v238
    %v309 = vpack.c.b16 %v241, %v240
    %v310 = vpack.c.b16 %v243, %v242
    %v311 = vpack.c.b16 %v245, %v244
    %v312 = vpack.c.b16 %v247, %v246
    %v313 = vpack.c.b16 %v249, %v248
    %v314 = vpack.c.b16 %v251, %v250
    %v315 = vpack.c.b16 %v253, %v252
    %v316 = vpack.c.b16 %v255, %v254
    %v317 = vpack.c.b16 %v257, %v256
    %v318 = vpack.c.b16 %v259, %v258
    %v319 = vpack.c.b16 %v261, %v260
    %v320 = vpack.c.b16 %v263, %v262
    %v321 = vpack.c.b16 %v265, %v264
    %v322 = vpack.c.b16 %v267, %v266
    %v323 = vpack.c.b16 %v269, %v268
    %v324 = vpack.c.b16 %v271, %v270
    %v325 = vpack.c.b16 %v273, %v272
    %v326 = vpack.c.b16 %v275, %v274
    %v327 = vpack.c.b16 %v277, %v276
    %v328 = vpack.c.b16 %v279, %v278
    %v329 = vpack.c.b16 %v281, %v280
    %v330 = vpack.c.b16 %v283, %v282
    %v331 = vpack.c.b16 %v285, %v284
    %v332 = vpack.c.b16 %v287, %v286
    %v333 = vpack.c.b16 %v289, %v288
    %v334 = vpack.c.b16 %v291, %v290
    %v335 = vpack.c.b16 %v293, %v292
    %v336 = vpack.c.b16 %v295, %v294
    %v337 = vpack.c.b16 %v297, %v296
    %v338 = vpack.c.b16 %v299, %v298
    %v339 = vpack.c.b16 %v301, %v300
    %v340 = vpack.c.b16 %v303, %v302
    %v341 = vpack.c.b16 %v305, %v304
    %vm378 = vcmask 523264
    %v380 = vsel %vm378, %v148, 0
    %v383 = vsel %vm378, %v153, 0
    %385 = vmatpush.bf16.msra.mxu0 %v313
    %386 = vmatpush.bf16.msra.mxu0 %v312
    %387 = vmatpush.bf16.msra.mxu0 %v311
    %388 = vmatpush.bf16.msra.mxu0 %v310
    %389 = vmatpush.bf16.msra.mxu0 %v309
    %390 = vmatpush.bf16.msra.mxu0 %v308
    %391 = vmatpush.bf16.msra.mxu0 %v307
    %392 = vmatpush.bf16.msra.mxu0 %v306
    %393 = vmatmul.bf16.gmra.mxu0 %v144
    %v394 = vpop.f32.mrf.mxu0
    %v395 = vadd.f32 %v118, %v394
    %v396 = vpop.f32.mrf.mxu0
    %v397 = vadd.f32 %v118, %v396
    %398 = vmatmul.bf16.gmra.mxu0 %v149
    %v399 = vpop.f32.mrf.mxu0
    %v400 = vadd.f32 %v118, %v399
    %v401 = vpop.f32.mrf.mxu0
    %402 = vdwg.mxu0
    %403 = vmatpush.bf16.msra.mxu0 %v321
    %404 = vmatpush.bf16.msra.mxu0 %v320
    %405 = vmatpush.bf16.msra.mxu0 %v319
    %406 = vmatpush.bf16.msra.mxu0 %v318
    %407 = vmatpush.bf16.msra.mxu0 %v317
    %408 = vmatpush.bf16.msra.mxu0 %v316
    %409 = vmatpush.bf16.msra.mxu0 %v315
    %410 = vmatpush.bf16.msra.mxu0 %v314
    %411 = vmatmul.bf16.gmra.mxu0 %v145
    %v412 = vpop.f32.mrf.mxu0
    %v413 = vadd.f32 %v395, %v412
    %v414 = vpop.f32.mrf.mxu0
    %v415 = vadd.f32 %v397, %v414
    %416 = vmatmul.bf16.gmra.mxu0 %v150
    %v417 = vpop.f32.mrf.mxu0
    %v418 = vadd.f32 %v400, %v417
    %v419 = vpop.f32.mrf.mxu0
    %420 = vdwg.mxu0
    %421 = vmatpush.bf16.msra.mxu0 %v329
    %422 = vmatpush.bf16.msra.mxu0 %v328
    %423 = vmatpush.bf16.msra.mxu0 %v327
    %424 = vmatpush.bf16.msra.mxu0 %v326
    %425 = vmatpush.bf16.msra.mxu0 %v325
    %426 = vmatpush.bf16.msra.mxu0 %v324
    %427 = vmatpush.bf16.msra.mxu0 %v323
    %428 = vmatpush.bf16.msra.mxu0 %v322
    %429 = vmatmul.bf16.gmra.mxu0 %v146
    %v430 = vpop.f32.mrf.mxu0
    %v431 = vadd.f32 %v413, %v430
    %v432 = vpop.f32.mrf.mxu0
    %v433 = vadd.f32 %v415, %v432
    %434 = vmatmul.bf16.gmra.mxu0 %v151
    %v435 = vpop.f32.mrf.mxu0
    %v436 = vadd.f32 %v418, %v435
    %v437 = vpop.f32.mrf.mxu0
    %438 = vdwg.mxu0
    %439 = vmatpush.bf16.msra.mxu0 %v337
    %440 = vmatpush.bf16.msra.mxu0 %v336
    %441 = vmatpush.bf16.msra.mxu0 %v335
    %442 = vmatpush.bf16.msra.mxu0 %v334
    %443 = vmatpush.bf16.msra.mxu0 %v333
    %444 = vmatpush.bf16.msra.mxu0 %v332
    %445 = vmatpush.bf16.msra.mxu0 %v331
    %446 = vmatpush.bf16.msra.mxu0 %v330
    %447 = vmatmul.bf16.gmra.mxu0 %v147
    %v448 = vpop.f32.mrf.mxu0
    %v449 = vadd.f32 %v431, %v448
    %v450 = vpop.f32.mrf.mxu0
    %v451 = vadd.f32 %v433, %v450
    %452 = vmatmul.bf16.gmra.mxu0 %v152
    %v453 = vpop.f32.mrf.mxu0
    %v454 = vadd.f32 %v436, %v453
    %v455 = vpop.f32.mrf.mxu0
    %456 = vdwg.mxu0
    %457 = vmatpush.bf16.msra.mxu0 0
    %458 = vmatpush.bf16.msra.mxu0 0
    %459 = vmatpush.bf16.msra.mxu0 0
    %460 = vmatpush.bf16.msra.mxu0 0
    %461 = vmatpush.bf16.msra.mxu0 %v341
    %462 = vmatpush.bf16.msra.mxu0 %v340
    %463 = vmatpush.bf16.msra.mxu0 %v339
    %464 = vmatpush.bf16.msra.mxu0 %v338
    %465 = vmatmul.bf16.gmra.mxu0 %v380
    %v466 = vpop.f32.mrf.mxu0
    %v467 = vadd.f32 %v449, %v466
    %v468 = vpop.f32.mrf.mxu0
    %v469 = vadd.f32 %v451, %v468
    %470 = vmatmul.bf16.gmra.mxu0 %v383
    %v471 = vpop.f32.mrf.mxu0
    %v472 = vadd.f32 %v454, %v471
    %v473 = vpop.f32.mrf.mxu0
    %474 = vdwg.mxu0
    %vm475 = vcmp.ge.f32.partialorder %v467, 0.0
    %vm476 = vcmp.ge.f32.partialorder %v469, 0.0
    %vm477 = vcmp.ge.f32.partialorder %v472, 0.0
    %v478 = vmul.f32 %v467, 0.22916667
    %v479 = vmul.f32 %v469, 0.22916667
    %v480 = vmul.f32 %v472, 0.22916667
    %v481 = vsel %vm475, %v467, %v478
    %v482 = vsel %vm476, %v469, %v479
    %v483 = vsel %vm477, %v472, %v480
    %vm484 = vcmp.ge.f32.partialorder %v481, 0.0
    %vm485 = vcmp.ge.f32.partialorder %v482, 0.0
    %vm486 = vcmp.ge.f32.partialorder %v483, 0.0
    %v487 = vmul.f32 %v481, 0.22916667
    %v488 = vmul.f32 %v482, 0.22916667
    %v489 = vmul.f32 %v483, 0.22916667
    %v490 = vsel %vm484, %v481, %v487
    %v491 = vsel %vm485, %v482, %v488
    %v492 = vsel %vm486, %v483, %v489
    %v493 = vpack.c.bf16 %v490, %v490
    %v494 = vld [vmem:[%s3] sm:$0xf]
    %v495 = vld [vmem:[%s3 + $0x4] sm:$0xf]
    %v496 = vld [vmem:[%s3 + $0x8] sm:$0xf]
    %v497 = vld [vmem:[%s3 + $0xc] sm:$0xf]
    %v498 = vld [vmem:[%s3 + $0x10] sm:$0xf]
    %v499 = vld [vmem:[%s3 + $0x14] sm:$0xf]
    %v500 = vld [vmem:[%s3 + $0x18] sm:$0xf]
    %v501 = vld [vmem:[%s3 + $0x1c] sm:$0xf]
    %v502 = vld [vmem:[%s3 + $0x20] sm:$0xf]
    %v503 = vld [vmem:[%s3 + $0x24] sm:$0xf]
    %v504 = vld [vmem:[%s3 + $0x28] sm:$0xf]
    %v505 = vld [vmem:[%s3 + $0x2c] sm:$0xf]
    %v506 = vld [vmem:[%s3 + $0x30] sm:$0xf]
    %v507 = vld [vmem:[%s3 + $0x34] sm:$0xf]
    %v508 = vld [vmem:[%s3 + $0x38] sm:$0xf]
    %v509 = vld [vmem:[%s3 + $0x3c] sm:$0xf]
    %s510 = scalar_lea.vmem %s3, 64
    %v511 = vld [vmem:[%s510] sm:$0xf]
    %v512 = vld [vmem:[%s510 + $0x4] sm:$0xf]
    %v513 = vld [vmem:[%s510 + $0x8] sm:$0xf]
    %v514 = vld [vmem:[%s510 + $0xc] sm:$0xf]
    %v515 = vld [vmem:[%s510 + $0x10] sm:$0xf]
    %v516 = vld [vmem:[%s510 + $0x14] sm:$0xf]
    %v517 = vld [vmem:[%s510 + $0x18] sm:$0xf]
    %v518 = vld [vmem:[%s510 + $0x1c] sm:$0xf]
    %v519 = vld [vmem:[%s510 + $0x20] sm:$0xf]
    %v520 = vld [vmem:[%s510 + $0x24] sm:$0xf]
    %v521 = vld [vmem:[%s510 + $0x28] sm:$0xf]
    %v522 = vld [vmem:[%s510 + $0x2c] sm:$0xf]
    %v523 = vld [vmem:[%s510 + $0x30] sm:$0xf]
    %v524 = vld [vmem:[%s510 + $0x34] sm:$0xf]
    %v525 = vld [vmem:[%s510 + $0x38] sm:$0xf]
    %v526 = vld [vmem:[%s510 + $0x3c] sm:$0xf]
    %v528 = vrot.slane %v493, 1
    %v546 = vunpack.c.l.b16 %v511
    %v547 = vunpack.c.l.b16 %v512
    %v548 = vunpack.c.l.b16 %v513
    %v549 = vunpack.c.l.b16 %v514
    %v550 = vunpack.c.l.b16 %v515
    %v551 = vunpack.c.l.b16 %v516
    %v552 = vunpack.c.l.b16 %v517
    %v553 = vunpack.c.l.b16 %v518
    %v554 = vunpack.c.l.b16 %v519
    %v555 = vunpack.c.l.b16 %v520
    %v556 = vunpack.c.l.b16 %v521
    %v557 = vunpack.c.l.b16 %v522
    %v558 = vunpack.c.l.b16 %v523
    %v559 = vunpack.c.l.b16 %v524
    %v560 = vunpack.c.l.b16 %v525
    %v561 = vunpack.c.l.b16 %v526
    %v562 = vpack.c.b16 %v547, %v546
    %v563 = vpack.c.b16 %v549, %v548
    %v564 = vpack.c.b16 %v551, %v550
    %v565 = vpack.c.b16 %v553, %v552
    %v566 = vpack.c.b16 %v555, %v554
    %v567 = vpack.c.b16 %v557, %v556
    %v568 = vpack.c.b16 %v559, %v558
    %v569 = vpack.c.b16 %v561, %v560
    %578 = vmatpush.bf16.msra.mxu0 %v569
    %579 = vmatpush.bf16.msra.mxu0 %v568
    %580 = vmatpush.bf16.msra.mxu0 %v567
    %581 = vmatpush.bf16.msra.mxu0 %v566
    %582 = vmatpush.bf16.msra.mxu0 %v565
    %583 = vmatpush.bf16.msra.mxu0 %v564
    %584 = vmatpush.bf16.msra.mxu0 %v563
    %585 = vmatpush.bf16.msra.mxu0 %v562
    %586 = vmatmul.bf16.gmra.mxu0 %v528
    %v587 = vpop.f32.mrf.mxu0
    %v588 = vadd.f32 0.0, %v587
    %v589 = vpop.f32.mrf.mxu0
    %590 = vdwg.mxu0
    %v607 = vunpack.c.l.b16 %v494
    %v608 = vunpack.c.l.b16 %v495
    %v609 = vunpack.c.l.b16 %v496
    %v610 = vunpack.c.l.b16 %v497
    %v611 = vunpack.c.l.b16 %v498
    %v612 = vunpack.c.l.b16 %v499
    %v613 = vunpack.c.l.b16 %v500
    %v614 = vunpack.c.l.b16 %v501
    %v615 = vunpack.c.l.b16 %v502
    %v616 = vunpack.c.l.b16 %v503
    %v617 = vunpack.c.l.b16 %v504
    %v618 = vunpack.c.l.b16 %v505
    %v619 = vunpack.c.l.b16 %v506
    %v620 = vunpack.c.l.b16 %v507
    %v621 = vunpack.c.l.b16 %v508
    %v622 = vunpack.c.l.b16 %v509
    %v623 = vpack.c.b16 %v608, %v607
    %v624 = vpack.c.b16 %v610, %v609
    %v625 = vpack.c.b16 %v612, %v611
    %v626 = vpack.c.b16 %v614, %v613
    %v627 = vpack.c.b16 %v616, %v615
    %v628 = vpack.c.b16 %v618, %v617
    %v629 = vpack.c.b16 %v620, %v619
    %v630 = vpack.c.b16 %v622, %v621
    %639 = vmatpush.bf16.msra.mxu0 %v630
    %640 = vmatpush.bf16.msra.mxu0 %v629
    %641 = vmatpush.bf16.msra.mxu0 %v628
    %642 = vmatpush.bf16.msra.mxu0 %v627
    %643 = vmatpush.bf16.msra.mxu0 %v626
    %644 = vmatpush.bf16.msra.mxu0 %v625
    %645 = vmatpush.bf16.msra.mxu0 %v624
    %646 = vmatpush.bf16.msra.mxu0 %v623
    %647 = vmatmul.bf16.gmra.mxu0 %v493
    %v648 = vpop.f32.mrf.mxu0
    %v649 = vadd.f32 %v588, %v648
    %v650 = vpop.f32.mrf.mxu0
    %651 = vdwg.mxu0
    %s652 = scalar_lea.vmem %s3, 128
    %v653 = vld [vmem:[%s652] sm:$0xf]
    %v654 = vld [vmem:[%s652 + $0x4] sm:$0xf]
    %v655 = vld [vmem:[%s652 + $0x8] sm:$0xf]
    %v656 = vld [vmem:[%s652 + $0xc] sm:$0xf]
    %v657 = vld [vmem:[%s652 + $0x10] sm:$0xf]
    %v658 = vld [vmem:[%s652 + $0x14] sm:$0xf]
    %v659 = vld [vmem:[%s652 + $0x18] sm:$0xf]
    %v660 = vld [vmem:[%s652 + $0x1c] sm:$0xf]
    %v661 = vld [vmem:[%s652 + $0x20] sm:$0xf]
    %v662 = vld [vmem:[%s652 + $0x24] sm:$0xf]
    %v663 = vld [vmem:[%s652 + $0x28] sm:$0xf]
    %v664 = vld [vmem:[%s652 + $0x2c] sm:$0xf]
    %v665 = vld [vmem:[%s652 + $0x30] sm:$0xf]
    %v666 = vld [vmem:[%s652 + $0x34] sm:$0xf]
    %v667 = vld [vmem:[%s652 + $0x38] sm:$0xf]
    %v668 = vld [vmem:[%s652 + $0x3c] sm:$0xf]
    %v669 = vrot.slane %v493, 2
    %v687 = vunpack.c.l.b16 %v653
    %v688 = vunpack.c.l.b16 %v654
    %v689 = vunpack.c.l.b16 %v655
    %v690 = vunpack.c.l.b16 %v656
    %v691 = vunpack.c.l.b16 %v657
    %v692 = vunpack.c.l.b16 %v658
    %v693 = vunpack.c.l.b16 %v659
    %v694 = vunpack.c.l.b16 %v660
    %v695 = vunpack.c.l.b16 %v661
    %v696 = vunpack.c.l.b16 %v662
    %v697 = vunpack.c.l.b16 %v663
    %v698 = vunpack.c.l.b16 %v664
    %v699 = vunpack.c.l.b16 %v665
    %v700 = vunpack.c.l.b16 %v666
    %v701 = vunpack.c.l.b16 %v667
    %v702 = vunpack.c.l.b16 %v668
    %v703 = vpack.c.b16 %v688, %v687
    %v704 = vpack.c.b16 %v690, %v689
    %v705 = vpack.c.b16 %v692, %v691
    %v706 = vpack.c.b16 %v694, %v693
    %v707 = vpack.c.b16 %v696, %v695
    %v708 = vpack.c.b16 %v698, %v697
    %v709 = vpack.c.b16 %v700, %v699
    %v710 = vpack.c.b16 %v702, %v701
    %719 = vmatpush.bf16.msra.mxu0 %v710
    %720 = vmatpush.bf16.msra.mxu0 %v709
    %721 = vmatpush.bf16.msra.mxu0 %v708
    %722 = vmatpush.bf16.msra.mxu0 %v707
    %723 = vmatpush.bf16.msra.mxu0 %v706
    %724 = vmatpush.bf16.msra.mxu0 %v705
    %725 = vmatpush.bf16.msra.mxu0 %v704
    %726 = vmatpush.bf16.msra.mxu0 %v703
    %727 = vmatmul.bf16.gmra.mxu0 %v669
    %v728 = vpop.f32.mrf.mxu0
    %v729 = vadd.f32 0.0, %v728
    %v730 = vpop.f32.mrf.mxu0
    %731 = vdwg.mxu0
    %v732 = vadd.f32 %v649, %v729
    %s733 = scalar_lea.vmem %s3, 192
    %v734 = vld [vmem:[%s733] sm:$0xf]
    %v735 = vld [vmem:[%s733 + $0x4] sm:$0xf]
    %v736 = vld [vmem:[%s733 + $0x8] sm:$0xf]
    %v737 = vld [vmem:[%s733 + $0xc] sm:$0xf]
    %v738 = vld [vmem:[%s733 + $0x10] sm:$0xf]
    %v739 = vld [vmem:[%s733 + $0x14] sm:$0xf]
    %v740 = vld [vmem:[%s733 + $0x18] sm:$0xf]
    %v741 = vld [vmem:[%s733 + $0x1c] sm:$0xf]
    %v742 = vld [vmem:[%s733 + $0x20] sm:$0xf]
    %v743 = vld [vmem:[%s733 + $0x24] sm:$0xf]
    %v744 = vld [vmem:[%s733 + $0x28] sm:$0xf]
    %v745 = vld [vmem:[%s733 + $0x2c] sm:$0xf]
    %v746 = vld [vmem:[%s733 + $0x30] sm:$0xf]
    %v747 = vld [vmem:[%s733 + $0x34] sm:$0xf]
    %v748 = vld [vmem:[%s733 + $0x38] sm:$0xf]
    %v749 = vld [vmem:[%s733 + $0x3c] sm:$0xf]
    %v750 = vrot.slane %v493, 3
    %v768 = vunpack.c.l.b16 %v734
    %v769 = vunpack.c.l.b16 %v735
    %v770 = vunpack.c.l.b16 %v736
    %v771 = vunpack.c.l.b16 %v737
    %v772 = vunpack.c.l.b16 %v738
    %v773 = vunpack.c.l.b16 %v739
    %v774 = vunpack.c.l.b16 %v740
    %v775 = vunpack.c.l.b16 %v741
    %v776 = vunpack.c.l.b16 %v742
    %v777 = vunpack.c.l.b16 %v743
    %v778 = vunpack.c.l.b16 %v744
    %v779 = vunpack.c.l.b16 %v745
    %v780 = vunpack.c.l.b16 %v746
    %v781 = vunpack.c.l.b16 %v747
    %v782 = vunpack.c.l.b16 %v748
    %v783 = vunpack.c.l.b16 %v749
    %v784 = vpack.c.b16 %v769, %v768
    %v785 = vpack.c.b16 %v771, %v770
    %v786 = vpack.c.b16 %v773, %v772
    %v787 = vpack.c.b16 %v775, %v774
    %v788 = vpack.c.b16 %v777, %v776
    %v789 = vpack.c.b16 %v779, %v778
    %v790 = vpack.c.b16 %v781, %v780
    %v791 = vpack.c.b16 %v783, %v782
    %800 = vmatpush.bf16.msra.mxu0 %v791
    %801 = vmatpush.bf16.msra.mxu0 %v790
    %802 = vmatpush.bf16.msra.mxu0 %v789
    %803 = vmatpush.bf16.msra.mxu0 %v788
    %804 = vmatpush.bf16.msra.mxu0 %v787
    %805 = vmatpush.bf16.msra.mxu0 %v786
    %806 = vmatpush.bf16.msra.mxu0 %v785
    %807 = vmatpush.bf16.msra.mxu0 %v784
    %808 = vmatmul.bf16.gmra.mxu0 %v750
    %v809 = vpop.f32.mrf.mxu0
    %v810 = vadd.f32 0.0, %v809
    %v811 = vpop.f32.mrf.mxu0
    %812 = vdwg.mxu0
    %v813 = vadd.f32 %v732, %v810
    %v814 = vpack.c.bf16 %v491, %v491
    %s815 = scalar_lea.vmem %s3, 256
    %v816 = vld [vmem:[%s815] sm:$0xf]
    %v817 = vld [vmem:[%s815 + $0x4] sm:$0xf]
    %v818 = vld [vmem:[%s815 + $0x8] sm:$0xf]
    %v819 = vld [vmem:[%s815 + $0xc] sm:$0xf]
    %v820 = vld [vmem:[%s815 + $0x10] sm:$0xf]
    %v821 = vld [vmem:[%s815 + $0x14] sm:$0xf]
    %v822 = vld [vmem:[%s815 + $0x18] sm:$0xf]
    %v823 = vld [vmem:[%s815 + $0x1c] sm:$0xf]
    %v824 = vld [vmem:[%s815 + $0x20] sm:$0xf]
    %v825 = vld [vmem:[%s815 + $0x24] sm:$0xf]
    %v826 = vld [vmem:[%s815 + $0x28] sm:$0xf]
    %v827 = vld [vmem:[%s815 + $0x2c] sm:$0xf]
    %v828 = vld [vmem:[%s815 + $0x30] sm:$0xf]
    %v829 = vld [vmem:[%s815 + $0x34] sm:$0xf]
    %v830 = vld [vmem:[%s815 + $0x38] sm:$0xf]
    %v831 = vld [vmem:[%s815 + $0x3c] sm:$0xf]
    %v848 = vunpack.c.l.b16 %v816
    %v849 = vunpack.c.l.b16 %v817
    %v850 = vunpack.c.l.b16 %v818
    %v851 = vunpack.c.l.b16 %v819
    %v852 = vunpack.c.l.b16 %v820
    %v853 = vunpack.c.l.b16 %v821
    %v854 = vunpack.c.l.b16 %v822
    %v855 = vunpack.c.l.b16 %v823
    %v856 = vunpack.c.l.b16 %v824
    %v857 = vunpack.c.l.b16 %v825
    %v858 = vunpack.c.l.b16 %v826
    %v859 = vunpack.c.l.b16 %v827
    %v860 = vunpack.c.l.b16 %v828
    %v861 = vunpack.c.l.b16 %v829
    %v862 = vunpack.c.l.b16 %v830
    %v863 = vunpack.c.l.b16 %v831
    %v864 = vpack.c.b16 %v849, %v848
    %v865 = vpack.c.b16 %v851, %v850
    %v866 = vpack.c.b16 %v853, %v852
    %v867 = vpack.c.b16 %v855, %v854
    %v868 = vpack.c.b16 %v857, %v856
    %v869 = vpack.c.b16 %v859, %v858
    %v870 = vpack.c.b16 %v861, %v860
    %v871 = vpack.c.b16 %v863, %v862
    %880 = vmatpush.bf16.msra.mxu0 %v871
    %881 = vmatpush.bf16.msra.mxu0 %v870
    %882 = vmatpush.bf16.msra.mxu0 %v869
    %883 = vmatpush.bf16.msra.mxu0 %v868
    %884 = vmatpush.bf16.msra.mxu0 %v867
    %885 = vmatpush.bf16.msra.mxu0 %v866
    %886 = vmatpush.bf16.msra.mxu0 %v865
    %887 = vmatpush.bf16.msra.mxu0 %v864
    %888 = vmatmul.bf16.gmra.mxu0 %v814
    %v889 = vpop.f32.mrf.mxu0
    %v890 = vadd.f32 0.0, %v889
    %v891 = vpop.f32.mrf.mxu0
    %892 = vdwg.mxu0
    %v893 = vadd.f32 %v813, %v890
    %s894 = scalar_lea.vmem %s3, 320
    %v895 = vld [vmem:[%s894] sm:$0xf]
    %v896 = vld [vmem:[%s894 + $0x4] sm:$0xf]
    %v897 = vld [vmem:[%s894 + $0x8] sm:$0xf]
    %v898 = vld [vmem:[%s894 + $0xc] sm:$0xf]
    %v899 = vld [vmem:[%s894 + $0x10] sm:$0xf]
    %v900 = vld [vmem:[%s894 + $0x14] sm:$0xf]
    %v901 = vld [vmem:[%s894 + $0x18] sm:$0xf]
    %v902 = vld [vmem:[%s894 + $0x1c] sm:$0xf]
    %v903 = vld [vmem:[%s894 + $0x20] sm:$0xf]
    %v904 = vld [vmem:[%s894 + $0x24] sm:$0xf]
    %v905 = vld [vmem:[%s894 + $0x28] sm:$0xf]
    %v906 = vld [vmem:[%s894 + $0x2c] sm:$0xf]
    %v907 = vld [vmem:[%s894 + $0x30] sm:$0xf]
    %v908 = vld [vmem:[%s894 + $0x34] sm:$0xf]
    %v909 = vld [vmem:[%s894 + $0x38] sm:$0xf]
    %v910 = vld [vmem:[%s894 + $0x3c] sm:$0xf]
    %v912 = vrot.slane %v814, 1
    %v930 = vunpack.c.l.b16 %v895
    %v931 = vunpack.c.l.b16 %v896
    %v932 = vunpack.c.l.b16 %v897
    %v933 = vunpack.c.l.b16 %v898
    %v934 = vunpack.c.l.b16 %v899
    %v935 = vunpack.c.l.b16 %v900
    %v936 = vunpack.c.l.b16 %v901
    %v937 = vunpack.c.l.b16 %v902
    %v938 = vunpack.c.l.b16 %v903
    %v939 = vunpack.c.l.b16 %v904
    %v940 = vunpack.c.l.b16 %v905
    %v941 = vunpack.c.l.b16 %v906
    %v942 = vunpack.c.l.b16 %v907
    %v943 = vunpack.c.l.b16 %v908
    %v944 = vunpack.c.l.b16 %v909
    %v945 = vunpack.c.l.b16 %v910
    %v946 = vpack.c.b16 %v931, %v930
    %v947 = vpack.c.b16 %v933, %v932
    %v948 = vpack.c.b16 %v935, %v934
    %v949 = vpack.c.b16 %v937, %v936
    %v950 = vpack.c.b16 %v939, %v938
    %v951 = vpack.c.b16 %v941, %v940
    %v952 = vpack.c.b16 %v943, %v942
    %v953 = vpack.c.b16 %v945, %v944
    %962 = vmatpush.bf16.msra.mxu0 %v953
    %963 = vmatpush.bf16.msra.mxu0 %v952
    %964 = vmatpush.bf16.msra.mxu0 %v951
    %965 = vmatpush.bf16.msra.mxu0 %v950
    %966 = vmatpush.bf16.msra.mxu0 %v949
    %967 = vmatpush.bf16.msra.mxu0 %v948
    %968 = vmatpush.bf16.msra.mxu0 %v947
    %969 = vmatpush.bf16.msra.mxu0 %v946
    %970 = vmatmul.bf16.gmra.mxu0 %v912
    %v971 = vpop.f32.mrf.mxu0
    %v972 = vadd.f32 0.0, %v971
    %v973 = vpop.f32.mrf.mxu0
    %974 = vdwg.mxu0
    %v975 = vadd.f32 %v893, %v972
    %s976 = scalar_lea.vmem %s3, 384
    %v977 = vld [vmem:[%s976] sm:$0xf]
    %v978 = vld [vmem:[%s976 + $0x4] sm:$0xf]
    %v979 = vld [vmem:[%s976 + $0x8] sm:$0xf]
    %v980 = vld [vmem:[%s976 + $0xc] sm:$0xf]
    %v981 = vld [vmem:[%s976 + $0x10] sm:$0xf]
    %v982 = vld [vmem:[%s976 + $0x14] sm:$0xf]
    %v983 = vld [vmem:[%s976 + $0x18] sm:$0xf]
    %v984 = vld [vmem:[%s976 + $0x1c] sm:$0xf]
    %v985 = vld [vmem:[%s976 + $0x20] sm:$0xf]
    %v986 = vld [vmem:[%s976 + $0x24] sm:$0xf]
    %v987 = vld [vmem:[%s976 + $0x28] sm:$0xf]
    %v988 = vld [vmem:[%s976 + $0x2c] sm:$0xf]
    %v989 = vld [vmem:[%s976 + $0x30] sm:$0xf]
    %v990 = vld [vmem:[%s976 + $0x34] sm:$0xf]
    %v991 = vld [vmem:[%s976 + $0x38] sm:$0xf]
    %v992 = vld [vmem:[%s976 + $0x3c] sm:$0xf]
    %v993 = vrot.slane %v814, 2
    %v1011 = vunpack.c.l.b16 %v977
    %v1012 = vunpack.c.l.b16 %v978
    %v1013 = vunpack.c.l.b16 %v979
    %v1014 = vunpack.c.l.b16 %v980
    %v1015 = vunpack.c.l.b16 %v981
    %v1016 = vunpack.c.l.b16 %v982
    %v1017 = vunpack.c.l.b16 %v983
    %v1018 = vunpack.c.l.b16 %v984
    %v1019 = vunpack.c.l.b16 %v985
    %v1020 = vunpack.c.l.b16 %v986
    %v1021 = vunpack.c.l.b16 %v987
    %v1022 = vunpack.c.l.b16 %v988
    %v1023 = vunpack.c.l.b16 %v989
    %v1024 = vunpack.c.l.b16 %v990
    %v1025 = vunpack.c.l.b16 %v991
    %v1026 = vunpack.c.l.b16 %v992
    %v1027 = vpack.c.b16 %v1012, %v1011
    %v1028 = vpack.c.b16 %v1014, %v1013
    %v1029 = vpack.c.b16 %v1016, %v1015
    %v1030 = vpack.c.b16 %v1018, %v1017
    %v1031 = vpack.c.b16 %v1020, %v1019
    %v1032 = vpack.c.b16 %v1022, %v1021
    %v1033 = vpack.c.b16 %v1024, %v1023
    %v1034 = vpack.c.b16 %v1026, %v1025
    %1043 = vmatpush.bf16.msra.mxu0 %v1034
    %1044 = vmatpush.bf16.msra.mxu0 %v1033
    %1045 = vmatpush.bf16.msra.mxu0 %v1032
    %1046 = vmatpush.bf16.msra.mxu0 %v1031
    %1047 = vmatpush.bf16.msra.mxu0 %v1030
    %1048 = vmatpush.bf16.msra.mxu0 %v1029
    %1049 = vmatpush.bf16.msra.mxu0 %v1028
    %1050 = vmatpush.bf16.msra.mxu0 %v1027
    %1051 = vmatmul.bf16.gmra.mxu0 %v993
    %v1052 = vpop.f32.mrf.mxu0
    %v1053 = vadd.f32 0.0, %v1052
    %v1054 = vpop.f32.mrf.mxu0
    %1055 = vdwg.mxu0
    %v1056 = vadd.f32 %v975, %v1053
    %s1057 = scalar_lea.vmem %s3, 448
    %v1058 = vld [vmem:[%s1057] sm:$0xf]
    %v1059 = vld [vmem:[%s1057 + $0x4] sm:$0xf]
    %v1060 = vld [vmem:[%s1057 + $0x8] sm:$0xf]
    %v1061 = vld [vmem:[%s1057 + $0xc] sm:$0xf]
    %v1062 = vld [vmem:[%s1057 + $0x10] sm:$0xf]
    %v1063 = vld [vmem:[%s1057 + $0x14] sm:$0xf]
    %v1064 = vld [vmem:[%s1057 + $0x18] sm:$0xf]
    %v1065 = vld [vmem:[%s1057 + $0x1c] sm:$0xf]
    %v1066 = vld [vmem:[%s1057 + $0x20] sm:$0xf]
    %v1067 = vld [vmem:[%s1057 + $0x24] sm:$0xf]
    %v1068 = vld [vmem:[%s1057 + $0x28] sm:$0xf]
    %v1069 = vld [vmem:[%s1057 + $0x2c] sm:$0xf]
    %v1070 = vld [vmem:[%s1057 + $0x30] sm:$0xf]
    %v1071 = vld [vmem:[%s1057 + $0x34] sm:$0xf]
    %v1072 = vld [vmem:[%s1057 + $0x38] sm:$0xf]
    %v1073 = vld [vmem:[%s1057 + $0x3c] sm:$0xf]
    %v1074 = vrot.slane %v814, 3
    %v1092 = vunpack.c.l.b16 %v1058
    %v1093 = vunpack.c.l.b16 %v1059
    %v1094 = vunpack.c.l.b16 %v1060
    %v1095 = vunpack.c.l.b16 %v1061
    %v1096 = vunpack.c.l.b16 %v1062
    %v1097 = vunpack.c.l.b16 %v1063
    %v1098 = vunpack.c.l.b16 %v1064
    %v1099 = vunpack.c.l.b16 %v1065
    %v1100 = vunpack.c.l.b16 %v1066
    %v1101 = vunpack.c.l.b16 %v1067
    %v1102 = vunpack.c.l.b16 %v1068
    %v1103 = vunpack.c.l.b16 %v1069
    %v1104 = vunpack.c.l.b16 %v1070
    %v1105 = vunpack.c.l.b16 %v1071
    %v1106 = vunpack.c.l.b16 %v1072
    %v1107 = vunpack.c.l.b16 %v1073
    %v1108 = vpack.c.b16 %v1093, %v1092
    %v1109 = vpack.c.b16 %v1095, %v1094
    %v1110 = vpack.c.b16 %v1097, %v1096
    %v1111 = vpack.c.b16 %v1099, %v1098
    %v1112 = vpack.c.b16 %v1101, %v1100
    %v1113 = vpack.c.b16 %v1103, %v1102
    %v1114 = vpack.c.b16 %v1105, %v1104
    %v1115 = vpack.c.b16 %v1107, %v1106
    %1124 = vmatpush.bf16.msra.mxu0 %v1115
    %1125 = vmatpush.bf16.msra.mxu0 %v1114
    %1126 = vmatpush.bf16.msra.mxu0 %v1113
    %1127 = vmatpush.bf16.msra.mxu0 %v1112
    %1128 = vmatpush.bf16.msra.mxu0 %v1111
    %1129 = vmatpush.bf16.msra.mxu0 %v1110
    %1130 = vmatpush.bf16.msra.mxu0 %v1109
    %1131 = vmatpush.bf16.msra.mxu0 %v1108
    %1132 = vmatmul.bf16.gmra.mxu0 %v1074
    %v1133 = vpop.f32.mrf.mxu0
    %v1134 = vadd.f32 0.0, %v1133
    %v1135 = vpop.f32.mrf.mxu0
    %1136 = vdwg.mxu0
    %v1137 = vadd.f32 %v1056, %v1134
    %v1138 = vpack.c.bf16 %v492, %v492
    %s1139 = scalar_lea.vmem %s3, 512
    %v1140 = vld [vmem:[%s1139] sm:$0xf]
    %v1141 = vld [vmem:[%s1139 + $0x4] sm:$0xf]
    %v1142 = vld [vmem:[%s1139 + $0x8] sm:$0xf]
    %v1143 = vld [vmem:[%s1139 + $0xc] sm:$0xf]
    %v1144 = vld [vmem:[%s1139 + $0x10] sm:$0xf]
    %v1145 = vld [vmem:[%s1139 + $0x14] sm:$0xf]
    %v1146 = vld [vmem:[%s1139 + $0x18] sm:$0xf]
    %v1147 = vld [vmem:[%s1139 + $0x1c] sm:$0xf]
    %v1148 = vld [vmem:[%s1139 + $0x20] sm:$0xf]
    %v1149 = vld [vmem:[%s1139 + $0x24] sm:$0xf]
    %v1150 = vld [vmem:[%s1139 + $0x28] sm:$0xf]
    %v1151 = vld [vmem:[%s1139 + $0x2c] sm:$0xf]
    %v1152 = vld [vmem:[%s1139 + $0x30] sm:$0xf]
    %v1153 = vld [vmem:[%s1139 + $0x34] sm:$0xf]
    %v1154 = vld [vmem:[%s1139 + $0x38] sm:$0xf]
    %v1155 = vld [vmem:[%s1139 + $0x3c] sm:$0xf]
    %v1172 = vunpack.c.l.b16 %v1140
    %v1173 = vunpack.c.l.b16 %v1141
    %v1174 = vunpack.c.l.b16 %v1142
    %v1175 = vunpack.c.l.b16 %v1143
    %v1176 = vunpack.c.l.b16 %v1144
    %v1177 = vunpack.c.l.b16 %v1145
    %v1178 = vunpack.c.l.b16 %v1146
    %v1179 = vunpack.c.l.b16 %v1147
    %v1180 = vunpack.c.l.b16 %v1148
    %v1181 = vunpack.c.l.b16 %v1149
    %v1182 = vunpack.c.l.b16 %v1150
    %v1183 = vunpack.c.l.b16 %v1151
    %v1184 = vunpack.c.l.b16 %v1152
    %v1185 = vunpack.c.l.b16 %v1153
    %v1186 = vunpack.c.l.b16 %v1154
    %v1187 = vunpack.c.l.b16 %v1155
    %v1188 = vpack.c.b16 %v1173, %v1172
    %v1189 = vpack.c.b16 %v1175, %v1174
    %v1190 = vpack.c.b16 %v1177, %v1176
    %v1191 = vpack.c.b16 %v1179, %v1178
    %v1192 = vpack.c.b16 %v1181, %v1180
    %v1193 = vpack.c.b16 %v1183, %v1182
    %v1194 = vpack.c.b16 %v1185, %v1184
    %v1195 = vpack.c.b16 %v1187, %v1186
    %1204 = vmatpush.bf16.msra.mxu0 %v1195
    %1205 = vmatpush.bf16.msra.mxu0 %v1194
    %1206 = vmatpush.bf16.msra.mxu0 %v1193
    %1207 = vmatpush.bf16.msra.mxu0 %v1192
    %1208 = vmatpush.bf16.msra.mxu0 %v1191
    %1209 = vmatpush.bf16.msra.mxu0 %v1190
    %1210 = vmatpush.bf16.msra.mxu0 %v1189
    %1211 = vmatpush.bf16.msra.mxu0 %v1188
    %1212 = vmatmul.bf16.gmra.mxu0 %v1138
    %v1213 = vpop.f32.mrf.mxu0
    %v1214 = vadd.f32 0.0, %v1213
    %v1215 = vpop.f32.mrf.mxu0
    %1216 = vdwg.mxu0
    %v1217 = vadd.f32 %v1137, %v1214
    %v1218 = vld [vmem:[%s4] sm:$0x1]
    %v1220 = vperm.slane %v1218, 0
    %v1222 = vadd.f32 %v1217, %v1220
    %vm1223 = vcmask 9216
    %1224 = vst.msk [vmem:[#allocation2] sm:$0x3] %vm1223, %v1222
    %1226 = vrot.lane.b32.xlu0 %v1222, 126
    %v1227 = vpop.permute.xlu0 %1226
    %1229 = vst.msk [vmem:[#allocation4] sm:$0x3] %vm1223, %v1227
    %v1230 = vmul.f32 %v1222, 0.5
    %v1231 = vmul.f32 %v1230, 1.442695
    %v1232 = vpow.pop %v1231
    %v1233 = vld [vmem:[%s5] sm:$0x3]
    %1235 = vrot.lane.b32.xlu0 %v1233, 2
    %v1236 = vpop.permute.xlu0 %1235
    %v1238 = vmul.f32 %v1232, %v1236
    %1240 = vrot.lane.b32.xlu0 %v1238, 126
    %v1241 = vpop.permute.xlu0 %1240
    %v1243 = vadd.f32 %v1222, %v1241
    %vm1244 = vcmp.ge.f32.partialorder %v1243, 0.0
    %v1245 = vmul.f32 %v1243, 0.22916667
    %v1246 = vsel %vm1244, %v1243, %v1245
    %v1247 = vpack.c.bf16 %v1246, %v1246
    %v1248 = vld [vmem:[%s6] sm:$0xff]
    %v1249 = vld [vmem:[%s6 + $0x8] sm:$0x1]
    %v1250 = vld [vmem:[%s7] sm:$0xff]
    %v1251 = vld [vmem:[%s7 + $0x8] sm:$0x1]
    %v1254 = vperm.slane %v1250, 0
    %v1255 = vperm.slane %v1250, 1
    %v1256 = vperm.slane %v1250, 2
    %v1257 = vperm.slane %v1250, 3
    %v1258 = vperm.slane %v1250, 4
    %v1259 = vperm.slane %v1250, 5
    %v1260 = vperm.slane %v1250, 6
    %v1261 = vperm.slane %v1250, 7
    %v1262 = vperm.slane %v1251, 0
    %1273 = vst [vmem:[#allocation1] ss:$9 sm:$0xff] %v1248
    %v1274 = vld [vmem:[#allocation1] sm:$0xff]
    %v1275 = vld [vmem:[#allocation1 + $0x9] sm:$0xff]
    %v1276 = vld [vmem:[#allocation1 + $0x12] sm:$0xff]
    %v1277 = vld [vmem:[#allocation1 + $0x1b] sm:$0xff]
    %v1278 = vld [vmem:[#allocation1 + $0x24] sm:$0xff]
    %v1279 = vld [vmem:[#allocation1 + $0x2d] sm:$0xff]
    %v1280 = vld [vmem:[#allocation1 + $0x36] sm:$0xff]
    %v1281 = vld [vmem:[#allocation1 + $0x3f] sm:$0xff]
    %1283 = vst [vmem:[#allocation1] ss:$9 sm:$0xff] %v1249
    %v1284 = vld [vmem:[#allocation1] sm:$0xff]
    %vm1285 = vcmask 15360
    %v1287 = vsel %vm1285, %v1247, 0
    %vm1289 = vcmask 1040384
    %v1290 = vsel %vm1289, %v1274, 0
    %v1292 = vsel %vm1289, %v1275, 0
    %v1294 = vsel %vm1289, %v1276, 0
    %v1296 = vsel %vm1289, %v1277, 0
    %v1298 = vsel %vm1289, %v1278, 0
    %v1300 = vsel %vm1289, %v1279, 0
    %v1302 = vsel %vm1289, %v1280, 0
    %v1304 = vsel %vm1289, %v1281, 0
    %v1306 = vsel %vm1289, %v1284, 0
    %1308 = vmatpush.bf16.msra.mxu0 0
    %1309 = vmatpush.bf16.msra.mxu0 0
    %1310 = vmatpush.bf16.msra.mxu0 0
    %1311 = vmatpush.bf16.msra.mxu0 0
    %1312 = vmatpush.bf16.msra.mxu0 0
    %1313 = vmatpush.bf16.msra.mxu0 0
    %1314 = vmatpush.bf16.msra.mxu0 0
    %1315 = vmatpush.bf16.msra.mxu0 %v1290
    %1316 = vmatmul.bf16.gmra.mxu0 %v1287
    %v1317 = vpop.f32.mrf.mxu0
    %v1318 = vadd.f32 %v1254, %v1317
    %v1319 = vpop.f32.mrf.mxu0
    %1320 = vdwg.mxu0
    %1321 = vmatpush.bf16.msra.mxu0 0
    %1322 = vmatpush.bf16.msra.mxu0 0
    %1323 = vmatpush.bf16.msra.mxu0 0
    %1324 = vmatpush.bf16.msra.mxu0 0
    %1325 = vmatpush.bf16.msra.mxu0 0
    %1326 = vmatpush.bf16.msra.mxu0 0
    %1327 = vmatpush.bf16.msra.mxu0 0
    %1328 = vmatpush.bf16.msra.mxu0 %v1292
    %1329 = vmatmul.bf16.gmra.mxu0 %v1287
    %v1330 = vpop.f32.mrf.mxu0
    %v1331 = vadd.f32 %v1255, %v1330
    %v1332 = vpop.f32.mrf.mxu0
    %1333 = vdwg.mxu0
    %1334 = vmatpush.bf16.msra.mxu0 0
    %1335 = vmatpush.bf16.msra.mxu0 0
    %1336 = vmatpush.bf16.msra.mxu0 0
    %1337 = vmatpush.bf16.msra.mxu0 0
    %1338 = vmatpush.bf16.msra.mxu0 0
    %1339 = vmatpush.bf16.msra.mxu0 0
    %1340 = vmatpush.bf16.msra.mxu0 0
    %1341 = vmatpush.bf16.msra.mxu0 %v1294
    %1342 = vmatmul.bf16.gmra.mxu0 %v1287
    %v1343 = vpop.f32.mrf.mxu0
    %v1344 = vadd.f32 %v1256, %v1343
    %v1345 = vpop.f32.mrf.mxu0
    %1346 = vdwg.mxu0
    %1347 = vmatpush.bf16.msra.mxu0 0
    %1348 = vmatpush.bf16.msra.mxu0 0
    %1349 = vmatpush.bf16.msra.mxu0 0
    %1350 = vmatpush.bf16.msra.mxu0 0
    %1351 = vmatpush.bf16.msra.mxu0 0
    %1352 = vmatpush.bf16.msra.mxu0 0
    %1353 = vmatpush.bf16.msra.mxu0 0
    %1354 = vmatpush.bf16.msra.mxu0 %v1296
    %1355 = vmatmul.bf16.gmra.mxu0 %v1287
    %v1356 = vpop.f32.mrf.mxu0
    %v1357 = vadd.f32 %v1257, %v1356
    %v1358 = vpop.f32.mrf.mxu0
    %1359 = vdwg.mxu0
    %1360 = vmatpush.bf16.msra.mxu0 0
    %1361 = vmatpush.bf16.msra.mxu0 0
    %1362 = vmatpush.bf16.msra.mxu0 0
    %1363 = vmatpush.bf16.msra.mxu0 0
    %1364 = vmatpush.bf16.msra.mxu0 0
    %1365 = vmatpush.bf16.msra.mxu0 0
    %1366 = vmatpush.bf16.msra.mxu0 0
    %1367 = vmatpush.bf16.msra.mxu0 %v1298
    %1368 = vmatmul.bf16.gmra.mxu0 %v1287
    %v1369 = vpop.f32.mrf.mxu0
    %v1370 = vadd.f32 %v1258, %v1369
    %v1371 = vpop.f32.mrf.mxu0
    %1372 = vdwg.mxu0
    %1373 = vmatpush.bf16.msra.mxu0 0
    %1374 = vmatpush.bf16.msra.mxu0 0
    %1375 = vmatpush.bf16.msra.mxu0 0
    %1376 = vmatpush.bf16.msra.mxu0 0
    %1377 = vmatpush.bf16.msra.mxu0 0
    %1378 = vmatpush.bf16.msra.mxu0 0
    %1379 = vmatpush.bf16.msra.mxu0 0
    %1380 = vmatpush.bf16.msra.mxu0 %v1300
    %1381 = vmatmul.bf16.gmra.mxu0 %v1287
    %v1382 = vpop.f32.mrf.mxu0
    %v1383 = vadd.f32 %v1259, %v1382
    %v1384 = vpop.f32.mrf.mxu0
    %1385 = vdwg.mxu0
    %1386 = vmatpush.bf16.msra.mxu0 0
    %1387 = vmatpush.bf16.msra.mxu0 0
    %1388 = vmatpush.bf16.msra.mxu0 0
    %1389 = vmatpush.bf16.msra.mxu0 0
    %1390 = vmatpush.bf16.msra.mxu0 0
    %1391 = vmatpush.bf16.msra.mxu0 0
    %1392 = vmatpush.bf16.msra.mxu0 0
    %1393 = vmatpush.bf16.msra.mxu0 %v1302
    %1394 = vmatmul.bf16.gmra.mxu0 %v1287
    %v1395 = vpop.f32.mrf.mxu0
    %v1396 = vadd.f32 %v1260, %v1395
    %v1397 = vpop.f32.mrf.mxu0
    %1398 = vdwg.mxu0
    %1399 = vmatpush.bf16.msra.mxu0 0
    %1400 = vmatpush.bf16.msra.mxu0 0
    %1401 = vmatpush.bf16.msra.mxu0 0
    %1402 = vmatpush.bf16.msra.mxu0 0
    %1403 = vmatpush.bf16.msra.mxu0 0
    %1404 = vmatpush.bf16.msra.mxu0 0
    %1405 = vmatpush.bf16.msra.mxu0 0
    %1406 = vmatpush.bf16.msra.mxu0 %v1304
    %1407 = vmatmul.bf16.gmra.mxu0 %v1287
    %v1408 = vpop.f32.mrf.mxu0
    %v1409 = vadd.f32 %v1261, %v1408
    %v1410 = vpop.f32.mrf.mxu0
    %1411 = vdwg.mxu0
    %1412 = vmatpush.bf16.msra.mxu0 0
    %1413 = vmatpush.bf16.msra.mxu0 0
    %1414 = vmatpush.bf16.msra.mxu0 0
    %1415 = vmatpush.bf16.msra.mxu0 0
    %1416 = vmatpush.bf16.msra.mxu0 0
    %1417 = vmatpush.bf16.msra.mxu0 0
    %1418 = vmatpush.bf16.msra.mxu0 0
    %1419 = vmatpush.bf16.msra.mxu0 %v1306
    %1420 = vmatmul.bf16.gmra.mxu0 %v1287
    %v1421 = vpop.f32.mrf.mxu0
    %v1422 = vadd.f32 %v1262, %v1421
    %v1423 = vpop.f32.mrf.mxu0
    %1424 = vdwg.mxu0
    %vm1425 = vcmp.ge.f32.partialorder %v1318, 0.0
    %vm1426 = vcmp.ge.f32.partialorder %v1331, 0.0
    %vm1427 = vcmp.ge.f32.partialorder %v1344, 0.0
    %vm1428 = vcmp.ge.f32.partialorder %v1357, 0.0
    %vm1429 = vcmp.ge.f32.partialorder %v1370, 0.0
    %vm1430 = vcmp.ge.f32.partialorder %v1383, 0.0
    %vm1431 = vcmp.ge.f32.partialorder %v1396, 0.0
    %vm1432 = vcmp.ge.f32.partialorder %v1409, 0.0
    %vm1433 = vcmp.ge.f32.partialorder %v1422, 0.0
    %v1434 = vmul.f32 %v1318, 0.22916667
    %v1435 = vmul.f32 %v1331, 0.22916667
    %v1436 = vmul.f32 %v1344, 0.22916667
    %v1437 = vmul.f32 %v1357, 0.22916667
    %v1438 = vmul.f32 %v1370, 0.22916667
    %v1439 = vmul.f32 %v1383, 0.22916667
    %v1440 = vmul.f32 %v1396, 0.22916667
    %v1441 = vmul.f32 %v1409, 0.22916667
    %v1442 = vmul.f32 %v1422, 0.22916667
    %v1443 = vsel %vm1425, %v1318, %v1434
    %v1444 = vsel %vm1426, %v1331, %v1435
    %v1445 = vsel %vm1427, %v1344, %v1436
    %v1446 = vsel %vm1428, %v1357, %v1437
    %v1447 = vsel %vm1429, %v1370, %v1438
    %v1448 = vsel %vm1430, %v1383, %v1439
    %v1449 = vsel %vm1431, %v1396, %v1440
    %v1450 = vsel %vm1432, %v1409, %v1441
    %v1451 = vsel %vm1433, %v1422, %v1442
    %vm1452 = vcmp.ge.f32.partialorder %v1443, 0.0
    %vm1453 = vcmp.ge.f32.partialorder %v1444, 0.0
    %vm1454 = vcmp.ge.f32.partialorder %v1445, 0.0
    %vm1455 = vcmp.ge.f32.partialorder %v1446, 0.0
    %vm1456 = vcmp.ge.f32.partialorder %v1447, 0.0
    %vm1457 = vcmp.ge.f32.partialorder %v1448, 0.0
    %vm1458 = vcmp.ge.f32.partialorder %v1449, 0.0
    %vm1459 = vcmp.ge.f32.partialorder %v1450, 0.0
    %vm1460 = vcmp.ge.f32.partialorder %v1451, 0.0
    %v1461 = vmul.f32 %v1443, 0.22916667
    %v1462 = vmul.f32 %v1444, 0.22916667
    %v1463 = vmul.f32 %v1445, 0.22916667
    %v1464 = vmul.f32 %v1446, 0.22916667
    %v1465 = vmul.f32 %v1447, 0.22916667
    %v1466 = vmul.f32 %v1448, 0.22916667
    %v1467 = vmul.f32 %v1449, 0.22916667
    %v1468 = vmul.f32 %v1450, 0.22916667
    %v1469 = vmul.f32 %v1451, 0.22916667
    %v1470 = vsel %vm1452, %v1443, %v1461
    %v1471 = vsel %vm1453, %v1444, %v1462
    %v1472 = vsel %vm1454, %v1445, %v1463
    %v1473 = vsel %vm1455, %v1446, %v1464
    %v1474 = vsel %vm1456, %v1447, %v1465
    %v1475 = vsel %vm1457, %v1448, %v1466
    %v1476 = vsel %vm1458, %v1449, %v1467
    %v1477 = vsel %vm1459, %v1450, %v1468
    %v1478 = vsel %vm1460, %v1451, %v1469
    %v1479 = vpack.c.bf16 %v1471, %v1470
    %v1480 = vpack.c.bf16 %v1473, %v1472
    %v1481 = vpack.c.bf16 %v1475, %v1474
    %v1482 = vpack.c.bf16 %v1477, %v1476
    %v1483 = vpack.c.bf16 %v1478, %v1478
    %v1489 = vrot.slane %v1479, 3
    %v1490 = vrot.slane %v1480, 6
    %v1491 = vrot.slane %v1480, 1
    %v1492 = vrot.slane %v1481, 4
    %v1493 = vrot.slane %v1481, 7
    %v1494 = vrot.slane %v1482, 2
    %v1495 = vrot.slane %v1482, 5
    %v1496 = vrot.slane %v1483, 3
    %v1499 = vsel %vm1289, %v1479, %v1489
    %vm1500 = vcmask 1042434
    %v1503 = vsel %vm1500, %v1490, %v1491
    %vm1504 = vcmask 1041408
    %v1505 = vsel %vm1504, %v1499, %v1503
    %vm1506 = vcmask 1044484
    %v1509 = vsel %vm1506, %v1492, %v1493
    %vm1510 = vcmask 1046534
    %v1513 = vsel %vm1510, %v1494, %v1495
    %vm1514 = vcmask 1045508
    %v1515 = vsel %vm1514, %v1509, %v1513
    %vm1516 = vcmask 1043456
    %v1517 = vsel %vm1516, %v1505, %v1515
    %v1520 = vsel %vm1289, %v1483, %v1496
    %1523 = vst [vmem:[%s10] sm:$0xff] %v1517
    %1524 = vst [vmem:[%s10 + $0x8] sm:$0x1] %v1520
    // Predicated region
    $region34: #{vae_forward.4} parent=1 // pred_check
      _
    $region35: #{vae_forward.4} parent=1 // pred_check_branch
      %1526 = sbr.rel (0) target = $region37
    $region36: #{vae_forward.4} parent=1 // pred_region
      %1528 = vsyncadd [#allocation3], 0
      %s1530 = sshll.u32 [#allocation2], 4
      %s1531 = int_to_ptr.vmem [resolvable:$true] %s1530
      %s1532 = sshll.u32 %s8, 4
      %s1533 = int_to_ptr.hbm [resolvable:$true] %s1532
      %1535 = dma.vmem_to_hbm [thread:$0]  %s1531, 32, %s1533, [#allocation3]
    $region37: #{vae_forward.4} parent=1 // pred_fallthru
      _
    // Predicated region
    $region38: #{vae_forward.4} parent=1 // pred_check
      _
    $region39: #{vae_forward.4} parent=1 // pred_check_branch
      %1537 = sbr.rel (0) target = $region41
    $region40: #{vae_forward.4} parent=1 // pred_region
      %1539 = vsyncadd [#allocation5], 0
      %s1541 = sshll.u32 [#allocation4], 4
      %s1542 = int_to_ptr.vmem [resolvable:$true] %s1541
      %s1543 = sshll.u32 %s9, 4
      %s1544 = int_to_ptr.hbm [resolvable:$true] %s1543
      %1546 = dma.vmem_to_hbm [thread:$0]  %s1542, 32, %s1544, [#allocation5]
    $region41: #{vae_forward.4} parent=1 // pred_fallthru
      _
    // Predicated region
    $region42: #{vae_forward.4} parent=1 // pred_check
      _
    $region43: #{vae_forward.4} parent=1 // pred_check_branch
      %1548 = sbr.rel (0) target = $region45
    $region44: #{vae_forward.4} parent=1 // pred_region
      _
    $region45: #{vae_forward.4} parent=1 // pred_fallthru
      _
    // Predicated region
    $region46: #{vae_forward.4} parent=1 // pred_check
      _
    $region47: #{vae_forward.4} parent=1 // pred_check_branch
      %1550 = sbr.rel (0) target = $region49
    $region48: #{vae_forward.4} parent=1 // pred_region
      %1552 = dma.done [#allocation3], 32
    $region49: #{vae_forward.4} parent=1 // pred_fallthru
      _
    // Predicated region
    $region50: #{vae_forward.4} parent=1 // pred_check
      _
    $region51: #{vae_forward.4} parent=1 // pred_check_branch
      %1554 = sbr.rel (0) target = $region53
    $region52: #{vae_forward.4} parent=1 // pred_region
      %1556 = dma.done [#allocation5], 32
    $region53: #{vae_forward.4} parent=1 // pred_fallthru
      _
    // Predicated region
    $region54: #{vae_forward.4} parent=1 // pred_check
      _
    $region55: #{vae_forward.4} parent=1 // pred_check_branch
      %1558 = sbr.rel (0) target = $region57
    $region56: #{vae_forward.4} parent=1 // pred_region
      _
    $region57: #{vae_forward.4} parent=1 // pred_fallthru
      _
    %1559 = vsyncpa [#allocation3], 1
    %1560 = vsyncpa [#allocation5], 1

// kernel: vae_forward.5
$region0: #{vae_forward.5}
  #allocation0 [shape = 'u32[]', space=smem, size = 0x4, offset = 0x4, fixed_abs, tag = 'smem constant byte address 0x4 - core index']
  #allocation1 [shape = 'u32[72,128]{1,0:T(1,128)}', space=vmem, size = 0x9000, scoped, tag = 'internal scratch']
  %s0 = inlined_call_operand.vmem [shape: bf16[98,1152], index: 0, kind: input, shape index: {}]
  %s1 = inlined_call_operand.vmem [shape: bf16[1152,64], index: 1, kind: input, shape index: {}]
  %s2 = inlined_call_operand.vmem [shape: f32[1,64], index: 2, kind: input, shape index: {}]
  %s3 = inlined_call_operand.vmem [shape: bf16[64,128], index: 3, kind: input, shape index: {}]
  %s4 = inlined_call_operand.vmem [shape: f32[1,128], index: 4, kind: input, shape index: {}]
  %s5 = inlined_call_operand.vmem [shape: bf16[128,16], index: 5, kind: input, shape index: {}]
  %s6 = inlined_call_operand.vmem [shape: f32[1,16], index: 6, kind: input, shape index: {}]
  %s7 = inlined_call_operand.vmem [shape: f32[98,16], index: 7, kind: output, shape index: {}]
  %s8 = sld [smem:[#allocation0]]
  $region38: #{vae_forward.5} parent=0
    _
  %s10 = ssub.s32 1, %s8
  %s11 = scalar_select 0, %s10, %s8
  // Predicated region
  $region2: #{vae_forward.5} parent=0 // pred_check
    _
  $region3: #{vae_forward.5} parent=0 // pred_check_branch
    %13 = sbr.rel (0) target = $region5
  $region4: #{vae_forward.5} parent=0 // pred_region
    _
  $region5: #{vae_forward.5} parent=0 // pred_fallthru
    _
  // Predicated region
  $region6: #{vae_forward.5} parent=0 // pred_check
    _
  $region7: #{vae_forward.5} parent=0 // pred_check_branch
    %15 = sbr.rel (0) target = $region9
  $region8: #{vae_forward.5} parent=0 // pred_region
    _
  $region9: #{vae_forward.5} parent=0 // pred_fallthru
    _
  // Predicated region
  $region10: #{vae_forward.5} parent=0 // pred_check
    _
  $region11: #{vae_forward.5} parent=0 // pred_check_branch
    %17 = sbr.rel (0) target = $region13
  $region12: #{vae_forward.5} parent=0 // pred_region
    _
  $region13: #{vae_forward.5} parent=0 // pred_fallthru
    _
  // Predicated region
  $region14: #{vae_forward.5} parent=0 // pred_check
    _
  $region15: #{vae_forward.5} parent=0 // pred_check_branch
    %19 = sbr.rel (0) target = $region17
  $region16: #{vae_forward.5} parent=0 // pred_region
    _
  $region17: #{vae_forward.5} parent=0 // pred_fallthru
    _
  // Predicated region
  $region18: #{vae_forward.5} parent=0 // pred_check
    _
  $region19: #{vae_forward.5} parent=0 // pred_check_branch
    %21 = sbr.rel (0) target = $region21
  $region20: #{vae_forward.5} parent=0 // pred_region
    _
  $region21: #{vae_forward.5} parent=0 // pred_fallthru
    _
  // Predicated region
  $region22: #{vae_forward.5} parent=0 // pred_check
    _
  $region23: #{vae_forward.5} parent=0 // pred_check_branch
    %23 = sbr.rel (0) target = $region25
  $region24: #{vae_forward.5} parent=0 // pred_region
    _
  $region25: #{vae_forward.5} parent=0 // pred_fallthru
    _
  // Predicated region
  $region26: #{vae_forward.5} parent=0 // pred_check
    _
  $region27: #{vae_forward.5} parent=0 // pred_check_branch
    %25 = sbr.rel (0) target = $region29
  $region28: #{vae_forward.5} parent=0 // pred_region
    _
  $region29: #{vae_forward.5} parent=0 // pred_fallthru
    _
  %v27 = vld [vmem:[%s0] sm:$0xff]
  %v28 = vld [vmem:[%s0 + $0x8] sm:$0xff]
  %v29 = vld [vmem:[%s0 + $0x10] sm:$0xff]
  %v30 = vld [vmem:[%s0 + $0x18] sm:$0xff]
  %v31 = vld [vmem:[%s0 + $0x20] sm:$0xf]
  %v32 = vld [vmem:[%s0 + $0x24] sm:$0xff]
  %v33 = vld [vmem:[%s0 + $0x2c] sm:$0xff]
  %v34 = vld [vmem:[%s0 + $0x34] sm:$0xff]
  %v35 = vld [vmem:[%s0 + $0x3c] sm:$0xff]
  %v36 = vld [vmem:[%s0 + $0x44] sm:$0xf]
  %v37 = vld [vmem:[%s0 + $0x48] sm:$0xff]
  %v38 = vld [vmem:[%s0 + $0x50] sm:$0xff]
  %v39 = vld [vmem:[%s0 + $0x58] sm:$0xff]
  %v40 = vld [vmem:[%s0 + $0x60] sm:$0xff]
  %v41 = vld [vmem:[%s0 + $0x68] sm:$0xf]
  %v42 = vld [vmem:[%s0 + $0x6c] sm:$0xff]
  %v43 = vld [vmem:[%s0 + $0x74] sm:$0xff]
  %v44 = vld [vmem:[%s0 + $0x7c] sm:$0xff]
  %v45 = vld [vmem:[%s0 + $0x84] sm:$0xff]
  %v46 = vld [vmem:[%s0 + $0x8c] sm:$0xf]
  %v47 = vld [vmem:[%s0 + $0x90] sm:$0xff]
  %v48 = vld [vmem:[%s0 + $0x98] sm:$0xff]
  %v49 = vld [vmem:[%s0 + $0xa0] sm:$0xff]
  %v50 = vld [vmem:[%s0 + $0xa8] sm:$0xff]
  %v51 = vld [vmem:[%s0 + $0xb0] sm:$0xf]
  %v52 = vld [vmem:[%s0 + $0xb4] sm:$0xff]
  %v53 = vld [vmem:[%s0 + $0xbc] sm:$0xff]
  %v54 = vld [vmem:[%s0 + $0xc4] sm:$0xff]
  %v55 = vld [vmem:[%s0 + $0xcc] sm:$0xff]
  %v56 = vld [vmem:[%s0 + $0xd4] sm:$0xf]
  %v57 = vld [vmem:[%s0 + $0xd8] sm:$0xff]
  %v58 = vld [vmem:[%s0 + $0xe0] sm:$0xff]
  %v59 = vld [vmem:[%s0 + $0xe8] sm:$0xff]
  %v60 = vld [vmem:[%s0 + $0xf0] sm:$0xff]
  %v61 = vld [vmem:[%s0 + $0xf8] sm:$0xf]
  %v62 = vld [vmem:[%s0 + $0xfc] sm:$0xff]
  %v63 = vld [vmem:[%s0 + $0x104] sm:$0xff]
  %v64 = vld [vmem:[%s0 + $0x10c] sm:$0xff]
  %v65 = vld [vmem:[%s0 + $0x114] sm:$0xff]
  %v66 = vld [vmem:[%s0 + $0x11c] sm:$0xf]
  %v67 = vld [vmem:[%s0 + $0x120] sm:$0xff]
  %v68 = vld [vmem:[%s0 + $0x128] sm:$0xff]
  %v69 = vld [vmem:[%s0 + $0x130] sm:$0xff]
  %v70 = vld [vmem:[%s0 + $0x138] sm:$0xff]
  %v71 = vld [vmem:[%s0 + $0x140] sm:$0xf]
  %v72 = vld [vmem:[%s0 + $0x144] sm:$0xff]
  %v73 = vld [vmem:[%s0 + $0x14c] sm:$0xff]
  %v74 = vld [vmem:[%s0 + $0x154] sm:$0xff]
  %v75 = vld [vmem:[%s0 + $0x15c] sm:$0xff]
  %v76 = vld [vmem:[%s0 + $0x164] sm:$0xf]
  %v77 = vld [vmem:[%s0 + $0x168] sm:$0xff]
  %v78 = vld [vmem:[%s0 + $0x170] sm:$0xff]
  %v79 = vld [vmem:[%s0 + $0x178] sm:$0xff]
  %v80 = vld [vmem:[%s0 + $0x180] sm:$0xff]
  %v81 = vld [vmem:[%s0 + $0x188] sm:$0xf]
  %v82 = vld [vmem:[%s0 + $0x18c] sm:$0xff]
  %v83 = vld [vmem:[%s0 + $0x194] sm:$0xff]
  %v84 = vld [vmem:[%s0 + $0x19c] sm:$0xff]
  %v85 = vld [vmem:[%s0 + $0x1a4] sm:$0xff]
  %v86 = vld [vmem:[%s0 + $0x1ac] sm:$0xf]
  %v87 = vld [vmem:[%s0 + $0x1b0] sm:$0x11]
  %v88 = vld [vmem:[%s0 + $0x1b8] sm:$0x11]
  %v89 = vld [vmem:[%s0 + $0x1c0] sm:$0x11]
  %v90 = vld [vmem:[%s0 + $0x1c8] sm:$0x11]
  %v91 = vld [vmem:[%s0 + $0x1d0] sm:$0x1]
  %v92 = vld [vmem:[%s1] sm:$0xf]
  %v93 = vld [vmem:[%s1 + $0x4] sm:$0xf]
  %v94 = vld [vmem:[%s1 + $0x8] sm:$0xf]
  %v95 = vld [vmem:[%s1 + $0xc] sm:$0xf]
  %v96 = vld [vmem:[%s1 + $0x10] sm:$0xf]
  %v97 = vld [vmem:[%s1 + $0x14] sm:$0xf]
  %v98 = vld [vmem:[%s1 + $0x18] sm:$0xf]
  %v99 = vld [vmem:[%s1 + $0x1c] sm:$0xf]
  %v100 = vld [vmem:[%s1 + $0x20] sm:$0xf]
  %v101 = vld [vmem:[%s1 + $0x24] sm:$0xf]
  %v102 = vld [vmem:[%s1 + $0x28] sm:$0xf]
  %v103 = vld [vmem:[%s1 + $0x2c] sm:$0xf]
  %v104 = vld [vmem:[%s1 + $0x30] sm:$0xf]
  %v105 = vld [vmem:[%s1 + $0x34] sm:$0xf]
  %v106 = vld [vmem:[%s1 + $0x38] sm:$0xf]
  %v107 = vld [vmem:[%s1 + $0x3c] sm:$0xf]
  %v108 = vld [vmem:[%s1 + $0x40] sm:$0xf]
  %v109 = vld [vmem:[%s1 + $0x44] sm:$0xf]
  %v110 = vld [vmem:[%s1 + $0x48] sm:$0xf]
  %v111 = vld [vmem:[%s1 + $0x4c] sm:$0xf]
  %v112 = vld [vmem:[%s1 + $0x50] sm:$0xf]
  %v113 = vld [vmem:[%s1 + $0x54] sm:$0xf]
  %v114 = vld [vmem:[%s1 + $0x58] sm:$0xf]
  %v115 = vld [vmem:[%s1 + $0x5c] sm:$0xf]
  %v116 = vld [vmem:[%s1 + $0x60] sm:$0xf]
  %v117 = vld [vmem:[%s1 + $0x64] sm:$0xf]
  %v118 = vld [vmem:[%s1 + $0x68] sm:$0xf]
  %v119 = vld [vmem:[%s1 + $0x6c] sm:$0xf]
  %v120 = vld [vmem:[%s1 + $0x70] sm:$0xf]
  %v121 = vld [vmem:[%s1 + $0x74] sm:$0xf]
  %v122 = vld [vmem:[%s1 + $0x78] sm:$0xf]
  %v123 = vld [vmem:[%s1 + $0x7c] sm:$0xf]
  %v124 = vld [vmem:[%s1 + $0x80] sm:$0xf]
  %v125 = vld [vmem:[%s1 + $0x84] sm:$0xf]
  %v126 = vld [vmem:[%s1 + $0x88] sm:$0xf]
  %v127 = vld [vmem:[%s1 + $0x8c] sm:$0xf]
  %v128 = vld [vmem:[%s1 + $0x90] sm:$0xf]
  %v129 = vld [vmem:[%s1 + $0x94] sm:$0xf]
  %v130 = vld [vmem:[%s1 + $0x98] sm:$0xf]
  %v131 = vld [vmem:[%s1 + $0x9c] sm:$0xf]
  %v132 = vld [vmem:[%s1 + $0xa0] sm:$0xf]
  %v133 = vld [vmem:[%s1 + $0xa4] sm:$0xf]
  %v134 = vld [vmem:[%s1 + $0xa8] sm:$0xf]
  %v135 = vld [vmem:[%s1 + $0xac] sm:$0xf]
  %v136 = vld [vmem:[%s1 + $0xb0] sm:$0xf]
  %v137 = vld [vmem:[%s1 + $0xb4] sm:$0xf]
  %v138 = vld [vmem:[%s1 + $0xb8] sm:$0xf]
  %v139 = vld [vmem:[%s1 + $0xbc] sm:$0xf]
  %v140 = vld [vmem:[%s1 + $0xc0] sm:$0xf]
  %v141 = vld [vmem:[%s1 + $0xc4] sm:$0xf]
  %v142 = vld [vmem:[%s1 + $0xc8] sm:$0xf]
  %v143 = vld [vmem:[%s1 + $0xcc] sm:$0xf]
  %v144 = vld [vmem:[%s1 + $0xd0] sm:$0xf]
  %v145 = vld [vmem:[%s1 + $0xd4] sm:$0xf]
  %v146 = vld [vmem:[%s1 + $0xd8] sm:$0xf]
  %v147 = vld [vmem:[%s1 + $0xdc] sm:$0xf]
  %v148 = vld [vmem:[%s1 + $0xe0] sm:$0xf]
  %v149 = vld [vmem:[%s1 + $0xe4] sm:$0xf]
  %v150 = vld [vmem:[%s1 + $0xe8] sm:$0xf]
  %v151 = vld [vmem:[%s1 + $0xec] sm:$0xf]
  %v152 = vld [vmem:[%s1 + $0xf0] sm:$0xf]
  %v153 = vld [vmem:[%s1 + $0xf4] sm:$0xf]
  %v154 = vld [vmem:[%s1 + $0xf8] sm:$0xf]
  %v155 = vld [vmem:[%s1 + $0xfc] sm:$0xf]
  %v156 = vld [vmem:[%s1 + $0x100] sm:$0xf]
  %v157 = vld [vmem:[%s1 + $0x104] sm:$0xf]
  %v158 = vld [vmem:[%s1 + $0x108] sm:$0xf]
  %v159 = vld [vmem:[%s1 + $0x10c] sm:$0xf]
  %v160 = vld [vmem:[%s1 + $0x110] sm:$0xf]
  %v161 = vld [vmem:[%s1 + $0x114] sm:$0xf]
  %v162 = vld [vmem:[%s1 + $0x118] sm:$0xf]
  %v163 = vld [vmem:[%s1 + $0x11c] sm:$0xf]
  %v164 = vld [vmem:[%s1 + $0x120] sm:$0xf]
  %v165 = vld [vmem:[%s1 + $0x124] sm:$0xf]
  %v166 = vld [vmem:[%s1 + $0x128] sm:$0xf]
  %v167 = vld [vmem:[%s1 + $0x12c] sm:$0xf]
  %v168 = vld [vmem:[%s1 + $0x130] sm:$0xf]
  %v169 = vld [vmem:[%s1 + $0x134] sm:$0xf]
  %v170 = vld [vmem:[%s1 + $0x138] sm:$0xf]
  %v171 = vld [vmem:[%s1 + $0x13c] sm:$0xf]
  %v172 = vld [vmem:[%s1 + $0x140] sm:$0xf]
  %v173 = vld [vmem:[%s1 + $0x144] sm:$0xf]
  %v174 = vld [vmem:[%s1 + $0x148] sm:$0xf]
  %v175 = vld [vmem:[%s1 + $0x14c] sm:$0xf]
  %v176 = vld [vmem:[%s1 + $0x150] sm:$0xf]
  %v177 = vld [vmem:[%s1 + $0x154] sm:$0xf]
  %v178 = vld [vmem:[%s1 + $0x158] sm:$0xf]
  %v179 = vld [vmem:[%s1 + $0x15c] sm:$0xf]
  %v180 = vld [vmem:[%s1 + $0x160] sm:$0xf]
  %v181 = vld [vmem:[%s1 + $0x164] sm:$0xf]
  %v182 = vld [vmem:[%s1 + $0x168] sm:$0xf]
  %v183 = vld [vmem:[%s1 + $0x16c] sm:$0xf]
  %v184 = vld [vmem:[%s1 + $0x170] sm:$0xf]
  %v185 = vld [vmem:[%s1 + $0x174] sm:$0xf]
  %v186 = vld [vmem:[%s1 + $0x178] sm:$0xf]
  %v187 = vld [vmem:[%s1 + $0x17c] sm:$0xf]
  %v188 = vld [vmem:[%s1 + $0x180] sm:$0xf]
  %v189 = vld [vmem:[%s1 + $0x184] sm:$0xf]
  %v190 = vld [vmem:[%s1 + $0x188] sm:$0xf]
  %v191 = vld [vmem:[%s1 + $0x18c] sm:$0xf]
  %v192 = vld [vmem:[%s1 + $0x190] sm:$0xf]
  %v193 = vld [vmem:[%s1 + $0x194] sm:$0xf]
  %v194 = vld [vmem:[%s1 + $0x198] sm:$0xf]
  %v195 = vld [vmem:[%s1 + $0x19c] sm:$0xf]
  %v196 = vld [vmem:[%s1 + $0x1a0] sm:$0xf]
  %v197 = vld [vmem:[%s1 + $0x1a4] sm:$0xf]
  %v198 = vld [vmem:[%s1 + $0x1a8] sm:$0xf]
  %v199 = vld [vmem:[%s1 + $0x1ac] sm:$0xf]
  %v200 = vld [vmem:[%s1 + $0x1b0] sm:$0xf]
  %v201 = vld [vmem:[%s1 + $0x1b4] sm:$0xf]
  %v202 = vld [vmem:[%s1 + $0x1b8] sm:$0xf]
  %v203 = vld [vmem:[%s1 + $0x1bc] sm:$0xf]
  %v204 = vld [vmem:[%s1 + $0x1c0] sm:$0xf]
  %v205 = vld [vmem:[%s1 + $0x1c4] sm:$0xf]
  %v206 = vld [vmem:[%s1 + $0x1c8] sm:$0xf]
  %v207 = vld [vmem:[%s1 + $0x1cc] sm:$0xf]
  %v208 = vld [vmem:[%s1 + $0x1d0] sm:$0xf]
  %v209 = vld [vmem:[%s1 + $0x1d4] sm:$0xf]
  %v210 = vld [vmem:[%s1 + $0x1d8] sm:$0xf]
  %v211 = vld [vmem:[%s1 + $0x1dc] sm:$0xf]
  %v212 = vld [vmem:[%s1 + $0x1e0] sm:$0xf]
  %v213 = vld [vmem:[%s1 + $0x1e4] sm:$0xf]
  %v214 = vld [vmem:[%s1 + $0x1e8] sm:$0xf]
  %v215 = vld [vmem:[%s1 + $0x1ec] sm:$0xf]
  %v216 = vld [vmem:[%s1 + $0x1f0] sm:$0xf]
  %v217 = vld [vmem:[%s1 + $0x1f4] sm:$0xf]
  %v218 = vld [vmem:[%s1 + $0x1f8] sm:$0xf]
  %v219 = vld [vmem:[%s1 + $0x1fc] sm:$0xf]
  %v220 = vld [vmem:[%s1 + $0x200] sm:$0xf]
  %v221 = vld [vmem:[%s1 + $0x204] sm:$0xf]
  %v222 = vld [vmem:[%s1 + $0x208] sm:$0xf]
  %v223 = vld [vmem:[%s1 + $0x20c] sm:$0xf]
  %v224 = vld [vmem:[%s1 + $0x210] sm:$0xf]
  %v225 = vld [vmem:[%s1 + $0x214] sm:$0xf]
  %v226 = vld [vmem:[%s1 + $0x218] sm:$0xf]
  %v227 = vld [vmem:[%s1 + $0x21c] sm:$0xf]
  %v228 = vld [vmem:[%s1 + $0x220] sm:$0xf]
  %v229 = vld [vmem:[%s1 + $0x224] sm:$0xf]
  %v230 = vld [vmem:[%s1 + $0x228] sm:$0xf]
  %v231 = vld [vmem:[%s1 + $0x22c] sm:$0xf]
  %v232 = vld [vmem:[%s1 + $0x230] sm:$0xf]
  %v233 = vld [vmem:[%s1 + $0x234] sm:$0xf]
  %v234 = vld [vmem:[%s1 + $0x238] sm:$0xf]
  %v235 = vld [vmem:[%s1 + $0x23c] sm:$0xf]
  %v236 = vld [vmem:[%s2] sm:$0x1]
  %v238 = vperm.slane %v236, 0
  %v305 = vunpack.c.l.b16 %v27
  %v306 = vunpack.c.h.b16 %v27
  %v307 = vunpack.c.l.b16 %v28
  %v308 = vunpack.c.h.b16 %v28
  %v309 = vunpack.c.l.b16 %v29
  %v310 = vunpack.c.h.b16 %v29
  %v311 = vunpack.c.l.b16 %v30
  %v312 = vunpack.c.h.b16 %v30
  %v313 = vunpack.c.l.b16 %v31
  %v314 = vunpack.c.l.b16 %v32
  %v315 = vunpack.c.h.b16 %v32
  %v316 = vunpack.c.l.b16 %v33
  %v317 = vunpack.c.h.b16 %v33
  %v318 = vunpack.c.l.b16 %v34
  %v319 = vunpack.c.h.b16 %v34
  %v320 = vunpack.c.l.b16 %v35
  %v321 = vunpack.c.h.b16 %v35
  %v322 = vunpack.c.l.b16 %v36
  %v323 = vunpack.c.l.b16 %v37
  %v324 = vunpack.c.h.b16 %v37
  %v325 = vunpack.c.l.b16 %v38
  %v326 = vunpack.c.h.b16 %v38
  %v327 = vunpack.c.l.b16 %v39
  %v328 = vunpack.c.h.b16 %v39
  %v329 = vunpack.c.l.b16 %v40
  %v330 = vunpack.c.h.b16 %v40
  %v331 = vunpack.c.l.b16 %v41
  %v332 = vunpack.c.l.b16 %v42
  %v333 = vunpack.c.h.b16 %v42
  %v334 = vunpack.c.l.b16 %v43
  %v335 = vunpack.c.h.b16 %v43
  %v336 = vunpack.c.l.b16 %v44
  %v337 = vunpack.c.h.b16 %v44
  %v338 = vunpack.c.l.b16 %v45
  %v339 = vunpack.c.h.b16 %v45
  %v340 = vunpack.c.l.b16 %v46
  %v341 = vunpack.c.l.b16 %v47
  %v342 = vunpack.c.h.b16 %v47
  %v343 = vunpack.c.l.b16 %v48
  %v344 = vunpack.c.h.b16 %v48
  %v345 = vunpack.c.l.b16 %v49
  %v346 = vunpack.c.h.b16 %v49
  %v347 = vunpack.c.l.b16 %v50
  %v348 = vunpack.c.h.b16 %v50
  %v349 = vunpack.c.l.b16 %v51
  %v350 = vunpack.c.l.b16 %v52
  %v351 = vunpack.c.h.b16 %v52
  %v352 = vunpack.c.l.b16 %v53
  %v353 = vunpack.c.h.b16 %v53
  %v354 = vunpack.c.l.b16 %v54
  %v355 = vunpack.c.h.b16 %v54
  %v356 = vunpack.c.l.b16 %v55
  %v357 = vunpack.c.h.b16 %v55
  %v358 = vunpack.c.l.b16 %v56
  %v359 = vunpack.c.l.b16 %v57
  %v360 = vunpack.c.h.b16 %v57
  %v361 = vunpack.c.l.b16 %v58
  %v362 = vunpack.c.h.b16 %v58
  %v363 = vunpack.c.l.b16 %v59
  %v364 = vunpack.c.h.b16 %v59
  %v365 = vunpack.c.l.b16 %v60
  %v366 = vunpack.c.h.b16 %v60
  %v367 = vunpack.c.l.b16 %v61
  %v368 = vunpack.c.l.b16 %v62
  %v369 = vunpack.c.h.b16 %v62
  %v370 = vunpack.c.l.b16 %v63
  %v371 = vunpack.c.h.b16 %v63
  %v372 = vunpack.c.l.b16 %v64
  %v373 = vunpack.c.h.b16 %v64
  %v374 = vunpack.c.l.b16 %v65
  %v375 = vunpack.c.h.b16 %v65
  %v376 = vunpack.c.l.b16 %v66
  %v377 = vunpack.c.l.b16 %v67
  %v378 = vunpack.c.h.b16 %v67
  %v379 = vunpack.c.l.b16 %v68
  %v380 = vunpack.c.h.b16 %v68
  %v381 = vunpack.c.l.b16 %v69
  %v382 = vunpack.c.h.b16 %v69
  %v383 = vunpack.c.l.b16 %v70
  %v384 = vunpack.c.h.b16 %v70
  %v385 = vunpack.c.l.b16 %v71
  %v386 = vunpack.c.l.b16 %v72
  %v387 = vunpack.c.h.b16 %v72
  %v388 = vunpack.c.l.b16 %v73
  %v389 = vunpack.c.h.b16 %v73
  %v390 = vunpack.c.l.b16 %v74
  %v391 = vunpack.c.h.b16 %v74
  %v392 = vunpack.c.l.b16 %v75
  %v393 = vunpack.c.h.b16 %v75
  %v394 = vunpack.c.l.b16 %v76
  %v395 = vunpack.c.l.b16 %v77
  %v396 = vunpack.c.h.b16 %v77
  %v397 = vunpack.c.l.b16 %v78
  %v398 = vunpack.c.h.b16 %v78
  %v399 = vunpack.c.l.b16 %v79
  %v400 = vunpack.c.h.b16 %v79
  %v401 = vunpack.c.l.b16 %v80
  %v402 = vunpack.c.h.b16 %v80
  %v403 = vunpack.c.l.b16 %v81
  %v404 = vunpack.c.l.b16 %v82
  %v405 = vunpack.c.h.b16 %v82
  %v406 = vunpack.c.l.b16 %v83
  %v407 = vunpack.c.h.b16 %v83
  %v408 = vunpack.c.l.b16 %v84
  %v409 = vunpack.c.h.b16 %v84
  %v410 = vunpack.c.l.b16 %v85
  %v411 = vunpack.c.h.b16 %v85
  %v412 = vunpack.c.l.b16 %v86
  %v413 = vunpack.c.l.b16 %v87
  %v414 = vunpack.c.h.b16 %v87
  %v415 = vunpack.c.l.b16 %v88
  %v416 = vunpack.c.h.b16 %v88
  %v417 = vunpack.c.l.b16 %v89
  %v418 = vunpack.c.h.b16 %v89
  %v419 = vunpack.c.l.b16 %v90
  %v420 = vunpack.c.h.b16 %v90
  %v421 = vunpack.c.l.b16 %v91
  %v422 = vpack.c.b16 %v314, %v305
  %v423 = vpack.c.b16 %v315, %v306
  %v424 = vpack.c.b16 %v316, %v307
  %v425 = vpack.c.b16 %v317, %v308
  %v426 = vpack.c.b16 %v318, %v309
  %v427 = vpack.c.b16 %v319, %v310
  %v428 = vpack.c.b16 %v320, %v311
  %v429 = vpack.c.b16 %v321, %v312
  %v430 = vpack.c.b16 %v322, %v313
  %v431 = vpack.c.b16 %v332, %v323
  %v432 = vpack.c.b16 %v333, %v324
  %v433 = vpack.c.b16 %v334, %v325
  %v434 = vpack.c.b16 %v335, %v326
  %v435 = vpack.c.b16 %v336, %v327
  %v436 = vpack.c.b16 %v337, %v328
  %v437 = vpack.c.b16 %v338, %v329
  %v438 = vpack.c.b16 %v339, %v330
  %v439 = vpack.c.b16 %v340, %v331
  %v440 = vpack.c.b16 %v350, %v341
  %v441 = vpack.c.b16 %v351, %v342
  %v442 = vpack.c.b16 %v352, %v343
  %v443 = vpack.c.b16 %v353, %v344
  %v444 = vpack.c.b16 %v354, %v345
  %v445 = vpack.c.b16 %v355, %v346
  %v446 = vpack.c.b16 %v356, %v347
  %v447 = vpack.c.b16 %v357, %v348
  %v448 = vpack.c.b16 %v358, %v349
  %v449 = vpack.c.b16 %v368, %v359
  %v450 = vpack.c.b16 %v369, %v360
  %v451 = vpack.c.b16 %v370, %v361
  %v452 = vpack.c.b16 %v371, %v362
  %v453 = vpack.c.b16 %v372, %v363
  %v454 = vpack.c.b16 %v373, %v364
  %v455 = vpack.c.b16 %v374, %v365
  %v456 = vpack.c.b16 %v375, %v366
  %v457 = vpack.c.b16 %v376, %v367
  %v458 = vpack.c.b16 %v386, %v377
  %v459 = vpack.c.b16 %v387, %v378
  %v460 = vpack.c.b16 %v388, %v379
  %v461 = vpack.c.b16 %v389, %v380
  %v462 = vpack.c.b16 %v390, %v381
  %v463 = vpack.c.b16 %v391, %v382
  %v464 = vpack.c.b16 %v392, %v383
  %v465 = vpack.c.b16 %v393, %v384
  %v466 = vpack.c.b16 %v394, %v385
  %v467 = vpack.c.b16 %v404, %v395
  %v468 = vpack.c.b16 %v405, %v396
  %v469 = vpack.c.b16 %v406, %v397
  %v470 = vpack.c.b16 %v407, %v398
  %v471 = vpack.c.b16 %v408, %v399
  %v472 = vpack.c.b16 %v409, %v400
  %v473 = vpack.c.b16 %v410, %v401
  %v474 = vpack.c.b16 %v411, %v402
  %v475 = vpack.c.b16 %v412, %v403
  %v476 = vpack.c.b16 %v413, %v413
  %v477 = vpack.c.b16 %v414, %v414
  %v478 = vpack.c.b16 %v415, %v415
  %v479 = vpack.c.b16 %v416, %v416
  %v480 = vpack.c.b16 %v417, %v417
  %v481 = vpack.c.b16 %v418, %v418
  %v482 = vpack.c.b16 %v419, %v419
  %v483 = vpack.c.b16 %v420, %v420
  %v484 = vpack.c.b16 %v421, %v421
  %v692 = vunpack.c.l.b16 %v92
  %v693 = vunpack.c.l.b16 %v93
  %v694 = vunpack.c.l.b16 %v94
  %v695 = vunpack.c.l.b16 %v95
  %v696 = vunpack.c.l.b16 %v96
  %v697 = vunpack.c.l.b16 %v97
  %v698 = vunpack.c.l.b16 %v98
  %v699 = vunpack.c.l.b16 %v99
  %v700 = vunpack.c.l.b16 %v100
  %v701 = vunpack.c.l.b16 %v101
  %v702 = vunpack.c.l.b16 %v102
  %v703 = vunpack.c.l.b16 %v103
  %v704 = vunpack.c.l.b16 %v104
  %v705 = vunpack.c.l.b16 %v105
  %v706 = vunpack.c.l.b16 %v106
  %v707 = vunpack.c.l.b16 %v107
  %v708 = vunpack.c.l.b16 %v108
  %v709 = vunpack.c.l.b16 %v109
  %v710 = vunpack.c.l.b16 %v110
  %v711 = vunpack.c.l.b16 %v111
  %v712 = vunpack.c.l.b16 %v112
  %v713 = vunpack.c.l.b16 %v113
  %v714 = vunpack.c.l.b16 %v114
  %v715 = vunpack.c.l.b16 %v115
  %v716 = vunpack.c.l.b16 %v116
  %v717 = vunpack.c.l.b16 %v117
  %v718 = vunpack.c.l.b16 %v118
  %v719 = vunpack.c.l.b16 %v119
  %v720 = vunpack.c.l.b16 %v120
  %v721 = vunpack.c.l.b16 %v121
  %v722 = vunpack.c.l.b16 %v122
  %v723 = vunpack.c.l.b16 %v123
  %v724 = vunpack.c.l.b16 %v124
  %v725 = vunpack.c.l.b16 %v125
  %v726 = vunpack.c.l.b16 %v126
  %v727 = vunpack.c.l.b16 %v127
  %v728 = vunpack.c.l.b16 %v128
  %v729 = vunpack.c.l.b16 %v129
  %v730 = vunpack.c.l.b16 %v130
  %v731 = vunpack.c.l.b16 %v131
  %v732 = vunpack.c.l.b16 %v132
  %v733 = vunpack.c.l.b16 %v133
  %v734 = vunpack.c.l.b16 %v134
  %v735 = vunpack.c.l.b16 %v135
  %v736 = vunpack.c.l.b16 %v136
  %v737 = vunpack.c.l.b16 %v137
  %v738 = vunpack.c.l.b16 %v138
  %v739 = vunpack.c.l.b16 %v139
  %v740 = vunpack.c.l.b16 %v140
  %v741 = vunpack.c.l.b16 %v141
  %v742 = vunpack.c.l.b16 %v142
  %v743 = vunpack.c.l.b16 %v143
  %v744 = vunpack.c.l.b16 %v144
  %v745 = vunpack.c.l.b16 %v145
  %v746 = vunpack.c.l.b16 %v146
  %v747 = vunpack.c.l.b16 %v147
  %v748 = vunpack.c.l.b16 %v148
  %v749 = vunpack.c.l.b16 %v149
  %v750 = vunpack.c.l.b16 %v150
  %v751 = vunpack.c.l.b16 %v151
  %v752 = vunpack.c.l.b16 %v152
  %v753 = vunpack.c.l.b16 %v153
  %v754 = vunpack.c.l.b16 %v154
  %v755 = vunpack.c.l.b16 %v155
  %v756 = vunpack.c.l.b16 %v156
  %v757 = vunpack.c.l.b16 %v157
  %v758 = vunpack.c.l.b16 %v158
  %v759 = vunpack.c.l.b16 %v159
  %v760 = vunpack.c.l.b16 %v160
  %v761 = vunpack.c.l.b16 %v161
  %v762 = vunpack.c.l.b16 %v162
  %v763 = vunpack.c.l.b16 %v163
  %v764 = vunpack.c.l.b16 %v164
  %v765 = vunpack.c.l.b16 %v165
  %v766 = vunpack.c.l.b16 %v166
  %v767 = vunpack.c.l.b16 %v167
  %v768 = vunpack.c.l.b16 %v168
  %v769 = vunpack.c.l.b16 %v169
  %v770 = vunpack.c.l.b16 %v170
  %v771 = vunpack.c.l.b16 %v171
  %v772 = vunpack.c.l.b16 %v172
  %v773 = vunpack.c.l.b16 %v173
  %v774 = vunpack.c.l.b16 %v174
  %v775 = vunpack.c.l.b16 %v175
  %v776 = vunpack.c.l.b16 %v176
  %v777 = vunpack.c.l.b16 %v177
  %v778 = vunpack.c.l.b16 %v178
  %v779 = vunpack.c.l.b16 %v179
  %v780 = vunpack.c.l.b16 %v180
  %v781 = vunpack.c.l.b16 %v181
  %v782 = vunpack.c.l.b16 %v182
  %v783 = vunpack.c.l.b16 %v183
  %v784 = vunpack.c.l.b16 %v184
  %v785 = vunpack.c.l.b16 %v185
  %v786 = vunpack.c.l.b16 %v186
  %v787 = vunpack.c.l.b16 %v187
  %v788 = vunpack.c.l.b16 %v188
  %v789 = vunpack.c.l.b16 %v189
  %v790 = vunpack.c.l.b16 %v190
  %v791 = vunpack.c.l.b16 %v191
  %v792 = vunpack.c.l.b16 %v192
  %v793 = vunpack.c.l.b16 %v193
  %v794 = vunpack.c.l.b16 %v194
  %v795 = vunpack.c.l.b16 %v195
  %v796 = vunpack.c.l.b16 %v196
  %v797 = vunpack.c.l.b16 %v197
  %v798 = vunpack.c.l.b16 %v198
  %v799 = vunpack.c.l.b16 %v199
  %v800 = vunpack.c.l.b16 %v200
  %v801 = vunpack.c.l.b16 %v201
  %v802 = vunpack.c.l.b16 %v202
  %v803 = vunpack.c.l.b16 %v203
  %v804 = vunpack.c.l.b16 %v204
  %v805 = vunpack.c.l.b16 %v205
  %v806 = vunpack.c.l.b16 %v206
  %v807 = vunpack.c.l.b16 %v207
  %v808 = vunpack.c.l.b16 %v208
  %v809 = vunpack.c.l.b16 %v209
  %v810 = vunpack.c.l.b16 %v210
  %v811 = vunpack.c.l.b16 %v211
  %v812 = vunpack.c.l.b16 %v212
  %v813 = vunpack.c.l.b16 %v213
  %v814 = vunpack.c.l.b16 %v214
  %v815 = vunpack.c.l.b16 %v215
  %v816 = vunpack.c.l.b16 %v216
  %v817 = vunpack.c.l.b16 %v217
  %v818 = vunpack.c.l.b16 %v218
  %v819 = vunpack.c.l.b16 %v219
  %v820 = vunpack.c.l.b16 %v220
  %v821 = vunpack.c.l.b16 %v221
  %v822 = vunpack.c.l.b16 %v222
  %v823 = vunpack.c.l.b16 %v223
  %v824 = vunpack.c.l.b16 %v224
  %v825 = vunpack.c.l.b16 %v225
  %v826 = vunpack.c.l.b16 %v226
  %v827 = vunpack.c.l.b16 %v227
  %v828 = vunpack.c.l.b16 %v228
  %v829 = vunpack.c.l.b16 %v229
  %v830 = vunpack.c.l.b16 %v230
  %v831 = vunpack.c.l.b16 %v231
  %v832 = vunpack.c.l.b16 %v232
  %v833 = vunpack.c.l.b16 %v233
  %v834 = vunpack.c.l.b16 %v234
  %v835 = vunpack.c.l.b16 %v235
  %v836 = vpack.c.b16 %v693, %v692
  %v837 = vpack.c.b16 %v695, %v694
  %v838 = vpack.c.b16 %v697, %v696
  %v839 = vpack.c.b16 %v699, %v698
  %v840 = vpack.c.b16 %v701, %v700
  %v841 = vpack.c.b16 %v703, %v702
  %v842 = vpack.c.b16 %v705, %v704
  %v843 = vpack.c.b16 %v707, %v706
  %v844 = vpack.c.b16 %v709, %v708
  %v845 = vpack.c.b16 %v711, %v710
  %v846 = vpack.c.b16 %v713, %v712
  %v847 = vpack.c.b16 %v715, %v714
  %v848 = vpack.c.b16 %v717, %v716
  %v849 = vpack.c.b16 %v719, %v718
  %v850 = vpack.c.b16 %v721, %v720
  %v851 = vpack.c.b16 %v723, %v722
  %v852 = vpack.c.b16 %v725, %v724
  %v853 = vpack.c.b16 %v727, %v726
  %v854 = vpack.c.b16 %v729, %v728
  %v855 = vpack.c.b16 %v731, %v730
  %v856 = vpack.c.b16 %v733, %v732
  %v857 = vpack.c.b16 %v735, %v734
  %v858 = vpack.c.b16 %v737, %v736
  %v859 = vpack.c.b16 %v739, %v738
  %v860 = vpack.c.b16 %v741, %v740
  %v861 = vpack.c.b16 %v743, %v742
  %v862 = vpack.c.b16 %v745, %v744
  %v863 = vpack.c.b16 %v747, %v746
  %v864 = vpack.c.b16 %v749, %v748
  %v865 = vpack.c.b16 %v751, %v750
  %v866 = vpack.c.b16 %v753, %v752
  %v867 = vpack.c.b16 %v755, %v754
  %v868 = vpack.c.b16 %v757, %v756
  %v869 = vpack.c.b16 %v759, %v758
  %v870 = vpack.c.b16 %v761, %v760
  %v871 = vpack.c.b16 %v763, %v762
  %v872 = vpack.c.b16 %v765, %v764
  %v873 = vpack.c.b16 %v767, %v766
  %v874 = vpack.c.b16 %v769, %v768
  %v875 = vpack.c.b16 %v771, %v770
  %v876 = vpack.c.b16 %v773, %v772
  %v877 = vpack.c.b16 %v775, %v774
  %v878 = vpack.c.b16 %v777, %v776
  %v879 = vpack.c.b16 %v779, %v778
  %v880 = vpack.c.b16 %v781, %v780
  %v881 = vpack.c.b16 %v783, %v782
  %v882 = vpack.c.b16 %v785, %v784
  %v883 = vpack.c.b16 %v787, %v786
  %v884 = vpack.c.b16 %v789, %v788
  %v885 = vpack.c.b16 %v791, %v790
  %v886 = vpack.c.b16 %v793, %v792
  %v887 = vpack.c.b16 %v795, %v794
  %v888 = vpack.c.b16 %v797, %v796
  %v889 = vpack.c.b16 %v799, %v798
  %v890 = vpack.c.b16 %v801, %v800
  %v891 = vpack.c.b16 %v803, %v802
  %v892 = vpack.c.b16 %v805, %v804
  %v893 = vpack.c.b16 %v807, %v806
  %v894 = vpack.c.b16 %v809, %v808
  %v895 = vpack.c.b16 %v811, %v810
  %v896 = vpack.c.b16 %v813, %v812
  %v897 = vpack.c.b16 %v815, %v814
  %v898 = vpack.c.b16 %v817, %v816
  %v899 = vpack.c.b16 %v819, %v818
  %v900 = vpack.c.b16 %v821, %v820
  %v901 = vpack.c.b16 %v823, %v822
  %v902 = vpack.c.b16 %v825, %v824
  %v903 = vpack.c.b16 %v827, %v826
  %v904 = vpack.c.b16 %v829, %v828
  %v905 = vpack.c.b16 %v831, %v830
  %v906 = vpack.c.b16 %v833, %v832
  %v907 = vpack.c.b16 %v835, %v834
  %980 = vmatpush.bf16.msra.mxu0 %v843
  %981 = vmatpush.bf16.msra.mxu0 %v842
  %982 = vmatpush.bf16.msra.mxu0 %v841
  %983 = vmatpush.bf16.msra.mxu0 %v840
  %984 = vmatpush.bf16.msra.mxu0 %v839
  %985 = vmatpush.bf16.msra.mxu0 %v838
  %986 = vmatpush.bf16.msra.mxu0 %v837
  %987 = vmatpush.bf16.msra.mxu0 %v836
  %988 = vmatmul.bf16.gmra.mxu0 %v422
  %v989 = vpop.f32.mrf.mxu0
  %v990 = vadd.f32 %v238, %v989
  %v991 = vpop.f32.mrf.mxu0
  %v992 = vadd.f32 %v238, %v991
  %993 = vmatmul.bf16.gmra.mxu0 %v431
  %v994 = vpop.f32.mrf.mxu0
  %v995 = vadd.f32 %v238, %v994
  %v996 = vpop.f32.mrf.mxu0
  %v997 = vadd.f32 %v238, %v996
  %998 = vmatmul.bf16.gmra.mxu0 %v440
  %v999 = vpop.f32.mrf.mxu0
  %v1000 = vadd.f32 %v238, %v999
  %v1001 = vpop.f32.mrf.mxu0
  %v1002 = vadd.f32 %v238, %v1001
  %1003 = vmatmul.bf16.gmra.mxu0 %v449
  %v1004 = vpop.f32.mrf.mxu0
  %v1005 = vadd.f32 %v238, %v1004
  %v1006 = vpop.f32.mrf.mxu0
  %v1007 = vadd.f32 %v238, %v1006
  %1008 = vmatmul.bf16.gmra.mxu0 %v458
  %v1009 = vpop.f32.mrf.mxu0
  %v1010 = vadd.f32 %v238, %v1009
  %v1011 = vpop.f32.mrf.mxu0
  %v1012 = vadd.f32 %v238, %v1011
  %1013 = vmatmul.bf16.gmra.mxu0 %v467
  %v1014 = vpop.f32.mrf.mxu0
  %v1015 = vadd.f32 %v238, %v1014
  %v1016 = vpop.f32.mrf.mxu0
  %v1017 = vadd.f32 %v238, %v1016
  %1018 = vmatmul.bf16.gmra.mxu0 %v476
  %v1019 = vpop.f32.mrf.mxu0
  %v1020 = vadd.f32 %v238, %v1019
  %v1021 = vpop.f32.mrf.mxu0
  %1022 = vdwg.mxu0
  %1023 = vmatpush.bf16.msra.mxu0 %v851
  %1024 = vmatpush.bf16.msra.mxu0 %v850
  %1025 = vmatpush.bf16.msra.mxu0 %v849
  %1026 = vmatpush.bf16.msra.mxu0 %v848
  %1027 = vmatpush.bf16.msra.mxu0 %v847
  %1028 = vmatpush.bf16.msra.mxu0 %v846
  %1029 = vmatpush.bf16.msra.mxu0 %v845
  %1030 = vmatpush.bf16.msra.mxu0 %v844
  %1031 = vmatmul.bf16.gmra.mxu0 %v423
  %v1032 = vpop.f32.mrf.mxu0
  %v1033 = vadd.f32 %v990, %v1032
  %v1034 = vpop.f32.mrf.mxu0
  %v1035 = vadd.f32 %v992, %v1034
  %1036 = vmatmul.bf16.gmra.mxu0 %v432
  %v1037 = vpop.f32.mrf.mxu0
  %v1038 = vadd.f32 %v995, %v1037
  %v1039 = vpop.f32.mrf.mxu0
  %v1040 = vadd.f32 %v997, %v1039
  %1041 = vmatmul.bf16.gmra.mxu0 %v441
  %v1042 = vpop.f32.mrf.mxu0
  %v1043 = vadd.f32 %v1000, %v1042
  %v1044 = vpop.f32.mrf.mxu0
  %v1045 = vadd.f32 %v1002, %v1044
  %1046 = vmatmul.bf16.gmra.mxu0 %v450
  %v1047 = vpop.f32.mrf.mxu0
  %v1048 = vadd.f32 %v1005, %v1047
  %v1049 = vpop.f32.mrf.mxu0
  %v1050 = vadd.f32 %v1007, %v1049
  %1051 = vmatmul.bf16.gmra.mxu0 %v459
  %v1052 = vpop.f32.mrf.mxu0
  %v1053 = vadd.f32 %v1010, %v1052
  %v1054 = vpop.f32.mrf.mxu0
  %v1055 = vadd.f32 %v1012, %v1054
  %1056 = vmatmul.bf16.gmra.mxu0 %v468
  %v1057 = vpop.f32.mrf.mxu0
  %v1058 = vadd.f32 %v1015, %v1057
  %v1059 = vpop.f32.mrf.mxu0
  %v1060 = vadd.f32 %v1017, %v1059
  %1061 = vmatmul.bf16.gmra.mxu0 %v477
  %v1062 = vpop.f32.mrf.mxu0
  %v1063 = vadd.f32 %v1020, %v1062
  %v1064 = vpop.f32.mrf.mxu0
  %1065 = vdwg.mxu0
  %1066 = vmatpush.bf16.msra.mxu0 %v859
  %1067 = vmatpush.bf16.msra.mxu0 %v858
  %1068 = vmatpush.bf16.msra.mxu0 %v857
  %1069 = vmatpush.bf16.msra.mxu0 %v856
  %1070 = vmatpush.bf16.msra.mxu0 %v855
  %1071 = vmatpush.bf16.msra.mxu0 %v854
  %1072 = vmatpush.bf16.msra.mxu0 %v853
  %1073 = vmatpush.bf16.msra.mxu0 %v852
  %1074 = vmatmul.bf16.gmra.mxu0 %v424
  %v1075 = vpop.f32.mrf.mxu0
  %v1076 = vadd.f32 %v1033, %v1075
  %v1077 = vpop.f32.mrf.mxu0
  %v1078 = vadd.f32 %v1035, %v1077
  %1079 = vmatmul.bf16.gmra.mxu0 %v433
  %v1080 = vpop.f32.mrf.mxu0
  %v1081 = vadd.f32 %v1038, %v1080
  %v1082 = vpop.f32.mrf.mxu0
  %v1083 = vadd.f32 %v1040, %v1082
  %1084 = vmatmul.bf16.gmra.mxu0 %v442
  %v1085 = vpop.f32.mrf.mxu0
  %v1086 = vadd.f32 %v1043, %v1085
  %v1087 = vpop.f32.mrf.mxu0
  %v1088 = vadd.f32 %v1045, %v1087
  %1089 = vmatmul.bf16.gmra.mxu0 %v451
  %v1090 = vpop.f32.mrf.mxu0
  %v1091 = vadd.f32 %v1048, %v1090
  %v1092 = vpop.f32.mrf.mxu0
  %v1093 = vadd.f32 %v1050, %v1092
  %1094 = vmatmul.bf16.gmra.mxu0 %v460
  %v1095 = vpop.f32.mrf.mxu0
  %v1096 = vadd.f32 %v1053, %v1095
  %v1097 = vpop.f32.mrf.mxu0
  %v1098 = vadd.f32 %v1055, %v1097
  %1099 = vmatmul.bf16.gmra.mxu0 %v469
  %v1100 = vpop.f32.mrf.mxu0
  %v1101 = vadd.f32 %v1058, %v1100
  %v1102 = vpop.f32.mrf.mxu0
  %v1103 = vadd.f32 %v1060, %v1102
  %1104 = vmatmul.bf16.gmra.mxu0 %v478
  %v1105 = vpop.f32.mrf.mxu0
  %v1106 = vadd.f32 %v1063, %v1105
  %v1107 = vpop.f32.mrf.mxu0
  %1108 = vdwg.mxu0
  %1109 = vmatpush.bf16.msra.mxu0 %v867
  %1110 = vmatpush.bf16.msra.mxu0 %v866
  %1111 = vmatpush.bf16.msra.mxu0 %v865
  %1112 = vmatpush.bf16.msra.mxu0 %v864
  %1113 = vmatpush.bf16.msra.mxu0 %v863
  %1114 = vmatpush.bf16.msra.mxu0 %v862
  %1115 = vmatpush.bf16.msra.mxu0 %v861
  %1116 = vmatpush.bf16.msra.mxu0 %v860
  %1117 = vmatmul.bf16.gmra.mxu0 %v425
  %v1118 = vpop.f32.mrf.mxu0
  %v1119 = vadd.f32 %v1076, %v1118
  %v1120 = vpop.f32.mrf.mxu0
  %v1121 = vadd.f32 %v1078, %v1120
  %1122 = vmatmul.bf16.gmra.mxu0 %v434
  %v1123 = vpop.f32.mrf.mxu0
  %v1124 = vadd.f32 %v1081, %v1123
  %v1125 = vpop.f32.mrf.mxu0
  %v1126 = vadd.f32 %v1083, %v1125
  %1127 = vmatmul.bf16.gmra.mxu0 %v443
  %v1128 = vpop.f32.mrf.mxu0
  %v1129 = vadd.f32 %v1086, %v1128
  %v1130 = vpop.f32.mrf.mxu0
  %v1131 = vadd.f32 %v1088, %v1130
  %1132 = vmatmul.bf16.gmra.mxu0 %v452
  %v1133 = vpop.f32.mrf.mxu0
  %v1134 = vadd.f32 %v1091, %v1133
  %v1135 = vpop.f32.mrf.mxu0
  %v1136 = vadd.f32 %v1093, %v1135
  %1137 = vmatmul.bf16.gmra.mxu0 %v461
  %v1138 = vpop.f32.mrf.mxu0
  %v1139 = vadd.f32 %v1096, %v1138
  %v1140 = vpop.f32.mrf.mxu0
  %v1141 = vadd.f32 %v1098, %v1140
  %1142 = vmatmul.bf16.gmra.mxu0 %v470
  %v1143 = vpop.f32.mrf.mxu0
  %v1144 = vadd.f32 %v1101, %v1143
  %v1145 = vpop.f32.mrf.mxu0
  %v1146 = vadd.f32 %v1103, %v1145
  %1147 = vmatmul.bf16.gmra.mxu0 %v479
  %v1148 = vpop.f32.mrf.mxu0
  %v1149 = vadd.f32 %v1106, %v1148
  %v1150 = vpop.f32.mrf.mxu0
  %1151 = vdwg.mxu0
  %1152 = vmatpush.bf16.msra.mxu0 %v875
  %1153 = vmatpush.bf16.msra.mxu0 %v874
  %1154 = vmatpush.bf16.msra.mxu0 %v873
  %1155 = vmatpush.bf16.msra.mxu0 %v872
  %1156 = vmatpush.bf16.msra.mxu0 %v871
  %1157 = vmatpush.bf16.msra.mxu0 %v870
  %1158 = vmatpush.bf16.msra.mxu0 %v869
  %1159 = vmatpush.bf16.msra.mxu0 %v868
  %1160 = vmatmul.bf16.gmra.mxu0 %v426
  %v1161 = vpop.f32.mrf.mxu0
  %v1162 = vadd.f32 %v1119, %v1161
  %v1163 = vpop.f32.mrf.mxu0
  %v1164 = vadd.f32 %v1121, %v1163
  %1165 = vmatmul.bf16.gmra.mxu0 %v435
  %v1166 = vpop.f32.mrf.mxu0
  %v1167 = vadd.f32 %v1124, %v1166
  %v1168 = vpop.f32.mrf.mxu0
  %v1169 = vadd.f32 %v1126, %v1168
  %1170 = vmatmul.bf16.gmra.mxu0 %v444
  %v1171 = vpop.f32.mrf.mxu0
  %v1172 = vadd.f32 %v1129, %v1171
  %v1173 = vpop.f32.mrf.mxu0
  %v1174 = vadd.f32 %v1131, %v1173
  %1175 = vmatmul.bf16.gmra.mxu0 %v453
  %v1176 = vpop.f32.mrf.mxu0
  %v1177 = vadd.f32 %v1134, %v1176
  %v1178 = vpop.f32.mrf.mxu0
  %v1179 = vadd.f32 %v1136, %v1178
  %1180 = vmatmul.bf16.gmra.mxu0 %v462
  %v1181 = vpop.f32.mrf.mxu0
  %v1182 = vadd.f32 %v1139, %v1181
  %v1183 = vpop.f32.mrf.mxu0
  %v1184 = vadd.f32 %v1141, %v1183
  %1185 = vmatmul.bf16.gmra.mxu0 %v471
  %v1186 = vpop.f32.mrf.mxu0
  %v1187 = vadd.f32 %v1144, %v1186
  %v1188 = vpop.f32.mrf.mxu0
  %v1189 = vadd.f32 %v1146, %v1188
  %1190 = vmatmul.bf16.gmra.mxu0 %v480
  %v1191 = vpop.f32.mrf.mxu0
  %v1192 = vadd.f32 %v1149, %v1191
  %v1193 = vpop.f32.mrf.mxu0
  %1194 = vdwg.mxu0
  %1195 = vmatpush.bf16.msra.mxu0 %v883
  %1196 = vmatpush.bf16.msra.mxu0 %v882
  %1197 = vmatpush.bf16.msra.mxu0 %v881
  %1198 = vmatpush.bf16.msra.mxu0 %v880
  %1199 = vmatpush.bf16.msra.mxu0 %v879
  %1200 = vmatpush.bf16.msra.mxu0 %v878
  %1201 = vmatpush.bf16.msra.mxu0 %v877
  %1202 = vmatpush.bf16.msra.mxu0 %v876
  %1203 = vmatmul.bf16.gmra.mxu0 %v427
  %v1204 = vpop.f32.mrf.mxu0
  %v1205 = vadd.f32 %v1162, %v1204
  %v1206 = vpop.f32.mrf.mxu0
  %v1207 = vadd.f32 %v1164, %v1206
  %1208 = vmatmul.bf16.gmra.mxu0 %v436
  %v1209 = vpop.f32.mrf.mxu0
  %v1210 = vadd.f32 %v1167, %v1209
  %v1211 = vpop.f32.mrf.mxu0
  %v1212 = vadd.f32 %v1169, %v1211
  %1213 = vmatmul.bf16.gmra.mxu0 %v445
  %v1214 = vpop.f32.mrf.mxu0
  %v1215 = vadd.f32 %v1172, %v1214
  %v1216 = vpop.f32.mrf.mxu0
  %v1217 = vadd.f32 %v1174, %v1216
  %1218 = vmatmul.bf16.gmra.mxu0 %v454
  %v1219 = vpop.f32.mrf.mxu0
  %v1220 = vadd.f32 %v1177, %v1219
  %v1221 = vpop.f32.mrf.mxu0
  %v1222 = vadd.f32 %v1179, %v1221
  %1223 = vmatmul.bf16.gmra.mxu0 %v463
  %v1224 = vpop.f32.mrf.mxu0
  %v1225 = vadd.f32 %v1182, %v1224
  %v1226 = vpop.f32.mrf.mxu0
  %v1227 = vadd.f32 %v1184, %v1226
  %1228 = vmatmul.bf16.gmra.mxu0 %v472
  %v1229 = vpop.f32.mrf.mxu0
  %v1230 = vadd.f32 %v1187, %v1229
  %v1231 = vpop.f32.mrf.mxu0
  %v1232 = vadd.f32 %v1189, %v1231
  %1233 = vmatmul.bf16.gmra.mxu0 %v481
  %v1234 = vpop.f32.mrf.mxu0
  %v1235 = vadd.f32 %v1192, %v1234
  %v1236 = vpop.f32.mrf.mxu0
  %1237 = vdwg.mxu0
  %1238 = vmatpush.bf16.msra.mxu0 %v891
  %1239 = vmatpush.bf16.msra.mxu0 %v890
  %1240 = vmatpush.bf16.msra.mxu0 %v889
  %1241 = vmatpush.bf16.msra.mxu0 %v888
  %1242 = vmatpush.bf16.msra.mxu0 %v887
  %1243 = vmatpush.bf16.msra.mxu0 %v886
  %1244 = vmatpush.bf16.msra.mxu0 %v885
  %1245 = vmatpush.bf16.msra.mxu0 %v884
  %1246 = vmatmul.bf16.gmra.mxu0 %v428
  %v1247 = vpop.f32.mrf.mxu0
  %v1248 = vadd.f32 %v1205, %v1247
  %v1249 = vpop.f32.mrf.mxu0
  %v1250 = vadd.f32 %v1207, %v1249
  %1251 = vmatmul.bf16.gmra.mxu0 %v437
  %v1252 = vpop.f32.mrf.mxu0
  %v1253 = vadd.f32 %v1210, %v1252
  %v1254 = vpop.f32.mrf.mxu0
  %v1255 = vadd.f32 %v1212, %v1254
  %1256 = vmatmul.bf16.gmra.mxu0 %v446
  %v1257 = vpop.f32.mrf.mxu0
  %v1258 = vadd.f32 %v1215, %v1257
  %v1259 = vpop.f32.mrf.mxu0
  %v1260 = vadd.f32 %v1217, %v1259
  %1261 = vmatmul.bf16.gmra.mxu0 %v455
  %v1262 = vpop.f32.mrf.mxu0
  %v1263 = vadd.f32 %v1220, %v1262
  %v1264 = vpop.f32.mrf.mxu0
  %v1265 = vadd.f32 %v1222, %v1264
  %1266 = vmatmul.bf16.gmra.mxu0 %v464
  %v1267 = vpop.f32.mrf.mxu0
  %v1268 = vadd.f32 %v1225, %v1267
  %v1269 = vpop.f32.mrf.mxu0
  %v1270 = vadd.f32 %v1227, %v1269
  %1271 = vmatmul.bf16.gmra.mxu0 %v473
  %v1272 = vpop.f32.mrf.mxu0
  %v1273 = vadd.f32 %v1230, %v1272
  %v1274 = vpop.f32.mrf.mxu0
  %v1275 = vadd.f32 %v1232, %v1274
  %1276 = vmatmul.bf16.gmra.mxu0 %v482
  %v1277 = vpop.f32.mrf.mxu0
  %v1278 = vadd.f32 %v1235, %v1277
  %v1279 = vpop.f32.mrf.mxu0
  %1280 = vdwg.mxu0
  %1281 = vmatpush.bf16.msra.mxu0 %v899
  %1282 = vmatpush.bf16.msra.mxu0 %v898
  %1283 = vmatpush.bf16.msra.mxu0 %v897
  %1284 = vmatpush.bf16.msra.mxu0 %v896
  %1285 = vmatpush.bf16.msra.mxu0 %v895
  %1286 = vmatpush.bf16.msra.mxu0 %v894
  %1287 = vmatpush.bf16.msra.mxu0 %v893
  %1288 = vmatpush.bf16.msra.mxu0 %v892
  %1289 = vmatmul.bf16.gmra.mxu0 %v429
  %v1290 = vpop.f32.mrf.mxu0
  %v1291 = vadd.f32 %v1248, %v1290
  %v1292 = vpop.f32.mrf.mxu0
  %v1293 = vadd.f32 %v1250, %v1292
  %1294 = vmatmul.bf16.gmra.mxu0 %v438
  %v1295 = vpop.f32.mrf.mxu0
  %v1296 = vadd.f32 %v1253, %v1295
  %v1297 = vpop.f32.mrf.mxu0
  %v1298 = vadd.f32 %v1255, %v1297
  %1299 = vmatmul.bf16.gmra.mxu0 %v447
  %v1300 = vpop.f32.mrf.mxu0
  %v1301 = vadd.f32 %v1258, %v1300
  %v1302 = vpop.f32.mrf.mxu0
  %v1303 = vadd.f32 %v1260, %v1302
  %1304 = vmatmul.bf16.gmra.mxu0 %v456
  %v1305 = vpop.f32.mrf.mxu0
  %v1306 = vadd.f32 %v1263, %v1305
  %v1307 = vpop.f32.mrf.mxu0
  %v1308 = vadd.f32 %v1265, %v1307
  %1309 = vmatmul.bf16.gmra.mxu0 %v465
  %v1310 = vpop.f32.mrf.mxu0
  %v1311 = vadd.f32 %v1268, %v1310
  %v1312 = vpop.f32.mrf.mxu0
  %v1313 = vadd.f32 %v1270, %v1312
  %1314 = vmatmul.bf16.gmra.mxu0 %v474
  %v1315 = vpop.f32.mrf.mxu0
  %v1316 = vadd.f32 %v1273, %v1315
  %v1317 = vpop.f32.mrf.mxu0
  %v1318 = vadd.f32 %v1275, %v1317
  %1319 = vmatmul.bf16.gmra.mxu0 %v483
  %v1320 = vpop.f32.mrf.mxu0
  %v1321 = vadd.f32 %v1278, %v1320
  %v1322 = vpop.f32.mrf.mxu0
  %1323 = vdwg.mxu0
  %1324 = vmatpush.bf16.msra.mxu0 %v907
  %1325 = vmatpush.bf16.msra.mxu0 %v906
  %1326 = vmatpush.bf16.msra.mxu0 %v905
  %1327 = vmatpush.bf16.msra.mxu0 %v904
  %1328 = vmatpush.bf16.msra.mxu0 %v903
  %1329 = vmatpush.bf16.msra.mxu0 %v902
  %1330 = vmatpush.bf16.msra.mxu0 %v901
  %1331 = vmatpush.bf16.msra.mxu0 %v900
  %1332 = vmatmul.bf16.gmra.mxu0 %v430
  %v1333 = vpop.f32.mrf.mxu0
  %v1334 = vadd.f32 %v1291, %v1333
  %v1335 = vpop.f32.mrf.mxu0
  %v1336 = vadd.f32 %v1293, %v1335
  %1337 = vmatmul.bf16.gmra.mxu0 %v439
  %v1338 = vpop.f32.mrf.mxu0
  %v1339 = vadd.f32 %v1296, %v1338
  %v1340 = vpop.f32.mrf.mxu0
  %v1341 = vadd.f32 %v1298, %v1340
  %1342 = vmatmul.bf16.gmra.mxu0 %v448
  %v1343 = vpop.f32.mrf.mxu0
  %v1344 = vadd.f32 %v1301, %v1343
  %v1345 = vpop.f32.mrf.mxu0
  %v1346 = vadd.f32 %v1303, %v1345
  %1347 = vmatmul.bf16.gmra.mxu0 %v457
  %v1348 = vpop.f32.mrf.mxu0
  %v1349 = vadd.f32 %v1306, %v1348
  %v1350 = vpop.f32.mrf.mxu0
  %v1351 = vadd.f32 %v1308, %v1350
  %1352 = vmatmul.bf16.gmra.mxu0 %v466
  %v1353 = vpop.f32.mrf.mxu0
  %v1354 = vadd.f32 %v1311, %v1353
  %v1355 = vpop.f32.mrf.mxu0
  %v1356 = vadd.f32 %v1313, %v1355
  %1357 = vmatmul.bf16.gmra.mxu0 %v475
  %v1358 = vpop.f32.mrf.mxu0
  %v1359 = vadd.f32 %v1316, %v1358
  %v1360 = vpop.f32.mrf.mxu0
  %v1361 = vadd.f32 %v1318, %v1360
  %1362 = vmatmul.bf16.gmra.mxu0 %v484
  %v1363 = vpop.f32.mrf.mxu0
  %v1364 = vadd.f32 %v1321, %v1363
  %v1365 = vpop.f32.mrf.mxu0
  %1366 = vdwg.mxu0
  %vm1367 = vcmp.ge.f32.partialorder %v1334, 0.0
  %vm1368 = vcmp.ge.f32.partialorder %v1336, 0.0
  %vm1369 = vcmp.ge.f32.partialorder %v1339, 0.0
  %vm1370 = vcmp.ge.f32.partialorder %v1341, 0.0
  %vm1371 = vcmp.ge.f32.partialorder %v1344, 0.0
  %vm1372 = vcmp.ge.f32.partialorder %v1346, 0.0
  %vm1373 = vcmp.ge.f32.partialorder %v1349, 0.0
  %vm1374 = vcmp.ge.f32.partialorder %v1351, 0.0
  %vm1375 = vcmp.ge.f32.partialorder %v1354, 0.0
  %vm1376 = vcmp.ge.f32.partialorder %v1356, 0.0
  %vm1377 = vcmp.ge.f32.partialorder %v1359, 0.0
  %vm1378 = vcmp.ge.f32.partialorder %v1361, 0.0
  %vm1379 = vcmp.ge.f32.partialorder %v1364, 0.0
  %v1380 = vmul.f32 %v1334, 0.22916667
  %v1381 = vmul.f32 %v1336, 0.22916667
  %v1382 = vmul.f32 %v1339, 0.22916667
  %v1383 = vmul.f32 %v1341, 0.22916667
  %v1384 = vmul.f32 %v1344, 0.22916667
  %v1385 = vmul.f32 %v1346, 0.22916667
  %v1386 = vmul.f32 %v1349, 0.22916667
  %v1387 = vmul.f32 %v1351, 0.22916667
  %v1388 = vmul.f32 %v1354, 0.22916667
  %v1389 = vmul.f32 %v1356, 0.22916667
  %v1390 = vmul.f32 %v1359, 0.22916667
  %v1391 = vmul.f32 %v1361, 0.22916667
  %v1392 = vmul.f32 %v1364, 0.22916667
  %v1393 = vsel %vm1367, %v1334, %v1380
  %v1394 = vsel %vm1368, %v1336, %v1381
  %v1395 = vsel %vm1369, %v1339, %v1382
  %v1396 = vsel %vm1370, %v1341, %v1383
  %v1397 = vsel %vm1371, %v1344, %v1384
  %v1398 = vsel %vm1372, %v1346, %v1385
  %v1399 = vsel %vm1373, %v1349, %v1386
  %v1400 = vsel %vm1374, %v1351, %v1387
  %v1401 = vsel %vm1375, %v1354, %v1388
  %v1402 = vsel %vm1376, %v1356, %v1389
  %v1403 = vsel %vm1377, %v1359, %v1390
  %v1404 = vsel %vm1378, %v1361, %v1391
  %v1405 = vsel %vm1379, %v1364, %v1392
  %v1406 = vpack.c.bf16 %v1394, %v1393
  %v1407 = vpack.c.bf16 %v1396, %v1395
  %v1408 = vpack.c.bf16 %v1398, %v1397
  %v1409 = vpack.c.bf16 %v1400, %v1399
  %v1410 = vpack.c.bf16 %v1402, %v1401
  %v1411 = vpack.c.bf16 %v1404, %v1403
  %v1412 = vpack.c.bf16 %v1405, %v1405
  %v1413 = vld [vmem:[%s3] sm:$0xf]
  %v1414 = vld [vmem:[%s3 + $0x4] sm:$0xf]
  %v1415 = vld [vmem:[%s3 + $0x8] sm:$0xf]
  %v1416 = vld [vmem:[%s3 + $0xc] sm:$0xf]
  %v1417 = vld [vmem:[%s3 + $0x10] sm:$0xf]
  %v1418 = vld [vmem:[%s3 + $0x14] sm:$0xf]
  %v1419 = vld [vmem:[%s3 + $0x18] sm:$0xf]
  %v1420 = vld [vmem:[%s3 + $0x1c] sm:$0xf]
  %v1421 = vld [vmem:[%s4] sm:$0x1]
  %v1423 = vperm.slane %v1421, 0
  %v1433 = vunpack.c.l.b16 %v1413
  %v1434 = vunpack.c.l.b16 %v1414
  %v1435 = vunpack.c.l.b16 %v1415
  %v1436 = vunpack.c.l.b16 %v1416
  %v1437 = vunpack.c.l.b16 %v1417
  %v1438 = vunpack.c.l.b16 %v1418
  %v1439 = vunpack.c.l.b16 %v1419
  %v1440 = vunpack.c.l.b16 %v1420
  %v1441 = vpack.c.b16 %v1434, %v1433
  %v1442 = vpack.c.b16 %v1436, %v1435
  %v1443 = vpack.c.b16 %v1438, %v1437
  %v1444 = vpack.c.b16 %v1440, %v1439
  %vm1449 = vcmask 523264
  %v1451 = vsel %vm1449, %v1406, 0
  %v1454 = vsel %vm1449, %v1407, 0
  %v1457 = vsel %vm1449, %v1408, 0
  %v1460 = vsel %vm1449, %v1409, 0
  %v1463 = vsel %vm1449, %v1410, 0
  %v1466 = vsel %vm1449, %v1411, 0
  %v1469 = vsel %vm1449, %v1412, 0
  %1471 = vmatpush.bf16.msra.mxu0 0
  %1472 = vmatpush.bf16.msra.mxu0 0
  %1473 = vmatpush.bf16.msra.mxu0 0
  %1474 = vmatpush.bf16.msra.mxu0 0
  %1475 = vmatpush.bf16.msra.mxu0 %v1444
  %1476 = vmatpush.bf16.msra.mxu0 %v1443
  %1477 = vmatpush.bf16.msra.mxu0 %v1442
  %1478 = vmatpush.bf16.msra.mxu0 %v1441
  %1479 = vmatmul.bf16.gmra.mxu0 %v1451
  %v1480 = vpop.f32.mrf.mxu0
  %v1481 = vadd.f32 %v1423, %v1480
  %v1482 = vpop.f32.mrf.mxu0
  %v1483 = vadd.f32 %v1423, %v1482
  %1484 = vmatmul.bf16.gmra.mxu0 %v1454
  %v1485 = vpop.f32.mrf.mxu0
  %v1486 = vadd.f32 %v1423, %v1485
  %v1487 = vpop.f32.mrf.mxu0
  %v1488 = vadd.f32 %v1423, %v1487
  %1489 = vmatmul.bf16.gmra.mxu0 %v1457
  %v1490 = vpop.f32.mrf.mxu0
  %v1491 = vadd.f32 %v1423, %v1490
  %v1492 = vpop.f32.mrf.mxu0
  %v1493 = vadd.f32 %v1423, %v1492
  %1494 = vmatmul.bf16.gmra.mxu0 %v1460
  %v1495 = vpop.f32.mrf.mxu0
  %v1496 = vadd.f32 %v1423, %v1495
  %v1497 = vpop.f32.mrf.mxu0
  %v1498 = vadd.f32 %v1423, %v1497
  %1499 = vmatmul.bf16.gmra.mxu0 %v1463
  %v1500 = vpop.f32.mrf.mxu0
  %v1501 = vadd.f32 %v1423, %v1500
  %v1502 = vpop.f32.mrf.mxu0
  %v1503 = vadd.f32 %v1423, %v1502
  %1504 = vmatmul.bf16.gmra.mxu0 %v1466
  %v1505 = vpop.f32.mrf.mxu0
  %v1506 = vadd.f32 %v1423, %v1505
  %v1507 = vpop.f32.mrf.mxu0
  %v1508 = vadd.f32 %v1423, %v1507
  %1509 = vmatmul.bf16.gmra.mxu0 %v1469
  %v1510 = vpop.f32.mrf.mxu0
  %v1511 = vadd.f32 %v1423, %v1510
  %v1512 = vpop.f32.mrf.mxu0
  %1513 = vdwg.mxu0
  %vm1514 = vcmp.ge.f32.partialorder %v1481, 0.0
  %vm1515 = vcmp.ge.f32.partialorder %v1483, 0.0
  %vm1516 = vcmp.ge.f32.partialorder %v1486, 0.0
  %vm1517 = vcmp.ge.f32.partialorder %v1488, 0.0
  %vm1518 = vcmp.ge.f32.partialorder %v1491, 0.0
  %vm1519 = vcmp.ge.f32.partialorder %v1493, 0.0
  %vm1520 = vcmp.ge.f32.partialorder %v1496, 0.0
  %vm1521 = vcmp.ge.f32.partialorder %v1498, 0.0
  %vm1522 = vcmp.ge.f32.partialorder %v1501, 0.0
  %vm1523 = vcmp.ge.f32.partialorder %v1503, 0.0
  %vm1524 = vcmp.ge.f32.partialorder %v1506, 0.0
  %vm1525 = vcmp.ge.f32.partialorder %v1508, 0.0
  %vm1526 = vcmp.ge.f32.partialorder %v1511, 0.0
  %v1527 = vmul.f32 %v1481, 0.22916667
  %v1528 = vmul.f32 %v1483, 0.22916667
  %v1529 = vmul.f32 %v1486, 0.22916667
  %v1530 = vmul.f32 %v1488, 0.22916667
  %v1531 = vmul.f32 %v1491, 0.22916667
  %v1532 = vmul.f32 %v1493, 0.22916667
  %v1533 = vmul.f32 %v1496, 0.22916667
  %v1534 = vmul.f32 %v1498, 0.22916667
  %v1535 = vmul.f32 %v1501, 0.22916667
  %v1536 = vmul.f32 %v1503, 0.22916667
  %v1537 = vmul.f32 %v1506, 0.22916667
  %v1538 = vmul.f32 %v1508, 0.22916667
  %v1539 = vmul.f32 %v1511, 0.22916667
  %v1540 = vsel %vm1514, %v1481, %v1527
  %v1541 = vsel %vm1515, %v1483, %v1528
  %v1542 = vsel %vm1516, %v1486, %v1529
  %v1543 = vsel %vm1517, %v1488, %v1530
  %v1544 = vsel %vm1518, %v1491, %v1531
  %v1545 = vsel %vm1519, %v1493, %v1532
  %v1546 = vsel %vm1520, %v1496, %v1533
  %v1547 = vsel %vm1521, %v1498, %v1534
  %v1548 = vsel %vm1522, %v1501, %v1535
  %v1549 = vsel %vm1523, %v1503, %v1536
  %v1550 = vsel %vm1524, %v1506, %v1537
  %v1551 = vsel %vm1525, %v1508, %v1538
  %v1552 = vsel %vm1526, %v1511, %v1539
  %v1553 = vpack.c.bf16 %v1541, %v1540
  %v1554 = vpack.c.bf16 %v1543, %v1542
  %v1555 = vpack.c.bf16 %v1545, %v1544
  %v1556 = vpack.c.bf16 %v1547, %v1546
  %v1557 = vpack.c.bf16 %v1549, %v1548
  %v1558 = vpack.c.bf16 %v1551, %v1550
  %v1559 = vpack.c.bf16 %v1552, %v1552
  %v1560 = vld [vmem:[%s5] sm:$0xf]
  %v1561 = vld [vmem:[%s5 + $0x4] sm:$0xf]
  %v1562 = vld [vmem:[%s5 + $0x8] sm:$0xf]
  %v1563 = vld [vmem:[%s5 + $0xc] sm:$0xf]
  %v1564 = vld [vmem:[%s5 + $0x10] sm:$0xf]
  %v1565 = vld [vmem:[%s5 + $0x14] sm:$0xf]
  %v1566 = vld [vmem:[%s5 + $0x18] sm:$0xf]
  %v1567 = vld [vmem:[%s5 + $0x1c] sm:$0xf]
  %v1568 = vld [vmem:[%s5 + $0x20] sm:$0xf]
  %v1569 = vld [vmem:[%s5 + $0x24] sm:$0xf]
  %v1570 = vld [vmem:[%s5 + $0x28] sm:$0xf]
  %v1571 = vld [vmem:[%s5 + $0x2c] sm:$0xf]
  %v1572 = vld [vmem:[%s5 + $0x30] sm:$0xf]
  %v1573 = vld [vmem:[%s5 + $0x34] sm:$0xf]
  %v1574 = vld [vmem:[%s5 + $0x38] sm:$0xf]
  %v1575 = vld [vmem:[%s5 + $0x3c] sm:$0xf]
  %v1576 = vld [vmem:[%s6] sm:$0x1]
  %v1578 = vperm.slane %v1576, 0
  %v1596 = vunpack.c.l.b16 %v1560
  %v1597 = vunpack.c.l.b16 %v1561
  %v1598 = vunpack.c.l.b16 %v1562
  %v1599 = vunpack.c.l.b16 %v1563
  %v1600 = vunpack.c.l.b16 %v1564
  %v1601 = vunpack.c.l.b16 %v1565
  %v1602 = vunpack.c.l.b16 %v1566
  %v1603 = vunpack.c.l.b16 %v1567
  %v1604 = vunpack.c.l.b16 %v1568
  %v1605 = vunpack.c.l.b16 %v1569
  %v1606 = vunpack.c.l.b16 %v1570
  %v1607 = vunpack.c.l.b16 %v1571
  %v1608 = vunpack.c.l.b16 %v1572
  %v1609 = vunpack.c.l.b16 %v1573
  %v1610 = vunpack.c.l.b16 %v1574
  %v1611 = vunpack.c.l.b16 %v1575
  %v1612 = vpack.c.b16 %v1597, %v1596
  %v1613 = vpack.c.b16 %v1599, %v1598
  %v1614 = vpack.c.b16 %v1601, %v1600
  %v1615 = vpack.c.b16 %v1603, %v1602
  %v1616 = vpack.c.b16 %v1605, %v1604
  %v1617 = vpack.c.b16 %v1607, %v1606
  %v1618 = vpack.c.b16 %v1609, %v1608
  %v1619 = vpack.c.b16 %v1611, %v1610
  %1628 = vmatpush.bf16.msra.mxu0 %v1619
  %1629 = vmatpush.bf16.msra.mxu0 %v1618
  %1630 = vmatpush.bf16.msra.mxu0 %v1617
  %1631 = vmatpush.bf16.msra.mxu0 %v1616
  %1632 = vmatpush.bf16.msra.mxu0 %v1615
  %1633 = vmatpush.bf16.msra.mxu0 %v1614
  %1634 = vmatpush.bf16.msra.mxu0 %v1613
  %1635 = vmatpush.bf16.msra.mxu0 %v1612
  %1636 = vmatmul.bf16.gmra.mxu0 %v1553
  %v1637 = vpop.f32.mrf.mxu0
  %v1638 = vadd.f32 %v1578, %v1637
  %v1639 = vpop.f32.mrf.mxu0
  %v1640 = vadd.f32 %v1578, %v1639
  %1641 = vmatmul.bf16.gmra.mxu0 %v1554
  %v1642 = vpop.f32.mrf.mxu0
  %v1643 = vadd.f32 %v1578, %v1642
  %v1644 = vpop.f32.mrf.mxu0
  %v1645 = vadd.f32 %v1578, %v1644
  %1646 = vmatmul.bf16.gmra.mxu0 %v1555
  %v1647 = vpop.f32.mrf.mxu0
  %v1648 = vadd.f32 %v1578, %v1647
  %v1649 = vpop.f32.mrf.mxu0
  %v1650 = vadd.f32 %v1578, %v1649
  %1651 = vmatmul.bf16.gmra.mxu0 %v1556
  %v1652 = vpop.f32.mrf.mxu0
  %v1653 = vadd.f32 %v1578, %v1652
  %v1654 = vpop.f32.mrf.mxu0
  %v1655 = vadd.f32 %v1578, %v1654
  %1656 = vmatmul.bf16.gmra.mxu0 %v1557
  %v1657 = vpop.f32.mrf.mxu0
  %v1658 = vadd.f32 %v1578, %v1657
  %v1659 = vpop.f32.mrf.mxu0
  %v1660 = vadd.f32 %v1578, %v1659
  %1661 = vmatmul.bf16.gmra.mxu0 %v1558
  %v1662 = vpop.f32.mrf.mxu0
  %v1663 = vadd.f32 %v1578, %v1662
  %v1664 = vpop.f32.mrf.mxu0
  %v1665 = vadd.f32 %v1578, %v1664
  %1666 = vmatmul.bf16.gmra.mxu0 %v1559
  %v1667 = vpop.f32.mrf.mxu0
  %v1668 = vadd.f32 %v1578, %v1667
  %v1669 = vpop.f32.mrf.mxu0
  %1670 = vdwg.mxu0
  %v1671 = vand.u32 2147483647, %v1638
  %v1672 = vand.u32 2147483647, %v1640
  %v1673 = vand.u32 2147483647, %v1643
  %v1674 = vand.u32 2147483647, %v1645
  %v1675 = vand.u32 2147483647, %v1648
  %v1676 = vand.u32 2147483647, %v1650
  %v1677 = vand.u32 2147483647, %v1653
  %v1678 = vand.u32 2147483647, %v1655
  %v1679 = vand.u32 2147483647, %v1658
  %v1680 = vand.u32 2147483647, %v1660
  %v1681 = vand.u32 2147483647, %v1663
  %v1682 = vand.u32 2147483647, %v1665
  %v1683 = vand.u32 2147483647, %v1668
  %v1684 = vsub.f32 0.0, %v1671
  %v1685 = vsub.f32 0.0, %v1672
  %v1686 = vsub.f32 0.0, %v1673
  %v1687 = vsub.f32 0.0, %v1674
  %v1688 = vsub.f32 0.0, %v1675
  %v1689 = vsub.f32 0.0, %v1676
  %v1690 = vsub.f32 0.0, %v1677
  %v1691 = vsub.f32 0.0, %v1678
  %v1692 = vsub.f32 0.0, %v1679
  %v1693 = vsub.f32 0.0, %v1680
  %v1694 = vsub.f32 0.0, %v1681
  %v1695 = vsub.f32 0.0, %v1682
  %v1696 = vsub.f32 0.0, %v1683
  %v1697 = vmul.f32 %v1684, 1.442695
  %v1698 = vpow.pop %v1697
  %v1699 = vmul.f32 %v1685, 1.442695
  %v1700 = vpow.pop %v1699
  %v1701 = vmul.f32 %v1686, 1.442695
  %v1702 = vpow.pop %v1701
  %v1703 = vmul.f32 %v1687, 1.442695
  %v1704 = vpow.pop %v1703
  %v1705 = vmul.f32 %v1688, 1.442695
  %v1706 = vpow.pop %v1705
  %v1707 = vmul.f32 %v1689, 1.442695
  %v1708 = vpow.pop %v1707
  %v1709 = vmul.f32 %v1690, 1.442695
  %v1710 = vpow.pop %v1709
  %v1711 = vmul.f32 %v1691, 1.442695
  %v1712 = vpow.pop %v1711
  %v1713 = vmul.f32 %v1692, 1.442695
  %v1714 = vpow.pop %v1713
  %v1715 = vmul.f32 %v1693, 1.442695
  %v1716 = vpow.pop %v1715
  %v1717 = vmul.f32 %v1694, 1.442695
  %v1718 = vpow.pop %v1717
  %v1719 = vmul.f32 %v1695, 1.442695
  %v1720 = vpow.pop %v1719
  %v1721 = vmul.f32 %v1696, 1.442695
  %v1722 = vpow.pop %v1721
  %vm1723 = vcmp.ge.f32.partialorder %v1638, 0.0
  %vm1724 = vcmp.ge.f32.partialorder %v1640, 0.0
  %vm1725 = vcmp.ge.f32.partialorder %v1643, 0.0
  %vm1726 = vcmp.ge.f32.partialorder %v1645, 0.0
  %vm1727 = vcmp.ge.f32.partialorder %v1648, 0.0
  %vm1728 = vcmp.ge.f32.partialorder %v1650, 0.0
  %vm1729 = vcmp.ge.f32.partialorder %v1653, 0.0
  %vm1730 = vcmp.ge.f32.partialorder %v1655, 0.0
  %vm1731 = vcmp.ge.f32.partialorder %v1658, 0.0
  %vm1732 = vcmp.ge.f32.partialorder %v1660, 0.0
  %vm1733 = vcmp.ge.f32.partialorder %v1663, 0.0
  %vm1734 = vcmp.ge.f32.partialorder %v1665, 0.0
  %vm1735 = vcmp.ge.f32.partialorder %v1668, 0.0
  %v1736 = vadd.f32 %v1698, 1.0
  %v1737 = vadd.f32 %v1700, 1.0
  %v1738 = vadd.f32 %v1702, 1.0
  %v1739 = vadd.f32 %v1704, 1.0
  %v1740 = vadd.f32 %v1706, 1.0
  %v1741 = vadd.f32 %v1708, 1.0
  %v1742 = vadd.f32 %v1710, 1.0
  %v1743 = vadd.f32 %v1712, 1.0
  %v1744 = vadd.f32 %v1714, 1.0
  %v1745 = vadd.f32 %v1716, 1.0
  %v1746 = vadd.f32 %v1718, 1.0
  %v1747 = vadd.f32 %v1720, 1.0
  %v1748 = vadd.f32 %v1722, 1.0
  %v1749 = vrcp.pop %v1736
  %v1750 = vmul.f32 %v1736, %v1749
  %v1751 = vsub.f32 1.0, %v1750
  %v1752 = vmul.f32 %v1749, %v1751
  %v1753 = vadd.f32 %v1749, %v1752
  %vm1754 = vweird.f32 %v1736
  %vm1755 = vweird.f32 %v1749
  %vm1756 = vmor %vm1754, %vm1755
  %v1757 = vsel %vm1756, %v1749, %v1753
  %v1758 = vand.u32 2147483647, %v1736
  %vm1759 = vcmp.eq.f32.partialorder %v1758, 8.507059e+37
  %v1760 = vand.u32 %v1736, 2147483648
  %v1761 = vor.u32 1.1754944e-38, %v1760
  %v1762 = vsel %vm1759, %v1761, %v1757
  %v1763 = vmul.f32 1.0, %v1762
  %v1764 = vrcp.pop %v1737
  %v1765 = vmul.f32 %v1737, %v1764
  %v1766 = vsub.f32 1.0, %v1765
  %v1767 = vmul.f32 %v1764, %v1766
  %v1768 = vadd.f32 %v1764, %v1767
  %vm1769 = vweird.f32 %v1737
  %vm1770 = vweird.f32 %v1764
  %vm1771 = vmor %vm1769, %vm1770
  %v1772 = vsel %vm1771, %v1764, %v1768
  %v1773 = vand.u32 2147483647, %v1737
  %vm1774 = vcmp.eq.f32.partialorder %v1773, 8.507059e+37
  %v1775 = vand.u32 %v1737, 2147483648
  %v1776 = vor.u32 1.1754944e-38, %v1775
  %v1777 = vsel %vm1774, %v1776, %v1772
  %v1778 = vmul.f32 1.0, %v1777
  %v1779 = vrcp.pop %v1738
  %v1780 = vmul.f32 %v1738, %v1779
  %v1781 = vsub.f32 1.0, %v1780
  %v1782 = vmul.f32 %v1779, %v1781
  %v1783 = vadd.f32 %v1779, %v1782
  %vm1784 = vweird.f32 %v1738
  %vm1785 = vweird.f32 %v1779
  %vm1786 = vmor %vm1784, %vm1785
  %v1787 = vsel %vm1786, %v1779, %v1783
  %v1788 = vand.u32 2147483647, %v1738
  %vm1789 = vcmp.eq.f32.partialorder %v1788, 8.507059e+37
  %v1790 = vand.u32 %v1738, 2147483648
  %v1791 = vor.u32 1.1754944e-38, %v1790
  %v1792 = vsel %vm1789, %v1791, %v1787
  %v1793 = vmul.f32 1.0, %v1792
  %v1794 = vrcp.pop %v1739
  %v1795 = vmul.f32 %v1739, %v1794
  %v1796 = vsub.f32 1.0, %v1795
  %v1797 = vmul.f32 %v1794, %v1796
  %v1798 = vadd.f32 %v1794, %v1797
  %vm1799 = vweird.f32 %v1739
  %vm1800 = vweird.f32 %v1794
  %vm1801 = vmor %vm1799, %vm1800
  %v1802 = vsel %vm1801, %v1794, %v1798
  %v1803 = vand.u32 2147483647, %v1739
  %vm1804 = vcmp.eq.f32.partialorder %v1803, 8.507059e+37
  %v1805 = vand.u32 %v1739, 2147483648
  %v1806 = vor.u32 1.1754944e-38, %v1805
  %v1807 = vsel %vm1804, %v1806, %v1802
  %v1808 = vmul.f32 1.0, %v1807
  %v1809 = vrcp.pop %v1740
  %v1810 = vmul.f32 %v1740, %v1809
  %v1811 = vsub.f32 1.0, %v1810
  %v1812 = vmul.f32 %v1809, %v1811
  %v1813 = vadd.f32 %v1809, %v1812
  %vm1814 = vweird.f32 %v1740
  %vm1815 = vweird.f32 %v1809
  %vm1816 = vmor %vm1814, %vm1815
  %v1817 = vsel %vm1816, %v1809, %v1813
  %v1818 = vand.u32 2147483647, %v1740
  %vm1819 = vcmp.eq.f32.partialorder %v1818, 8.507059e+37
  %v1820 = vand.u32 %v1740, 2147483648
  %v1821 = vor.u32 1.1754944e-38, %v1820
  %v1822 = vsel %vm1819, %v1821, %v1817
  %v1823 = vmul.f32 1.0, %v1822
  %v1824 = vrcp.pop %v1741
  %v1825 = vmul.f32 %v1741, %v1824
  %v1826 = vsub.f32 1.0, %v1825
  %v1827 = vmul.f32 %v1824, %v1826
  %v1828 = vadd.f32 %v1824, %v1827
  %vm1829 = vweird.f32 %v1741
  %vm1830 = vweird.f32 %v1824
  %vm1831 = vmor %vm1829, %vm1830
  %v1832 = vsel %vm1831, %v1824, %v1828
  %v1833 = vand.u32 2147483647, %v1741
  %vm1834 = vcmp.eq.f32.partialorder %v1833, 8.507059e+37
  %v1835 = vand.u32 %v1741, 2147483648
  %v1836 = vor.u32 1.1754944e-38, %v1835
  %v1837 = vsel %vm1834, %v1836, %v1832
  %v1838 = vmul.f32 1.0, %v1837
  %v1839 = vrcp.pop %v1742
  %v1840 = vmul.f32 %v1742, %v1839
  %v1841 = vsub.f32 1.0, %v1840
  %v1842 = vmul.f32 %v1839, %v1841
  %v1843 = vadd.f32 %v1839, %v1842
  %vm1844 = vweird.f32 %v1742
  %vm1845 = vweird.f32 %v1839
  %vm1846 = vmor %vm1844, %vm1845
  %v1847 = vsel %vm1846, %v1839, %v1843
  %v1848 = vand.u32 2147483647, %v1742
  %vm1849 = vcmp.eq.f32.partialorder %v1848, 8.507059e+37
  %v1850 = vand.u32 %v1742, 2147483648
  %v1851 = vor.u32 1.1754944e-38, %v1850
  %v1852 = vsel %vm1849, %v1851, %v1847
  %v1853 = vmul.f32 1.0, %v1852
  %v1854 = vrcp.pop %v1743
  %v1855 = vmul.f32 %v1743, %v1854
  %v1856 = vsub.f32 1.0, %v1855
  %v1857 = vmul.f32 %v1854, %v1856
  %v1858 = vadd.f32 %v1854, %v1857
  %vm1859 = vweird.f32 %v1743
  %vm1860 = vweird.f32 %v1854
  %vm1861 = vmor %vm1859, %vm1860
  %v1862 = vsel %vm1861, %v1854, %v1858
  %v1863 = vand.u32 2147483647, %v1743
  %vm1864 = vcmp.eq.f32.partialorder %v1863, 8.507059e+37
  %v1865 = vand.u32 %v1743, 2147483648
  %v1866 = vor.u32 1.1754944e-38, %v1865
  %v1867 = vsel %vm1864, %v1866, %v1862
  %v1868 = vmul.f32 1.0, %v1867
  %v1869 = vrcp.pop %v1744
  %v1870 = vmul.f32 %v1744, %v1869
  %v1871 = vsub.f32 1.0, %v1870
  %v1872 = vmul.f32 %v1869, %v1871
  %v1873 = vadd.f32 %v1869, %v1872
  %vm1874 = vweird.f32 %v1744
  %vm1875 = vweird.f32 %v1869
  %vm1876 = vmor %vm1874, %vm1875
  %v1877 = vsel %vm1876, %v1869, %v1873
  %v1878 = vand.u32 2147483647, %v1744
  %vm1879 = vcmp.eq.f32.partialorder %v1878, 8.507059e+37
  %v1880 = vand.u32 %v1744, 2147483648
  %v1881 = vor.u32 1.1754944e-38, %v1880
  %v1882 = vsel %vm1879, %v1881, %v1877
  %v1883 = vmul.f32 1.0, %v1882
  %v1884 = vrcp.pop %v1745
  %v1885 = vmul.f32 %v1745, %v1884
  %v1886 = vsub.f32 1.0, %v1885
  %v1887 = vmul.f32 %v1884, %v1886
  %v1888 = vadd.f32 %v1884, %v1887
  %vm1889 = vweird.f32 %v1745
  %vm1890 = vweird.f32 %v1884
  %vm1891 = vmor %vm1889, %vm1890
  %v1892 = vsel %vm1891, %v1884, %v1888
  %v1893 = vand.u32 2147483647, %v1745
  %vm1894 = vcmp.eq.f32.partialorder %v1893, 8.507059e+37
  %v1895 = vand.u32 %v1745, 2147483648
  %v1896 = vor.u32 1.1754944e-38, %v1895
  %v1897 = vsel %vm1894, %v1896, %v1892
  %v1898 = vmul.f32 1.0, %v1897
  %v1899 = vrcp.pop %v1746
  %v1900 = vmul.f32 %v1746, %v1899
  %v1901 = vsub.f32 1.0, %v1900
  %v1902 = vmul.f32 %v1899, %v1901
  %v1903 = vadd.f32 %v1899, %v1902
  %vm1904 = vweird.f32 %v1746
  %vm1905 = vweird.f32 %v1899
  %vm1906 = vmor %vm1904, %vm1905
  %v1907 = vsel %vm1906, %v1899, %v1903
  %v1908 = vand.u32 2147483647, %v1746
  %vm1909 = vcmp.eq.f32.partialorder %v1908, 8.507059e+37
  %v1910 = vand.u32 %v1746, 2147483648
  %v1911 = vor.u32 1.1754944e-38, %v1910
  %v1912 = vsel %vm1909, %v1911, %v1907
  %v1913 = vmul.f32 1.0, %v1912
  %v1914 = vrcp.pop %v1747
  %v1915 = vmul.f32 %v1747, %v1914
  %v1916 = vsub.f32 1.0, %v1915
  %v1917 = vmul.f32 %v1914, %v1916
  %v1918 = vadd.f32 %v1914, %v1917
  %vm1919 = vweird.f32 %v1747
  %vm1920 = vweird.f32 %v1914
  %vm1921 = vmor %vm1919, %vm1920
  %v1922 = vsel %vm1921, %v1914, %v1918
  %v1923 = vand.u32 2147483647, %v1747
  %vm1924 = vcmp.eq.f32.partialorder %v1923, 8.507059e+37
  %v1925 = vand.u32 %v1747, 2147483648
  %v1926 = vor.u32 1.1754944e-38, %v1925
  %v1927 = vsel %vm1924, %v1926, %v1922
  %v1928 = vmul.f32 1.0, %v1927
  %v1929 = vrcp.pop %v1748
  %v1930 = vmul.f32 %v1748, %v1929
  %v1931 = vsub.f32 1.0, %v1930
  %v1932 = vmul.f32 %v1929, %v1931
  %v1933 = vadd.f32 %v1929, %v1932
  %vm1934 = vweird.f32 %v1748
  %vm1935 = vweird.f32 %v1929
  %vm1936 = vmor %vm1934, %vm1935
  %v1937 = vsel %vm1936, %v1929, %v1933
  %v1938 = vand.u32 2147483647, %v1748
  %vm1939 = vcmp.eq.f32.partialorder %v1938, 8.507059e+37
  %v1940 = vand.u32 %v1748, 2147483648
  %v1941 = vor.u32 1.1754944e-38, %v1940
  %v1942 = vsel %vm1939, %v1941, %v1937
  %v1943 = vmul.f32 1.0, %v1942
  %v1944 = vmul.f32 %v1698, %v1762
  %v1945 = vmul.f32 %v1700, %v1777
  %v1946 = vmul.f32 %v1702, %v1792
  %v1947 = vmul.f32 %v1704, %v1807
  %v1948 = vmul.f32 %v1706, %v1822
  %v1949 = vmul.f32 %v1708, %v1837
  %v1950 = vmul.f32 %v1710, %v1852
  %v1951 = vmul.f32 %v1712, %v1867
  %v1952 = vmul.f32 %v1714, %v1882
  %v1953 = vmul.f32 %v1716, %v1897
  %v1954 = vmul.f32 %v1718, %v1912
  %v1955 = vmul.f32 %v1720, %v1927
  %v1956 = vmul.f32 %v1722, %v1942
  %v1957 = vsel %vm1723, %v1763, %v1944
  %v1958 = vsel %vm1724, %v1778, %v1945
  %v1959 = vsel %vm1725, %v1793, %v1946
  %v1960 = vsel %vm1726, %v1808, %v1947
  %v1961 = vsel %vm1727, %v1823, %v1948
  %v1962 = vsel %vm1728, %v1838, %v1949
  %v1963 = vsel %vm1729, %v1853, %v1950
  %v1964 = vsel %vm1730, %v1868, %v1951
  %v1965 = vsel %vm1731, %v1883, %v1952
  %v1966 = vsel %vm1732, %v1898, %v1953
  %v1967 = vsel %vm1733, %v1913, %v1954
  %v1968 = vsel %vm1734, %v1928, %v1955
  %v1969 = vsel %vm1735, %v1943, %v1956
  %vm1970 = vcmask 130048
  %1971 = vst.msk [vmem:[%s7] sm:$0xff] %vm1970, %v1957
  %1972 = vst.msk [vmem:[%s7 + $0x8] sm:$0xff] %vm1970, %v1958
  %1973 = vst.msk [vmem:[%s7 + $0x10] sm:$0xff] %vm1970, %v1959
  %1974 = vst.msk [vmem:[%s7 + $0x18] sm:$0xff] %vm1970, %v1960
  %1975 = vst.msk [vmem:[%s7 + $0x20] sm:$0xff] %vm1970, %v1961
  %1976 = vst.msk [vmem:[%s7 + $0x28] sm:$0xff] %vm1970, %v1962
  %1977 = vst.msk [vmem:[%s7 + $0x30] sm:$0xff] %vm1970, %v1963
  %1978 = vst.msk [vmem:[%s7 + $0x38] sm:$0xff] %vm1970, %v1964
  %1979 = vst.msk [vmem:[%s7 + $0x40] sm:$0xff] %vm1970, %v1965
  %1980 = vst.msk [vmem:[%s7 + $0x48] sm:$0xff] %vm1970, %v1966
  %1981 = vst.msk [vmem:[%s7 + $0x50] sm:$0xff] %vm1970, %v1967
  %1982 = vst.msk [vmem:[%s7 + $0x58] sm:$0xff] %vm1970, %v1968
  %vm1983 = vcmask 123904
  %1984 = vst.msk [vmem:[%s7 + $0x60] sm:$0x3] %vm1983, %v1969
  // Predicated region
  $region30: #{vae_forward.5} parent=0 // pred_check
    _
  $region31: #{vae_forward.5} parent=0 // pred_check_branch
    %1986 = sbr.rel (0) target = $region33
  $region32: #{vae_forward.5} parent=0 // pred_region
    _
  $region33: #{vae_forward.5} parent=0 // pred_fallthru
    _
  // Predicated region
  $region34: #{vae_forward.5} parent=0 // pred_check
    _
  $region35: #{vae_forward.5} parent=0 // pred_check_branch
    %1988 = sbr.rel (0) target = $region37
  $region36: #{vae_forward.5} parent=0 // pred_region
    _
  $region37: #{vae_forward.5} parent=0 // pred_fallthru
    _

</llo_original>
